<compile_context>
chip_gen: v5e
topology: v5e:2x2
jax: 0.10.0
libtpu: 0.0.40
codegen_flags: <defaults>
</compile_context>

<pallas_src>
import jax
import jax.numpy as jnp
from jax import lax
from jax.experimental import pallas as pl
from jax.experimental.pallas import tpu as pltpu


_OFFSETS = tuple((dy, dx) for dy in (-1, 0, 1) for dx in (-1, 0, 1))


def _round_up(x, m):
    return (x + m - 1) // m * m


def _tree_sum(terms):
    """Balanced pairwise reduction (ILP-friendly vs. a serial add chain)."""
    terms = list(terms)
    while len(terms) > 1:
        nxt = [terms[k] + terms[k + 1] for k in range(0, len(terms) - 1, 2)]
        if len(terms) % 2:
            nxt.append(terms[-1])
        terms = nxt
    return terms[0]


def _make_res2net_kernel(W, block_cfgs):
    """block_cfgs: tuple of (cin, planes, scale, Dp) per Bottle2neckX block."""
    nblocks = len(block_cfgs)

    def kernel(*refs):
        x_ref = refs[0]
        w_refs = refs[1:1 + 3 * nblocks]
        o_ref = refs[1 + 3 * nblocks]
        cat_ref = refs[2 + 3 * nblocks]          # VMEM scratch (max_rows, L)

        L = x_ref.shape[-1]                      # images_per_step * H * W
        cur = x_ref[...].astype(jnp.float32)     # (Cin, L)

        for b, (cin, planes, scale, Dp) in enumerate(block_cfgs):
            w1_ref = w_refs[3 * b + 0]           # (scale*Dp, cin)
            coeff_ref = w_refs[3 * b + 1]        # (scale*9, Dp, L)
            w3_ref = w_refs[3 * b + 2]           # (planes, scale*Dp)

            # conv1 (1x1) for all branches in one MXU matmul (+ ReLU).
            spx = jnp.maximum(
                jnp.dot(w1_ref[...], cur, preferred_element_type=jnp.float32),
                0.0)                             # (scale*Dp, L)

            sp = None
            for i in range(scale):
                spx_i = spx[i * Dp:(i + 1) * Dp, :]   # tile-aligned free slice
                sp = spx_i if i == 0 else sp + spx_i

                # Depthwise 3x3 (stride 1, pad 1): 8 lane rolls + 9 MACs with
                # host-precomputed (tap x boundary-mask) coefficients, read
                # from VMEM at point of use, tree-summed.
                terms = []
                for t, (dy, dx) in enumerate(_OFFSETS):
                    off = dy * W + dx
                    shifted = sp if off == 0 else pltpu.roll(
                        sp, shift=(-off) % L, axis=1)
                    terms.append(shifted * coeff_ref[i * 9 + t])
                sp = _tree_sum(terms)

                # Stash this branch's result at its tile-aligned row offset so
                # conv3 can contract all branches at once (== torch.cat).
                cat_ref[i * Dp:(i + 1) * Dp, :] = sp

            # conv3 (1x1) for all branches in one MXU matmul (+ ReLU).
            out3 = jnp.dot(w3_ref[...], cat_ref[0:scale * Dp, :],
                           preferred_element_type=jnp.float32)
            cur = jnp.maximum(out3, 0.0)

        o_ref[...] = cur.astype(o_ref.dtype)

    return kernel


def _pick_images_per_step(N, HW, requested=None):
    if requested is not None:
        assert N % requested == 0
        return requested
    if HW % 128 != 0:
        return N                       # block lane dim must then equal N*HW
    cap = max(1, 2048 // HW)           # keep the lane axis a modest width
    best = 1
    for cand in range(1, min(N, cap) + 1):
        # keep >= 2 grid steps when possible so both v7x TensorCores get work
        if N % cand == 0 and (N // cand) >= 2:
            best = cand
    return best


def prepare_res2net(params, H, W, batch, images_per_step=None):
    """One-time (model-load) weight repack into kernel layouts.

    params: list of (w1, wdw, w3, scale) per Bottle2neckX block, with
            w1: (planes, cin, 1, 1), wdw: (scale, D, 1, 3, 3),
            w3: (planes, planes, 1, 1)  (bias-free, as in the module).
    """
    HW = H * W
    nb = _pick_images_per_step(batch, HW, images_per_step)
    L = nb * HW

    # Per-tap boundary masks (shared by all blocks/branches), computed once.
    p = jnp.arange(HW, dtype=jnp.int32)
    xi, yi = p % W, p // W
    masks = jnp.stack([
        ((xi + dx >= 0) & (xi + dx < W) &
         (yi + dy >= 0) & (yi + dy < H)).astype(jnp.float32)
        for dy, dx in _OFFSETS])                                  # (9, HW)

    flat_w = []
    block_cfgs = []
    cin = params[0][0].shape[1]
    for (w1, wdw, w3, scale) in params:
        planes = w1.shape[0]
        D = planes // scale
        Dp = _round_up(D, 8)            # pad branch width to a sublane tile

        # conv1: (planes, cin, 1, 1) -> (scale*Dp, cin), branch i at rows i*Dp.
        w1_r = w1[:, :, 0, 0].astype(jnp.float32).reshape(scale, D, cin)
        w1_r = jnp.pad(w1_r, ((0, 0), (0, Dp - D), (0, 0)))
        w1_r = w1_r.reshape(scale * Dp, cin)

        # depthwise taps folded with boundary masks:
        # coeff[i*9+t, c, p] = wdw[i, c, ky, kx] * mask_t[p], tiled per image.
        wdw_r = wdw[:, :, 0, :, :].astype(jnp.float32).reshape(scale, D, 9)
        wdw_r = jnp.pad(wdw_r, ((0, 0), (0, Dp - D), (0, 0)))     # (scale,Dp,9)
        coeff = (wdw_r.transpose(0, 2, 1)[:, :, :, None]
                 * masks[None, :, None, :])                       # (scale,9,Dp,HW)
        coeff = jnp.tile(coeff, (1, 1, 1, nb)).reshape(scale * 9, Dp, L)

        # conv3: (planes, planes, 1, 1) -> (planes, scale*Dp), branch i's
        # input columns at [i*Dp, i*Dp+D), padded columns zero.
        w3_r = w3[:, :, 0, 0].astype(jnp.float32).reshape(planes, scale, D)
        w3_r = jnp.pad(w3_r, ((0, 0), (0, 0), (0, Dp - D)))
        w3_r = w3_r.reshape(planes, scale * Dp)

        flat_w += [w1_r, coeff, w3_r]
        block_cfgs.append((cin, planes, scale, Dp))
        cin = planes

    max_rows = max(s * d for (_, _, s, d) in block_cfgs)
    return {
        "flat_w": flat_w,
        "block_cfgs": tuple(block_cfgs),
        "nb": nb,
        "H": H,
        "W": W,
        "planes_out": cin,
        "max_rows": max_rows,
    }


def res2net_forward(x_nchw, prepared):
    """Pallas Res2Net forward. x_nchw: (N, Cin, H, W) float (NCHW)."""
    N, Cin, H, W = x_nchw.shape
    assert (H, W) == (prepared["H"], prepared["W"])
    assert Cin == prepared["block_cfgs"][0][0]
    HW = H * W
    nb = prepared["nb"]
    assert N % nb == 0, "batch must be divisible by images_per_step"
    L = nb * HW
    planes_out = prepared["planes_out"]
    max_rows = prepared["max_rows"]
    flat_w = prepared["flat_w"]

    # NC(HW) with batch packed onto the lane axis.
    x_cl = jnp.transpose(
        x_nchw.astype(jnp.float32).reshape(N, Cin, HW), (1, 0, 2)
    ).reshape(Cin, N * HW)

    in_specs = [pl.BlockSpec((Cin, L), lambda n: (0, n))]
    for w in flat_w:
        in_specs.append(
            pl.BlockSpec(w.shape, lambda n, _nd=w.ndim: (0,) * _nd))
    out_spec = pl.BlockSpec((planes_out, L), lambda n: (0, n))

    kernel = _make_res2net_kernel(W, prepared["block_cfgs"])

    # Explicit VMEM budget (trivial at these sizes; capped well under v7x's
    # 64 MiB physical VMEM).
    block_bytes = 4 * (Cin + planes_out + max_rows) * L + sum(
        int(w.size) * 4 for w in flat_w)
    vmem_limit = int(min(48 * 1024 * 1024,
                         max(32 * 1024 * 1024, 3 * block_bytes)))

    out = pl.pallas_call(
        kernel,
        out_shape=jax.ShapeDtypeStruct((planes_out, N * HW), jnp.float32),
        grid_spec=pltpu.PrefetchScalarGridSpec(
            num_scalar_prefetch=0,
            grid=(N // nb,),
            in_specs=in_specs,
            out_specs=out_spec,
            scratch_shapes=[pltpu.VMEM((max_rows, L), jnp.float32)],
        ),
        compiler_params=pltpu.CompilerParams(
            dimension_semantics=("parallel",),
            vmem_limit_bytes=vmem_limit),
    )(x_cl, *flat_w)

    return out.reshape(planes_out, N, HW).transpose(1, 0, 2).reshape(
        N, planes_out, H, W)


# --------------------------- plain-JAX reference ---------------------------

def _block_reference(x, w1, wdw, w3, scale):
    planes = w1.shape[0]
    D = planes // scale
    dn = ('NCHW', 'OIHW', 'NCHW')
    out = lax.conv_general_dilated(x, w1, (1, 1), 'VALID',
                                   dimension_numbers=dn)
    out = jnp.maximum(out, 0.0)
    chunks = []
    sp = None
    for i in range(scale):
        spx_i = out[:, i * D:(i + 1) * D]
        sp = spx_i if i == 0 else sp + spx_i
        sp = lax.conv_general_dilated(sp, wdw[i], (1, 1), ((1, 1), (1, 1)),
                                      dimension_numbers=dn,
                                      feature_group_count=D)
        chunks.append(sp)
    cat = jnp.concatenate(chunks, axis=1)
    out3 = lax.conv_general_dilated(cat, w3, (1, 1), 'VALID',
                                    dimension_numbers=dn)
    return jnp.maximum(out3, 0.0)


def reference_forward(x, params):
    for (w1, wdw, w3, scale) in params:
        x = _block_reference(x, w1, wdw, w3, scale)
    return x


if __name__ == "__main__":
    # Res2Net defaults: planeslist=[30, 24, 30, 24], scales=[5, 4, 5, 4] (D=6).
    N, Cin, H, W = 2, 4, 16, 16
    planeslist = [30, 24, 30, 24]
    scales = [5, 4, 5, 4]

    key = jax.random.PRNGKey(0)
    params = []
    cin = Cin
    for planes, scale in zip(planeslist, scales):
        D = planes // scale
        key, k1, k2, k3 = jax.random.split(key, 4)
        w1 = jax.random.normal(k1, (planes, cin, 1, 1), jnp.float32) * (1.0 / cin) ** 0.5
        wdw = jax.random.normal(k2, (scale, D, 1, 3, 3), jnp.float32) * (1.0 / 9.0) ** 0.5
        w3 = jax.random.normal(k3, (planes, planes, 1, 1), jnp.float32) * (1.0 / planes) ** 0.5
        params.append((w1, wdw, w3, scale))
        cin = planes

    key, kx = jax.random.split(key)
    x = jax.random.normal(kx, (N, Cin, H, W), jnp.float32)

    prepared = prepare_res2net(params, H, W, batch=N)   # one-time weight repack
    out = jax.block_until_ready(res2net_forward(x, prepared))

    ref = reference_forward(x, params)
    assert out.shape == ref.shape == (N, planeslist[-1], H, W), (out.shape, ref.shape)
    assert bool(jnp.allclose(out, ref, atol=2e-2, rtol=2e-2)), \
        float(jnp.max(jnp.abs(out - ref)))

    print("KERNEL_OK")
</pallas_src>

<mosaic_0001>
module attributes {stable_mosaic.version = 11 : i64} {
  func.func @kernel(%arg0: i32, %arg1: memref<4x256xf32, #tpu.memory_space<vmem>>, %arg2: memref<40x4xf32, #tpu.memory_space<vmem>>, %arg3: memref<45x8x256xf32, #tpu.memory_space<vmem>>, %arg4: memref<30x40xf32, #tpu.memory_space<vmem>>, %arg5: memref<32x30xf32, #tpu.memory_space<vmem>>, %arg6: memref<36x8x256xf32, #tpu.memory_space<vmem>>, %arg7: memref<24x32xf32, #tpu.memory_space<vmem>>, %arg8: memref<40x24xf32, #tpu.memory_space<vmem>>, %arg9: memref<45x8x256xf32, #tpu.memory_space<vmem>>, %arg10: memref<30x40xf32, #tpu.memory_space<vmem>>, %arg11: memref<32x30xf32, #tpu.memory_space<vmem>>, %arg12: memref<36x8x256xf32, #tpu.memory_space<vmem>>, %arg13: memref<24x32xf32, #tpu.memory_space<vmem>>, %arg14: memref<24x256xf32, #tpu.memory_space<vmem>>, %arg15: memref<40x256xf32, #tpu.memory_space<vmem>>) attributes {dimension_semantics = [#tpu.dimension_semantics<parallel>], iteration_bounds = array<i64: 2>, scalar_prefetch = 0 : i64, scratch_operands = 1 : i64, tpu.core_type = #tpu.core_type<tc>, window_params = [{transform_indices = @transform_0, window_bounds = array<i64: 4, 256>}, {pipeline_mode = #tpu.pipeline_mode<synchronous>, transform_indices = @transform_1, window_bounds = array<i64: 40, 4>}, {pipeline_mode = #tpu.pipeline_mode<synchronous>, transform_indices = @transform_2, window_bounds = array<i64: 45, 8, 256>}, {pipeline_mode = #tpu.pipeline_mode<synchronous>, transform_indices = @transform_3, window_bounds = array<i64: 30, 40>}, {pipeline_mode = #tpu.pipeline_mode<synchronous>, transform_indices = @transform_4, window_bounds = array<i64: 32, 30>}, {pipeline_mode = #tpu.pipeline_mode<synchronous>, transform_indices = @transform_5, window_bounds = array<i64: 36, 8, 256>}, {pipeline_mode = #tpu.pipeline_mode<synchronous>, transform_indices = @transform_6, window_bounds = array<i64: 24, 32>}, {pipeline_mode = #tpu.pipeline_mode<synchronous>, transform_indices = @transform_7, window_bounds = array<i64: 40, 24>}, {pipeline_mode = #tpu.pipeline_mode<synchronous>, transform_indices = @transform_8, window_bounds = array<i64: 45, 8, 256>}, {pipeline_mode = #tpu.pipeline_mode<synchronous>, transform_indices = @transform_9, window_bounds = array<i64: 30, 40>}, {pipeline_mode = #tpu.pipeline_mode<synchronous>, transform_indices = @transform_10, window_bounds = array<i64: 32, 30>}, {pipeline_mode = #tpu.pipeline_mode<synchronous>, transform_indices = @transform_11, window_bounds = array<i64: 36, 8, 256>}, {pipeline_mode = #tpu.pipeline_mode<synchronous>, transform_indices = @transform_12, window_bounds = array<i64: 24, 32>}, {transform_indices = @transform_13, window_bounds = array<i64: 24, 256>}]} {
    %c0 = arith.constant 0 : index
    %c0_0 = arith.constant 0 : index
    %0 = vector.load %arg1[%c0, %c0_0] : memref<4x256xf32, #tpu.memory_space<vmem>>, vector<4x256xf32>
    %c0_1 = arith.constant 0 : index
    %c0_2 = arith.constant 0 : index
    %1 = vector.load %arg2[%c0_1, %c0_2] : memref<40x4xf32, #tpu.memory_space<vmem>>, vector<40x4xf32>
    %cst = arith.constant dense<0.000000e+00> : vector<40x256xf32>
    %2 = tpu.matmul %1, %0, %cst {dimension_numbers = #tpu.dot_dimension_numbers<[1], [0], [0], [1], [0, 0, 1, 1], [], []>} : vector<40x4xf32>, vector<4x256xf32>, vector<40x256xf32> -> vector<40x256xf32>
    %cst_3 = arith.constant 0.000000e+00 : f32
    %3 = vector.broadcast %cst_3 : f32 to vector<40x256xf32>
    %4 = arith.maximumf %2, %3 : vector<40x256xf32>
    %5 = vector.extract_strided_slice %4 {offsets = [0, 0], sizes = [8, 256], strides = [1, 1]} : vector<40x256xf32> to vector<8x256xf32>
    %c17_i32 = arith.constant 17 : i32
    %6 = tpu.dynamic_rotate %5 by %c17_i32 dim 1 : vector<8x256xf32>, i32 -> vector<8x256xf32>
    %c0_4 = arith.constant 0 : index
    %c0_5 = arith.constant 0 : index
    %c0_6 = arith.constant 0 : index
    %7 = vector.load %arg3[%c0_4, %c0_5, %c0_6] : memref<45x8x256xf32, #tpu.memory_space<vmem>>, vector<1x8x256xf32>
    %8 = vector.shape_cast %7 : vector<1x8x256xf32> to vector<8x256xf32>
    %9 = arith.mulf %6, %8 : vector<8x256xf32>
    %c16_i32 = arith.constant 16 : i32
    %10 = tpu.dynamic_rotate %5 by %c16_i32 dim 1 : vector<8x256xf32>, i32 -> vector<8x256xf32>
    %c1 = arith.constant 1 : index
    %c0_7 = arith.constant 0 : index
    %c0_8 = arith.constant 0 : index
    %11 = vector.load %arg3[%c1, %c0_7, %c0_8] : memref<45x8x256xf32, #tpu.memory_space<vmem>>, vector<1x8x256xf32>
    %12 = vector.shape_cast %11 : vector<1x8x256xf32> to vector<8x256xf32>
    %13 = arith.mulf %10, %12 : vector<8x256xf32>
    %c15_i32 = arith.constant 15 : i32
    %14 = tpu.dynamic_rotate %5 by %c15_i32 dim 1 : vector<8x256xf32>, i32 -> vector<8x256xf32>
    %c2 = arith.constant 2 : index
    %c0_9 = arith.constant 0 : index
    %c0_10 = arith.constant 0 : index
    %15 = vector.load %arg3[%c2, %c0_9, %c0_10] : memref<45x8x256xf32, #tpu.memory_space<vmem>>, vector<1x8x256xf32>
    %16 = vector.shape_cast %15 : vector<1x8x256xf32> to vector<8x256xf32>
    %17 = arith.mulf %14, %16 : vector<8x256xf32>
    %c1_i32 = arith.constant 1 : i32
    %18 = tpu.dynamic_rotate %5 by %c1_i32 dim 1 : vector<8x256xf32>, i32 -> vector<8x256xf32>
    %c3 = arith.constant 3 : index
    %c0_11 = arith.constant 0 : index
    %c0_12 = arith.constant 0 : index
    %19 = vector.load %arg3[%c3, %c0_11, %c0_12] : memref<45x8x256xf32, #tpu.memory_space<vmem>>, vector<1x8x256xf32>
    %20 = vector.shape_cast %19 : vector<1x8x256xf32> to vector<8x256xf32>
    %21 = arith.mulf %18, %20 : vector<8x256xf32>
    %c4 = arith.constant 4 : index
    %c0_13 = arith.constant 0 : index
    %c0_14 = arith.constant 0 : index
    %22 = vector.load %arg3[%c4, %c0_13, %c0_14] : memref<45x8x256xf32, #tpu.memory_space<vmem>>, vector<1x8x256xf32>
    %23 = vector.shape_cast %22 : vector<1x8x256xf32> to vector<8x256xf32>
    %24 = arith.mulf %5, %23 : vector<8x256xf32>
    %c255_i32 = arith.constant 255 : i32
    %25 = tpu.dynamic_rotate %5 by %c255_i32 dim 1 : vector<8x256xf32>, i32 -> vector<8x256xf32>
    %c5 = arith.constant 5 : index
    %c0_15 = arith.constant 0 : index
    %c0_16 = arith.constant 0 : index
    %26 = vector.load %arg3[%c5, %c0_15, %c0_16] : memref<45x8x256xf32, #tpu.memory_space<vmem>>, vector<1x8x256xf32>
    %27 = vector.shape_cast %26 : vector<1x8x256xf32> to vector<8x256xf32>
    %28 = arith.mulf %25, %27 : vector<8x256xf32>
    %c241_i32 = arith.constant 241 : i32
    %29 = tpu.dynamic_rotate %5 by %c241_i32 dim 1 : vector<8x256xf32>, i32 -> vector<8x256xf32>
    %c6 = arith.constant 6 : index
    %c0_17 = arith.constant 0 : index
    %c0_18 = arith.constant 0 : index
    %30 = vector.load %arg3[%c6, %c0_17, %c0_18] : memref<45x8x256xf32, #tpu.memory_space<vmem>>, vector<1x8x256xf32>
    %31 = vector.shape_cast %30 : vector<1x8x256xf32> to vector<8x256xf32>
    %32 = arith.mulf %29, %31 : vector<8x256xf32>
    %c240_i32 = arith.constant 240 : i32
    %33 = tpu.dynamic_rotate %5 by %c240_i32 dim 1 : vector<8x256xf32>, i32 -> vector<8x256xf32>
    %c7 = arith.constant 7 : index
    %c0_19 = arith.constant 0 : index
    %c0_20 = arith.constant 0 : index
    %34 = vector.load %arg3[%c7, %c0_19, %c0_20] : memref<45x8x256xf32, #tpu.memory_space<vmem>>, vector<1x8x256xf32>
    %35 = vector.shape_cast %34 : vector<1x8x256xf32> to vector<8x256xf32>
    %36 = arith.mulf %33, %35 : vector<8x256xf32>
    %c239_i32 = arith.constant 239 : i32
    %37 = tpu.dynamic_rotate %5 by %c239_i32 dim 1 : vector<8x256xf32>, i32 -> vector<8x256xf32>
    %c8 = arith.constant 8 : index
    %c0_21 = arith.constant 0 : index
    %c0_22 = arith.constant 0 : index
    %38 = vector.load %arg3[%c8, %c0_21, %c0_22] : memref<45x8x256xf32, #tpu.memory_space<vmem>>, vector<1x8x256xf32>
    %39 = vector.shape_cast %38 : vector<1x8x256xf32> to vector<8x256xf32>
    %40 = arith.mulf %37, %39 : vector<8x256xf32>
    %41 = arith.addf %9, %13 : vector<8x256xf32>
    %42 = arith.addf %17, %21 : vector<8x256xf32>
    %43 = arith.addf %24, %28 : vector<8x256xf32>
    %44 = arith.addf %32, %36 : vector<8x256xf32>
    %45 = arith.addf %41, %42 : vector<8x256xf32>
    %46 = arith.addf %43, %44 : vector<8x256xf32>
    %47 = arith.addf %45, %46 : vector<8x256xf32>
    %48 = arith.addf %47, %40 : vector<8x256xf32>
    %c0_23 = arith.constant 0 : index
    %c0_24 = arith.constant 0 : index
    %49 = vector.load %arg15[%c0_23, %c0_24] : memref<40x256xf32, #tpu.memory_space<vmem>>, vector<8x256xf32>
    tpu.vector_store %arg15[%c0_23, %c0_24], %48 {strides = array<i32>} : memref<40x256xf32, #tpu.memory_space<vmem>>, vector<8x256xf32>,
    %50 = vector.extract_strided_slice %4 {offsets = [8, 0], sizes = [8, 256], strides = [1, 1]} : vector<40x256xf32> to vector<8x256xf32>
    %51 = arith.addf %48, %50 : vector<8x256xf32>
    %c17_i32_25 = arith.constant 17 : i32
    %52 = tpu.dynamic_rotate %51 by %c17_i32_25 dim 1 : vector<8x256xf32>, i32 -> vector<8x256xf32>
    %c9 = arith.constant 9 : index
    %c0_26 = arith.constant 0 : index
    %c0_27 = arith.constant 0 : index
    %53 = vector.load %arg3[%c9, %c0_26, %c0_27] : memref<45x8x256xf32, #tpu.memory_space<vmem>>, vector<1x8x256xf32>
    %54 = vector.shape_cast %53 : vector<1x8x256xf32> to vector<8x256xf32>
    %55 = arith.mulf %52, %54 : vector<8x256xf32>
    %c16_i32_28 = arith.constant 16 : i32
    %56 = tpu.dynamic_rotate %51 by %c16_i32_28 dim 1 : vector<8x256xf32>, i32 -> vector<8x256xf32>
    %c10 = arith.constant 10 : index
    %c0_29 = arith.constant 0 : index
    %c0_30 = arith.constant 0 : index
    %57 = vector.load %arg3[%c10, %c0_29, %c0_30] : memref<45x8x256xf32, #tpu.memory_space<vmem>>, vector<1x8x256xf32>
    %58 = vector.shape_cast %57 : vector<1x8x256xf32> to vector<8x256xf32>
    %59 = arith.mulf %56, %58 : vector<8x256xf32>
    %c15_i32_31 = arith.constant 15 : i32
    %60 = tpu.dynamic_rotate %51 by %c15_i32_31 dim 1 : vector<8x256xf32>, i32 -> vector<8x256xf32>
    %c11 = arith.constant 11 : index
    %c0_32 = arith.constant 0 : index
    %c0_33 = arith.constant 0 : index
    %61 = vector.load %arg3[%c11, %c0_32, %c0_33] : memref<45x8x256xf32, #tpu.memory_space<vmem>>, vector<1x8x256xf32>
    %62 = vector.shape_cast %61 : vector<1x8x256xf32> to vector<8x256xf32>
    %63 = arith.mulf %60, %62 : vector<8x256xf32>
    %c1_i32_34 = arith.constant 1 : i32
    %64 = tpu.dynamic_rotate %51 by %c1_i32_34 dim 1 : vector<8x256xf32>, i32 -> vector<8x256xf32>
    %c12 = arith.constant 12 : index
    %c0_35 = arith.constant 0 : index
    %c0_36 = arith.constant 0 : index
    %65 = vector.load %arg3[%c12, %c0_35, %c0_36] : memref<45x8x256xf32, #tpu.memory_space<vmem>>, vector<1x8x256xf32>
    %66 = vector.shape_cast %65 : vector<1x8x256xf32> to vector<8x256xf32>
    %67 = arith.mulf %64, %66 : vector<8x256xf32>
    %c13 = arith.constant 13 : index
    %c0_37 = arith.constant 0 : index
    %c0_38 = arith.constant 0 : index
    %68 = vector.load %arg3[%c13, %c0_37, %c0_38] : memref<45x8x256xf32, #tpu.memory_space<vmem>>, vector<1x8x256xf32>
    %69 = vector.shape_cast %68 : vector<1x8x256xf32> to vector<8x256xf32>
    %70 = arith.mulf %51, %69 : vector<8x256xf32>
    %c255_i32_39 = arith.constant 255 : i32
    %71 = tpu.dynamic_rotate %51 by %c255_i32_39 dim 1 : vector<8x256xf32>, i32 -> vector<8x256xf32>
    %c14 = arith.constant 14 : index
    %c0_40 = arith.constant 0 : index
    %c0_41 = arith.constant 0 : index
    %72 = vector.load %arg3[%c14, %c0_40, %c0_41] : memref<45x8x256xf32, #tpu.memory_space<vmem>>, vector<1x8x256xf32>
    %73 = vector.shape_cast %72 : vector<1x8x256xf32> to vector<8x256xf32>
    %74 = arith.mulf %71, %73 : vector<8x256xf32>
    %c241_i32_42 = arith.constant 241 : i32
    %75 = tpu.dynamic_rotate %51 by %c241_i32_42 dim 1 : vector<8x256xf32>, i32 -> vector<8x256xf32>
    %c15 = arith.constant 15 : index
    %c0_43 = arith.constant 0 : index
    %c0_44 = arith.constant 0 : index
    %76 = vector.load %arg3[%c15, %c0_43, %c0_44] : memref<45x8x256xf32, #tpu.memory_space<vmem>>, vector<1x8x256xf32>
    %77 = vector.shape_cast %76 : vector<1x8x256xf32> to vector<8x256xf32>
    %78 = arith.mulf %75, %77 : vector<8x256xf32>
    %c240_i32_45 = arith.constant 240 : i32
    %79 = tpu.dynamic_rotate %51 by %c240_i32_45 dim 1 : vector<8x256xf32>, i32 -> vector<8x256xf32>
    %c16 = arith.constant 16 : index
    %c0_46 = arith.constant 0 : index
    %c0_47 = arith.constant 0 : index
    %80 = vector.load %arg3[%c16, %c0_46, %c0_47] : memref<45x8x256xf32, #tpu.memory_space<vmem>>, vector<1x8x256xf32>
    %81 = vector.shape_cast %80 : vector<1x8x256xf32> to vector<8x256xf32>
    %82 = arith.mulf %79, %81 : vector<8x256xf32>
    %c239_i32_48 = arith.constant 239 : i32
    %83 = tpu.dynamic_rotate %51 by %c239_i32_48 dim 1 : vector<8x256xf32>, i32 -> vector<8x256xf32>
    %c17 = arith.constant 17 : index
    %c0_49 = arith.constant 0 : index
    %c0_50 = arith.constant 0 : index
    %84 = vector.load %arg3[%c17, %c0_49, %c0_50] : memref<45x8x256xf32, #tpu.memory_space<vmem>>, vector<1x8x256xf32>
    %85 = vector.shape_cast %84 : vector<1x8x256xf32> to vector<8x256xf32>
    %86 = arith.mulf %83, %85 : vector<8x256xf32>
    %87 = arith.addf %55, %59 : vector<8x256xf32>
    %88 = arith.addf %63, %67 : vector<8x256xf32>
    %89 = arith.addf %70, %74 : vector<8x256xf32>
    %90 = arith.addf %78, %82 : vector<8x256xf32>
    %91 = arith.addf %87, %88 : vector<8x256xf32>
    %92 = arith.addf %89, %90 : vector<8x256xf32>
    %93 = arith.addf %91, %92 : vector<8x256xf32>
    %94 = arith.addf %93, %86 : vector<8x256xf32>
    %c8_51 = arith.constant 8 : index
    %c0_52 = arith.constant 0 : index
    %95 = vector.load %arg15[%c8_51, %c0_52] : memref<40x256xf32, #tpu.memory_space<vmem>>, vector<8x256xf32>
    tpu.vector_store %arg15[%c8_51, %c0_52], %94 {strides = array<i32>} : memref<40x256xf32, #tpu.memory_space<vmem>>, vector<8x256xf32>,
    %96 = vector.extract_strided_slice %4 {offsets = [16, 0], sizes = [8, 256], strides = [1, 1]} : vector<40x256xf32> to vector<8x256xf32>
    %97 = arith.addf %94, %96 : vector<8x256xf32>
    %c17_i32_53 = arith.constant 17 : i32
    %98 = tpu.dynamic_rotate %97 by %c17_i32_53 dim 1 : vector<8x256xf32>, i32 -> vector<8x256xf32>
    %c18 = arith.constant 18 : index
    %c0_54 = arith.constant 0 : index
    %c0_55 = arith.constant 0 : index
    %99 = vector.load %arg3[%c18, %c0_54, %c0_55] : memref<45x8x256xf32, #tpu.memory_space<vmem>>, vector<1x8x256xf32>
    %100 = vector.shape_cast %99 : vector<1x8x256xf32> to vector<8x256xf32>
    %101 = arith.mulf %98, %100 : vector<8x256xf32>
    %c16_i32_56 = arith.constant 16 : i32
    %102 = tpu.dynamic_rotate %97 by %c16_i32_56 dim 1 : vector<8x256xf32>, i32 -> vector<8x256xf32>
    %c19 = arith.constant 19 : index
    %c0_57 = arith.constant 0 : index
    %c0_58 = arith.constant 0 : index
    %103 = vector.load %arg3[%c19, %c0_57, %c0_58] : memref<45x8x256xf32, #tpu.memory_space<vmem>>, vector<1x8x256xf32>
    %104 = vector.shape_cast %103 : vector<1x8x256xf32> to vector<8x256xf32>
    %105 = arith.mulf %102, %104 : vector<8x256xf32>
    %c15_i32_59 = arith.constant 15 : i32
    %106 = tpu.dynamic_rotate %97 by %c15_i32_59 dim 1 : vector<8x256xf32>, i32 -> vector<8x256xf32>
    %c20 = arith.constant 20 : index
    %c0_60 = arith.constant 0 : index
    %c0_61 = arith.constant 0 : index
    %107 = vector.load %arg3[%c20, %c0_60, %c0_61] : memref<45x8x256xf32, #tpu.memory_space<vmem>>, vector<1x8x256xf32>
    %108 = vector.shape_cast %107 : vector<1x8x256xf32> to vector<8x256xf32>
    %109 = arith.mulf %106, %108 : vector<8x256xf32>
    %c1_i32_62 = arith.constant 1 : i32
    %110 = tpu.dynamic_rotate %97 by %c1_i32_62 dim 1 : vector<8x256xf32>, i32 -> vector<8x256xf32>
    %c21 = arith.constant 21 : index
    %c0_63 = arith.constant 0 : index
    %c0_64 = arith.constant 0 : index
    %111 = vector.load %arg3[%c21, %c0_63, %c0_64] : memref<45x8x256xf32, #tpu.memory_space<vmem>>, vector<1x8x256xf32>
    %112 = vector.shape_cast %111 : vector<1x8x256xf32> to vector<8x256xf32>
    %113 = arith.mulf %110, %112 : vector<8x256xf32>
    %c22 = arith.constant 22 : index
    %c0_65 = arith.constant 0 : index
    %c0_66 = arith.constant 0 : index
    %114 = vector.load %arg3[%c22, %c0_65, %c0_66] : memref<45x8x256xf32, #tpu.memory_space<vmem>>, vector<1x8x256xf32>
    %115 = vector.shape_cast %114 : vector<1x8x256xf32> to vector<8x256xf32>
    %116 = arith.mulf %97, %115 : vector<8x256xf32>
    %c255_i32_67 = arith.constant 255 : i32
    %117 = tpu.dynamic_rotate %97 by %c255_i32_67 dim 1 : vector<8x256xf32>, i32 -> vector<8x256xf32>
    %c23 = arith.constant 23 : index
    %c0_68 = arith.constant 0 : index
    %c0_69 = arith.constant 0 : index
    %118 = vector.load %arg3[%c23, %c0_68, %c0_69] : memref<45x8x256xf32, #tpu.memory_space<vmem>>, vector<1x8x256xf32>
    %119 = vector.shape_cast %118 : vector<1x8x256xf32> to vector<8x256xf32>
    %120 = arith.mulf %117, %119 : vector<8x256xf32>
    %c241_i32_70 = arith.constant 241 : i32
    %121 = tpu.dynamic_rotate %97 by %c241_i32_70 dim 1 : vector<8x256xf32>, i32 -> vector<8x256xf32>
    %c24 = arith.constant 24 : index
    %c0_71 = arith.constant 0 : index
    %c0_72 = arith.constant 0 : index
    %122 = vector.load %arg3[%c24, %c0_71, %c0_72] : memref<45x8x256xf32, #tpu.memory_space<vmem>>, vector<1x8x256xf32>
    %123 = vector.shape_cast %122 : vector<1x8x256xf32> to vector<8x256xf32>
    %124 = arith.mulf %121, %123 : vector<8x256xf32>
    %c240_i32_73 = arith.constant 240 : i32
    %125 = tpu.dynamic_rotate %97 by %c240_i32_73 dim 1 : vector<8x256xf32>, i32 -> vector<8x256xf32>
    %c25 = arith.constant 25 : index
    %c0_74 = arith.constant 0 : index
    %c0_75 = arith.constant 0 : index
    %126 = vector.load %arg3[%c25, %c0_74, %c0_75] : memref<45x8x256xf32, #tpu.memory_space<vmem>>, vector<1x8x256xf32>
    %127 = vector.shape_cast %126 : vector<1x8x256xf32> to vector<8x256xf32>
    %128 = arith.mulf %125, %127 : vector<8x256xf32>
    %c239_i32_76 = arith.constant 239 : i32
    %129 = tpu.dynamic_rotate %97 by %c239_i32_76 dim 1 : vector<8x256xf32>, i32 -> vector<8x256xf32>
    %c26 = arith.constant 26 : index
    %c0_77 = arith.constant 0 : index
    %c0_78 = arith.constant 0 : index
    %130 = vector.load %arg3[%c26, %c0_77, %c0_78] : memref<45x8x256xf32, #tpu.memory_space<vmem>>, vector<1x8x256xf32>
    %131 = vector.shape_cast %130 : vector<1x8x256xf32> to vector<8x256xf32>
    %132 = arith.mulf %129, %131 : vector<8x256xf32>
    %133 = arith.addf %101, %105 : vector<8x256xf32>
    %134 = arith.addf %109, %113 : vector<8x256xf32>
    %135 = arith.addf %116, %120 : vector<8x256xf32>
    %136 = arith.addf %124, %128 : vector<8x256xf32>
    %137 = arith.addf %133, %134 : vector<8x256xf32>
    %138 = arith.addf %135, %136 : vector<8x256xf32>
    %139 = arith.addf %137, %138 : vector<8x256xf32>
    %140 = arith.addf %139, %132 : vector<8x256xf32>
    %c16_79 = arith.constant 16 : index
    %c0_80 = arith.constant 0 : index
    %141 = vector.load %arg15[%c16_79, %c0_80] : memref<40x256xf32, #tpu.memory_space<vmem>>, vector<8x256xf32>
    tpu.vector_store %arg15[%c16_79, %c0_80], %140 {strides = array<i32>} : memref<40x256xf32, #tpu.memory_space<vmem>>, vector<8x256xf32>,
    %142 = vector.extract_strided_slice %4 {offsets = [24, 0], sizes = [8, 256], strides = [1, 1]} : vector<40x256xf32> to vector<8x256xf32>
    %143 = arith.addf %140, %142 : vector<8x256xf32>
    %c17_i32_81 = arith.constant 17 : i32
    %144 = tpu.dynamic_rotate %143 by %c17_i32_81 dim 1 : vector<8x256xf32>, i32 -> vector<8x256xf32>
    %c27 = arith.constant 27 : index
    %c0_82 = arith.constant 0 : index
    %c0_83 = arith.constant 0 : index
    %145 = vector.load %arg3[%c27, %c0_82, %c0_83] : memref<45x8x256xf32, #tpu.memory_space<vmem>>, vector<1x8x256xf32>
    %146 = vector.shape_cast %145 : vector<1x8x256xf32> to vector<8x256xf32>
    %147 = arith.mulf %144, %146 : vector<8x256xf32>
    %c16_i32_84 = arith.constant 16 : i32
    %148 = tpu.dynamic_rotate %143 by %c16_i32_84 dim 1 : vector<8x256xf32>, i32 -> vector<8x256xf32>
    %c28 = arith.constant 28 : index
    %c0_85 = arith.constant 0 : index
    %c0_86 = arith.constant 0 : index
    %149 = vector.load %arg3[%c28, %c0_85, %c0_86] : memref<45x8x256xf32, #tpu.memory_space<vmem>>, vector<1x8x256xf32>
    %150 = vector.shape_cast %149 : vector<1x8x256xf32> to vector<8x256xf32>
    %151 = arith.mulf %148, %150 : vector<8x256xf32>
    %c15_i32_87 = arith.constant 15 : i32
    %152 = tpu.dynamic_rotate %143 by %c15_i32_87 dim 1 : vector<8x256xf32>, i32 -> vector<8x256xf32>
    %c29 = arith.constant 29 : index
    %c0_88 = arith.constant 0 : index
    %c0_89 = arith.constant 0 : index
    %153 = vector.load %arg3[%c29, %c0_88, %c0_89] : memref<45x8x256xf32, #tpu.memory_space<vmem>>, vector<1x8x256xf32>
    %154 = vector.shape_cast %153 : vector<1x8x256xf32> to vector<8x256xf32>
    %155 = arith.mulf %152, %154 : vector<8x256xf32>
    %c1_i32_90 = arith.constant 1 : i32
    %156 = tpu.dynamic_rotate %143 by %c1_i32_90 dim 1 : vector<8x256xf32>, i32 -> vector<8x256xf32>
    %c30 = arith.constant 30 : index
    %c0_91 = arith.constant 0 : index
    %c0_92 = arith.constant 0 : index
    %157 = vector.load %arg3[%c30, %c0_91, %c0_92] : memref<45x8x256xf32, #tpu.memory_space<vmem>>, vector<1x8x256xf32>
    %158 = vector.shape_cast %157 : vector<1x8x256xf32> to vector<8x256xf32>
    %159 = arith.mulf %156, %158 : vector<8x256xf32>
    %c31 = arith.constant 31 : index
    %c0_93 = arith.constant 0 : index
    %c0_94 = arith.constant 0 : index
    %160 = vector.load %arg3[%c31, %c0_93, %c0_94] : memref<45x8x256xf32, #tpu.memory_space<vmem>>, vector<1x8x256xf32>
    %161 = vector.shape_cast %160 : vector<1x8x256xf32> to vector<8x256xf32>
    %162 = arith.mulf %143, %161 : vector<8x256xf32>
    %c255_i32_95 = arith.constant 255 : i32
    %163 = tpu.dynamic_rotate %143 by %c255_i32_95 dim 1 : vector<8x256xf32>, i32 -> vector<8x256xf32>
    %c32 = arith.constant 32 : index
    %c0_96 = arith.constant 0 : index
    %c0_97 = arith.constant 0 : index
    %164 = vector.load %arg3[%c32, %c0_96, %c0_97] : memref<45x8x256xf32, #tpu.memory_space<vmem>>, vector<1x8x256xf32>
    %165 = vector.shape_cast %164 : vector<1x8x256xf32> to vector<8x256xf32>
    %166 = arith.mulf %163, %165 : vector<8x256xf32>
    %c241_i32_98 = arith.constant 241 : i32
    %167 = tpu.dynamic_rotate %143 by %c241_i32_98 dim 1 : vector<8x256xf32>, i32 -> vector<8x256xf32>
    %c33 = arith.constant 33 : index
    %c0_99 = arith.constant 0 : index
    %c0_100 = arith.constant 0 : index
    %168 = vector.load %arg3[%c33, %c0_99, %c0_100] : memref<45x8x256xf32, #tpu.memory_space<vmem>>, vector<1x8x256xf32>
    %169 = vector.shape_cast %168 : vector<1x8x256xf32> to vector<8x256xf32>
    %170 = arith.mulf %167, %169 : vector<8x256xf32>
    %c240_i32_101 = arith.constant 240 : i32
    %171 = tpu.dynamic_rotate %143 by %c240_i32_101 dim 1 : vector<8x256xf32>, i32 -> vector<8x256xf32>
    %c34 = arith.constant 34 : index
    %c0_102 = arith.constant 0 : index
    %c0_103 = arith.constant 0 : index
    %172 = vector.load %arg3[%c34, %c0_102, %c0_103] : memref<45x8x256xf32, #tpu.memory_space<vmem>>, vector<1x8x256xf32>
    %173 = vector.shape_cast %172 : vector<1x8x256xf32> to vector<8x256xf32>
    %174 = arith.mulf %171, %173 : vector<8x256xf32>
    %c239_i32_104 = arith.constant 239 : i32
    %175 = tpu.dynamic_rotate %143 by %c239_i32_104 dim 1 : vector<8x256xf32>, i32 -> vector<8x256xf32>
    %c35 = arith.constant 35 : index
    %c0_105 = arith.constant 0 : index
    %c0_106 = arith.constant 0 : index
    %176 = vector.load %arg3[%c35, %c0_105, %c0_106] : memref<45x8x256xf32, #tpu.memory_space<vmem>>, vector<1x8x256xf32>
    %177 = vector.shape_cast %176 : vector<1x8x256xf32> to vector<8x256xf32>
    %178 = arith.mulf %175, %177 : vector<8x256xf32>
    %179 = arith.addf %147, %151 : vector<8x256xf32>
    %180 = arith.addf %155, %159 : vector<8x256xf32>
    %181 = arith.addf %162, %166 : vector<8x256xf32>
    %182 = arith.addf %170, %174 : vector<8x256xf32>
    %183 = arith.addf %179, %180 : vector<8x256xf32>
    %184 = arith.addf %181, %182 : vector<8x256xf32>
    %185 = arith.addf %183, %184 : vector<8x256xf32>
    %186 = arith.addf %185, %178 : vector<8x256xf32>
    %c24_107 = arith.constant 24 : index
    %c0_108 = arith.constant 0 : index
    %187 = vector.load %arg15[%c24_107, %c0_108] : memref<40x256xf32, #tpu.memory_space<vmem>>, vector<8x256xf32>
    tpu.vector_store %arg15[%c24_107, %c0_108], %186 {strides = array<i32>} : memref<40x256xf32, #tpu.memory_space<vmem>>, vector<8x256xf32>,
    %188 = vector.extract_strided_slice %4 {offsets = [32, 0], sizes = [8, 256], strides = [1, 1]} : vector<40x256xf32> to vector<8x256xf32>
    %189 = arith.addf %186, %188 : vector<8x256xf32>
    %c17_i32_109 = arith.constant 17 : i32
    %190 = tpu.dynamic_rotate %189 by %c17_i32_109 dim 1 : vector<8x256xf32>, i32 -> vector<8x256xf32>
    %c36 = arith.constant 36 : index
    %c0_110 = arith.constant 0 : index
    %c0_111 = arith.constant 0 : index
    %191 = vector.load %arg3[%c36, %c0_110, %c0_111] : memref<45x8x256xf32, #tpu.memory_space<vmem>>, vector<1x8x256xf32>
    %192 = vector.shape_cast %191 : vector<1x8x256xf32> to vector<8x256xf32>
    %193 = arith.mulf %190, %192 : vector<8x256xf32>
    %c16_i32_112 = arith.constant 16 : i32
    %194 = tpu.dynamic_rotate %189 by %c16_i32_112 dim 1 : vector<8x256xf32>, i32 -> vector<8x256xf32>
    %c37 = arith.constant 37 : index
    %c0_113 = arith.constant 0 : index
    %c0_114 = arith.constant 0 : index
    %195 = vector.load %arg3[%c37, %c0_113, %c0_114] : memref<45x8x256xf32, #tpu.memory_space<vmem>>, vector<1x8x256xf32>
    %196 = vector.shape_cast %195 : vector<1x8x256xf32> to vector<8x256xf32>
    %197 = arith.mulf %194, %196 : vector<8x256xf32>
    %c15_i32_115 = arith.constant 15 : i32
    %198 = tpu.dynamic_rotate %189 by %c15_i32_115 dim 1 : vector<8x256xf32>, i32 -> vector<8x256xf32>
    %c38 = arith.constant 38 : index
    %c0_116 = arith.constant 0 : index
    %c0_117 = arith.constant 0 : index
    %199 = vector.load %arg3[%c38, %c0_116, %c0_117] : memref<45x8x256xf32, #tpu.memory_space<vmem>>, vector<1x8x256xf32>
    %200 = vector.shape_cast %199 : vector<1x8x256xf32> to vector<8x256xf32>
    %201 = arith.mulf %198, %200 : vector<8x256xf32>
    %c1_i32_118 = arith.constant 1 : i32
    %202 = tpu.dynamic_rotate %189 by %c1_i32_118 dim 1 : vector<8x256xf32>, i32 -> vector<8x256xf32>
    %c39 = arith.constant 39 : index
    %c0_119 = arith.constant 0 : index
    %c0_120 = arith.constant 0 : index
    %203 = vector.load %arg3[%c39, %c0_119, %c0_120] : memref<45x8x256xf32, #tpu.memory_space<vmem>>, vector<1x8x256xf32>
    %204 = vector.shape_cast %203 : vector<1x8x256xf32> to vector<8x256xf32>
    %205 = arith.mulf %202, %204 : vector<8x256xf32>
    %c40 = arith.constant 40 : index
    %c0_121 = arith.constant 0 : index
    %c0_122 = arith.constant 0 : index
    %206 = vector.load %arg3[%c40, %c0_121, %c0_122] : memref<45x8x256xf32, #tpu.memory_space<vmem>>, vector<1x8x256xf32>
    %207 = vector.shape_cast %206 : vector<1x8x256xf32> to vector<8x256xf32>
    %208 = arith.mulf %189, %207 : vector<8x256xf32>
    %c255_i32_123 = arith.constant 255 : i32
    %209 = tpu.dynamic_rotate %189 by %c255_i32_123 dim 1 : vector<8x256xf32>, i32 -> vector<8x256xf32>
    %c41 = arith.constant 41 : index
    %c0_124 = arith.constant 0 : index
    %c0_125 = arith.constant 0 : index
    %210 = vector.load %arg3[%c41, %c0_124, %c0_125] : memref<45x8x256xf32, #tpu.memory_space<vmem>>, vector<1x8x256xf32>
    %211 = vector.shape_cast %210 : vector<1x8x256xf32> to vector<8x256xf32>
    %212 = arith.mulf %209, %211 : vector<8x256xf32>
    %c241_i32_126 = arith.constant 241 : i32
    %213 = tpu.dynamic_rotate %189 by %c241_i32_126 dim 1 : vector<8x256xf32>, i32 -> vector<8x256xf32>
    %c42 = arith.constant 42 : index
    %c0_127 = arith.constant 0 : index
    %c0_128 = arith.constant 0 : index
    %214 = vector.load %arg3[%c42, %c0_127, %c0_128] : memref<45x8x256xf32, #tpu.memory_space<vmem>>, vector<1x8x256xf32>
    %215 = vector.shape_cast %214 : vector<1x8x256xf32> to vector<8x256xf32>
    %216 = arith.mulf %213, %215 : vector<8x256xf32>
    %c240_i32_129 = arith.constant 240 : i32
    %217 = tpu.dynamic_rotate %189 by %c240_i32_129 dim 1 : vector<8x256xf32>, i32 -> vector<8x256xf32>
    %c43 = arith.constant 43 : index
    %c0_130 = arith.constant 0 : index
    %c0_131 = arith.constant 0 : index
    %218 = vector.load %arg3[%c43, %c0_130, %c0_131] : memref<45x8x256xf32, #tpu.memory_space<vmem>>, vector<1x8x256xf32>
    %219 = vector.shape_cast %218 : vector<1x8x256xf32> to vector<8x256xf32>
    %220 = arith.mulf %217, %219 : vector<8x256xf32>
    %c239_i32_132 = arith.constant 239 : i32
    %221 = tpu.dynamic_rotate %189 by %c239_i32_132 dim 1 : vector<8x256xf32>, i32 -> vector<8x256xf32>
    %c44 = arith.constant 44 : index
    %c0_133 = arith.constant 0 : index
    %c0_134 = arith.constant 0 : index
    %222 = vector.load %arg3[%c44, %c0_133, %c0_134] : memref<45x8x256xf32, #tpu.memory_space<vmem>>, vector<1x8x256xf32>
    %223 = vector.shape_cast %222 : vector<1x8x256xf32> to vector<8x256xf32>
    %224 = arith.mulf %221, %223 : vector<8x256xf32>
    %225 = arith.addf %193, %197 : vector<8x256xf32>
    %226 = arith.addf %201, %205 : vector<8x256xf32>
    %227 = arith.addf %208, %212 : vector<8x256xf32>
    %228 = arith.addf %216, %220 : vector<8x256xf32>
    %229 = arith.addf %225, %226 : vector<8x256xf32>
    %230 = arith.addf %227, %228 : vector<8x256xf32>
    %231 = arith.addf %229, %230 : vector<8x256xf32>
    %232 = arith.addf %231, %224 : vector<8x256xf32>
    %c32_135 = arith.constant 32 : index
    %c0_136 = arith.constant 0 : index
    %233 = vector.load %arg15[%c32_135, %c0_136] : memref<40x256xf32, #tpu.memory_space<vmem>>, vector<8x256xf32>
    tpu.vector_store %arg15[%c32_135, %c0_136], %232 {strides = array<i32>} : memref<40x256xf32, #tpu.memory_space<vmem>>, vector<8x256xf32>,
    %c0_137 = arith.constant 0 : index
    %c0_138 = arith.constant 0 : index
    %234 = vector.load %arg4[%c0_137, %c0_138] : memref<30x40xf32, #tpu.memory_space<vmem>>, vector<30x40xf32>
    %c0_139 = arith.constant 0 : index
    %c0_140 = arith.constant 0 : index
    %235 = vector.load %arg15[%c0_139, %c0_140] : memref<40x256xf32, #tpu.memory_space<vmem>>, vector<40x256xf32>
    %cst_141 = arith.constant dense<0.000000e+00> : vector<30x256xf32>
    %236 = tpu.matmul %234, %235, %cst_141 {dimension_numbers = #tpu.dot_dimension_numbers<[1], [0], [0], [1], [0, 0, 1, 1], [], []>} : vector<30x40xf32>, vector<40x256xf32>, vector<30x256xf32> -> vector<30x256xf32>
    %cst_142 = arith.constant 0.000000e+00 : f32
    %237 = vector.broadcast %cst_142 : f32 to vector<30x256xf32>
    %238 = arith.maximumf %236, %237 : vector<30x256xf32>
    %c0_143 = arith.constant 0 : index
    %c0_144 = arith.constant 0 : index
    %239 = vector.load %arg5[%c0_143, %c0_144] : memref<32x30xf32, #tpu.memory_space<vmem>>, vector<32x30xf32>
    %cst_145 = arith.constant dense<0.000000e+00> : vector<32x256xf32>
    %240 = tpu.matmul %239, %238, %cst_145 {dimension_numbers = #tpu.dot_dimension_numbers<[1], [0], [0], [1], [0, 0, 1, 1], [], []>} : vector<32x30xf32>, vector<30x256xf32>, vector<32x256xf32> -> vector<32x256xf32>
    %cst_146 = arith.constant 0.000000e+00 : f32
    %241 = vector.broadcast %cst_146 : f32 to vector<32x256xf32>
    %242 = arith.maximumf %240, %241 : vector<32x256xf32>
    %243 = vector.extract_strided_slice %242 {offsets = [0, 0], sizes = [8, 256], strides = [1, 1]} : vector<32x256xf32> to vector<8x256xf32>
    %c17_i32_147 = arith.constant 17 : i32
    %244 = tpu.dynamic_rotate %243 by %c17_i32_147 dim 1 : vector<8x256xf32>, i32 -> vector<8x256xf32>
    %c0_148 = arith.constant 0 : index
    %c0_149 = arith.constant 0 : index
    %c0_150 = arith.constant 0 : index
    %245 = vector.load %arg6[%c0_148, %c0_149, %c0_150] : memref<36x8x256xf32, #tpu.memory_space<vmem>>, vector<1x8x256xf32>
    %246 = vector.shape_cast %245 : vector<1x8x256xf32> to vector<8x256xf32>
    %247 = arith.mulf %244, %246 : vector<8x256xf32>
    %c16_i32_151 = arith.constant 16 : i32
    %248 = tpu.dynamic_rotate %243 by %c16_i32_151 dim 1 : vector<8x256xf32>, i32 -> vector<8x256xf32>
    %c1_152 = arith.constant 1 : index
    %c0_153 = arith.constant 0 : index
    %c0_154 = arith.constant 0 : index
    %249 = vector.load %arg6[%c1_152, %c0_153, %c0_154] : memref<36x8x256xf32, #tpu.memory_space<vmem>>, vector<1x8x256xf32>
    %250 = vector.shape_cast %249 : vector<1x8x256xf32> to vector<8x256xf32>
    %251 = arith.mulf %248, %250 : vector<8x256xf32>
    %c15_i32_155 = arith.constant 15 : i32
    %252 = tpu.dynamic_rotate %243 by %c15_i32_155 dim 1 : vector<8x256xf32>, i32 -> vector<8x256xf32>
    %c2_156 = arith.constant 2 : index
    %c0_157 = arith.constant 0 : index
    %c0_158 = arith.constant 0 : index
    %253 = vector.load %arg6[%c2_156, %c0_157, %c0_158] : memref<36x8x256xf32, #tpu.memory_space<vmem>>, vector<1x8x256xf32>
    %254 = vector.shape_cast %253 : vector<1x8x256xf32> to vector<8x256xf32>
    %255 = arith.mulf %252, %254 : vector<8x256xf32>
    %c1_i32_159 = arith.constant 1 : i32
    %256 = tpu.dynamic_rotate %243 by %c1_i32_159 dim 1 : vector<8x256xf32>, i32 -> vector<8x256xf32>
    %c3_160 = arith.constant 3 : index
    %c0_161 = arith.constant 0 : index
    %c0_162 = arith.constant 0 : index
    %257 = vector.load %arg6[%c3_160, %c0_161, %c0_162] : memref<36x8x256xf32, #tpu.memory_space<vmem>>, vector<1x8x256xf32>
    %258 = vector.shape_cast %257 : vector<1x8x256xf32> to vector<8x256xf32>
    %259 = arith.mulf %256, %258 : vector<8x256xf32>
    %c4_163 = arith.constant 4 : index
    %c0_164 = arith.constant 0 : index
    %c0_165 = arith.constant 0 : index
    %260 = vector.load %arg6[%c4_163, %c0_164, %c0_165] : memref<36x8x256xf32, #tpu.memory_space<vmem>>, vector<1x8x256xf32>
    %261 = vector.shape_cast %260 : vector<1x8x256xf32> to vector<8x256xf32>
    %262 = arith.mulf %243, %261 : vector<8x256xf32>
    %c255_i32_166 = arith.constant 255 : i32
    %263 = tpu.dynamic_rotate %243 by %c255_i32_166 dim 1 : vector<8x256xf32>, i32 -> vector<8x256xf32>
    %c5_167 = arith.constant 5 : index
    %c0_168 = arith.constant 0 : index
    %c0_169 = arith.constant 0 : index
    %264 = vector.load %arg6[%c5_167, %c0_168, %c0_169] : memref<36x8x256xf32, #tpu.memory_space<vmem>>, vector<1x8x256xf32>
    %265 = vector.shape_cast %264 : vector<1x8x256xf32> to vector<8x256xf32>
    %266 = arith.mulf %263, %265 : vector<8x256xf32>
    %c241_i32_170 = arith.constant 241 : i32
    %267 = tpu.dynamic_rotate %243 by %c241_i32_170 dim 1 : vector<8x256xf32>, i32 -> vector<8x256xf32>
    %c6_171 = arith.constant 6 : index
    %c0_172 = arith.constant 0 : index
    %c0_173 = arith.constant 0 : index
    %268 = vector.load %arg6[%c6_171, %c0_172, %c0_173] : memref<36x8x256xf32, #tpu.memory_space<vmem>>, vector<1x8x256xf32>
    %269 = vector.shape_cast %268 : vector<1x8x256xf32> to vector<8x256xf32>
    %270 = arith.mulf %267, %269 : vector<8x256xf32>
    %c240_i32_174 = arith.constant 240 : i32
    %271 = tpu.dynamic_rotate %243 by %c240_i32_174 dim 1 : vector<8x256xf32>, i32 -> vector<8x256xf32>
    %c7_175 = arith.constant 7 : index
    %c0_176 = arith.constant 0 : index
    %c0_177 = arith.constant 0 : index
    %272 = vector.load %arg6[%c7_175, %c0_176, %c0_177] : memref<36x8x256xf32, #tpu.memory_space<vmem>>, vector<1x8x256xf32>
    %273 = vector.shape_cast %272 : vector<1x8x256xf32> to vector<8x256xf32>
    %274 = arith.mulf %271, %273 : vector<8x256xf32>
    %c239_i32_178 = arith.constant 239 : i32
    %275 = tpu.dynamic_rotate %243 by %c239_i32_178 dim 1 : vector<8x256xf32>, i32 -> vector<8x256xf32>
    %c8_179 = arith.constant 8 : index
    %c0_180 = arith.constant 0 : index
    %c0_181 = arith.constant 0 : index
    %276 = vector.load %arg6[%c8_179, %c0_180, %c0_181] : memref<36x8x256xf32, #tpu.memory_space<vmem>>, vector<1x8x256xf32>
    %277 = vector.shape_cast %276 : vector<1x8x256xf32> to vector<8x256xf32>
    %278 = arith.mulf %275, %277 : vector<8x256xf32>
    %279 = arith.addf %247, %251 : vector<8x256xf32>
    %280 = arith.addf %255, %259 : vector<8x256xf32>
    %281 = arith.addf %262, %266 : vector<8x256xf32>
    %282 = arith.addf %270, %274 : vector<8x256xf32>
    %283 = arith.addf %279, %280 : vector<8x256xf32>
    %284 = arith.addf %281, %282 : vector<8x256xf32>
    %285 = arith.addf %283, %284 : vector<8x256xf32>
    %286 = arith.addf %285, %278 : vector<8x256xf32>
    %c0_182 = arith.constant 0 : index
    %c0_183 = arith.constant 0 : index
    %287 = vector.load %arg15[%c0_182, %c0_183] : memref<40x256xf32, #tpu.memory_space<vmem>>, vector<8x256xf32>
    tpu.vector_store %arg15[%c0_182, %c0_183], %286 {strides = array<i32>} : memref<40x256xf32, #tpu.memory_space<vmem>>, vector<8x256xf32>,
    %288 = vector.extract_strided_slice %242 {offsets = [8, 0], sizes = [8, 256], strides = [1, 1]} : vector<32x256xf32> to vector<8x256xf32>
    %289 = arith.addf %286, %288 : vector<8x256xf32>
    %c17_i32_184 = arith.constant 17 : i32
    %290 = tpu.dynamic_rotate %289 by %c17_i32_184 dim 1 : vector<8x256xf32>, i32 -> vector<8x256xf32>
    %c9_185 = arith.constant 9 : index
    %c0_186 = arith.constant 0 : index
    %c0_187 = arith.constant 0 : index
    %291 = vector.load %arg6[%c9_185, %c0_186, %c0_187] : memref<36x8x256xf32, #tpu.memory_space<vmem>>, vector<1x8x256xf32>
    %292 = vector.shape_cast %291 : vector<1x8x256xf32> to vector<8x256xf32>
    %293 = arith.mulf %290, %292 : vector<8x256xf32>
    %c16_i32_188 = arith.constant 16 : i32
    %294 = tpu.dynamic_rotate %289 by %c16_i32_188 dim 1 : vector<8x256xf32>, i32 -> vector<8x256xf32>
    %c10_189 = arith.constant 10 : index
    %c0_190 = arith.constant 0 : index
    %c0_191 = arith.constant 0 : index
    %295 = vector.load %arg6[%c10_189, %c0_190, %c0_191] : memref<36x8x256xf32, #tpu.memory_space<vmem>>, vector<1x8x256xf32>
    %296 = vector.shape_cast %295 : vector<1x8x256xf32> to vector<8x256xf32>
    %297 = arith.mulf %294, %296 : vector<8x256xf32>
    %c15_i32_192 = arith.constant 15 : i32
    %298 = tpu.dynamic_rotate %289 by %c15_i32_192 dim 1 : vector<8x256xf32>, i32 -> vector<8x256xf32>
    %c11_193 = arith.constant 11 : index
    %c0_194 = arith.constant 0 : index
    %c0_195 = arith.constant 0 : index
    %299 = vector.load %arg6[%c11_193, %c0_194, %c0_195] : memref<36x8x256xf32, #tpu.memory_space<vmem>>, vector<1x8x256xf32>
    %300 = vector.shape_cast %299 : vector<1x8x256xf32> to vector<8x256xf32>
    %301 = arith.mulf %298, %300 : vector<8x256xf32>
    %c1_i32_196 = arith.constant 1 : i32
    %302 = tpu.dynamic_rotate %289 by %c1_i32_196 dim 1 : vector<8x256xf32>, i32 -> vector<8x256xf32>
    %c12_197 = arith.constant 12 : index
    %c0_198 = arith.constant 0 : index
    %c0_199 = arith.constant 0 : index
    %303 = vector.load %arg6[%c12_197, %c0_198, %c0_199] : memref<36x8x256xf32, #tpu.memory_space<vmem>>, vector<1x8x256xf32>
    %304 = vector.shape_cast %303 : vector<1x8x256xf32> to vector<8x256xf32>
    %305 = arith.mulf %302, %304 : vector<8x256xf32>
    %c13_200 = arith.constant 13 : index
    %c0_201 = arith.constant 0 : index
    %c0_202 = arith.constant 0 : index
    %306 = vector.load %arg6[%c13_200, %c0_201, %c0_202] : memref<36x8x256xf32, #tpu.memory_space<vmem>>, vector<1x8x256xf32>
    %307 = vector.shape_cast %306 : vector<1x8x256xf32> to vector<8x256xf32>
    %308 = arith.mulf %289, %307 : vector<8x256xf32>
    %c255_i32_203 = arith.constant 255 : i32
    %309 = tpu.dynamic_rotate %289 by %c255_i32_203 dim 1 : vector<8x256xf32>, i32 -> vector<8x256xf32>
    %c14_204 = arith.constant 14 : index
    %c0_205 = arith.constant 0 : index
    %c0_206 = arith.constant 0 : index
    %310 = vector.load %arg6[%c14_204, %c0_205, %c0_206] : memref<36x8x256xf32, #tpu.memory_space<vmem>>, vector<1x8x256xf32>
    %311 = vector.shape_cast %310 : vector<1x8x256xf32> to vector<8x256xf32>
    %312 = arith.mulf %309, %311 : vector<8x256xf32>
    %c241_i32_207 = arith.constant 241 : i32
    %313 = tpu.dynamic_rotate %289 by %c241_i32_207 dim 1 : vector<8x256xf32>, i32 -> vector<8x256xf32>
    %c15_208 = arith.constant 15 : index
    %c0_209 = arith.constant 0 : index
    %c0_210 = arith.constant 0 : index
    %314 = vector.load %arg6[%c15_208, %c0_209, %c0_210] : memref<36x8x256xf32, #tpu.memory_space<vmem>>, vector<1x8x256xf32>
    %315 = vector.shape_cast %314 : vector<1x8x256xf32> to vector<8x256xf32>
    %316 = arith.mulf %313, %315 : vector<8x256xf32>
    %c240_i32_211 = arith.constant 240 : i32
    %317 = tpu.dynamic_rotate %289 by %c240_i32_211 dim 1 : vector<8x256xf32>, i32 -> vector<8x256xf32>
    %c16_212 = arith.constant 16 : index
    %c0_213 = arith.constant 0 : index
    %c0_214 = arith.constant 0 : index
    %318 = vector.load %arg6[%c16_212, %c0_213, %c0_214] : memref<36x8x256xf32, #tpu.memory_space<vmem>>, vector<1x8x256xf32>
    %319 = vector.shape_cast %318 : vector<1x8x256xf32> to vector<8x256xf32>
    %320 = arith.mulf %317, %319 : vector<8x256xf32>
    %c239_i32_215 = arith.constant 239 : i32
    %321 = tpu.dynamic_rotate %289 by %c239_i32_215 dim 1 : vector<8x256xf32>, i32 -> vector<8x256xf32>
    %c17_216 = arith.constant 17 : index
    %c0_217 = arith.constant 0 : index
    %c0_218 = arith.constant 0 : index
    %322 = vector.load %arg6[%c17_216, %c0_217, %c0_218] : memref<36x8x256xf32, #tpu.memory_space<vmem>>, vector<1x8x256xf32>
    %323 = vector.shape_cast %322 : vector<1x8x256xf32> to vector<8x256xf32>
    %324 = arith.mulf %321, %323 : vector<8x256xf32>
    %325 = arith.addf %293, %297 : vector<8x256xf32>
    %326 = arith.addf %301, %305 : vector<8x256xf32>
    %327 = arith.addf %308, %312 : vector<8x256xf32>
    %328 = arith.addf %316, %320 : vector<8x256xf32>
    %329 = arith.addf %325, %326 : vector<8x256xf32>
    %330 = arith.addf %327, %328 : vector<8x256xf32>
    %331 = arith.addf %329, %330 : vector<8x256xf32>
    %332 = arith.addf %331, %324 : vector<8x256xf32>
    %c8_219 = arith.constant 8 : index
    %c0_220 = arith.constant 0 : index
    %333 = vector.load %arg15[%c8_219, %c0_220] : memref<40x256xf32, #tpu.memory_space<vmem>>, vector<8x256xf32>
    tpu.vector_store %arg15[%c8_219, %c0_220], %332 {strides = array<i32>} : memref<40x256xf32, #tpu.memory_space<vmem>>, vector<8x256xf32>,
    %334 = vector.extract_strided_slice %242 {offsets = [16, 0], sizes = [8, 256], strides = [1, 1]} : vector<32x256xf32> to vector<8x256xf32>
    %335 = arith.addf %332, %334 : vector<8x256xf32>
    %c17_i32_221 = arith.constant 17 : i32
    %336 = tpu.dynamic_rotate %335 by %c17_i32_221 dim 1 : vector<8x256xf32>, i32 -> vector<8x256xf32>
    %c18_222 = arith.constant 18 : index
    %c0_223 = arith.constant 0 : index
    %c0_224 = arith.constant 0 : index
    %337 = vector.load %arg6[%c18_222, %c0_223, %c0_224] : memref<36x8x256xf32, #tpu.memory_space<vmem>>, vector<1x8x256xf32>
    %338 = vector.shape_cast %337 : vector<1x8x256xf32> to vector<8x256xf32>
    %339 = arith.mulf %336, %338 : vector<8x256xf32>
    %c16_i32_225 = arith.constant 16 : i32
    %340 = tpu.dynamic_rotate %335 by %c16_i32_225 dim 1 : vector<8x256xf32>, i32 -> vector<8x256xf32>
    %c19_226 = arith.constant 19 : index
    %c0_227 = arith.constant 0 : index
    %c0_228 = arith.constant 0 : index
    %341 = vector.load %arg6[%c19_226, %c0_227, %c0_228] : memref<36x8x256xf32, #tpu.memory_space<vmem>>, vector<1x8x256xf32>
    %342 = vector.shape_cast %341 : vector<1x8x256xf32> to vector<8x256xf32>
    %343 = arith.mulf %340, %342 : vector<8x256xf32>
    %c15_i32_229 = arith.constant 15 : i32
    %344 = tpu.dynamic_rotate %335 by %c15_i32_229 dim 1 : vector<8x256xf32>, i32 -> vector<8x256xf32>
    %c20_230 = arith.constant 20 : index
    %c0_231 = arith.constant 0 : index
    %c0_232 = arith.constant 0 : index
    %345 = vector.load %arg6[%c20_230, %c0_231, %c0_232] : memref<36x8x256xf32, #tpu.memory_space<vmem>>, vector<1x8x256xf32>
    %346 = vector.shape_cast %345 : vector<1x8x256xf32> to vector<8x256xf32>
    %347 = arith.mulf %344, %346 : vector<8x256xf32>
    %c1_i32_233 = arith.constant 1 : i32
    %348 = tpu.dynamic_rotate %335 by %c1_i32_233 dim 1 : vector<8x256xf32>, i32 -> vector<8x256xf32>
    %c21_234 = arith.constant 21 : index
    %c0_235 = arith.constant 0 : index
    %c0_236 = arith.constant 0 : index
    %349 = vector.load %arg6[%c21_234, %c0_235, %c0_236] : memref<36x8x256xf32, #tpu.memory_space<vmem>>, vector<1x8x256xf32>
    %350 = vector.shape_cast %349 : vector<1x8x256xf32> to vector<8x256xf32>
    %351 = arith.mulf %348, %350 : vector<8x256xf32>
    %c22_237 = arith.constant 22 : index
    %c0_238 = arith.constant 0 : index
    %c0_239 = arith.constant 0 : index
    %352 = vector.load %arg6[%c22_237, %c0_238, %c0_239] : memref<36x8x256xf32, #tpu.memory_space<vmem>>, vector<1x8x256xf32>
    %353 = vector.shape_cast %352 : vector<1x8x256xf32> to vector<8x256xf32>
    %354 = arith.mulf %335, %353 : vector<8x256xf32>
    %c255_i32_240 = arith.constant 255 : i32
    %355 = tpu.dynamic_rotate %335 by %c255_i32_240 dim 1 : vector<8x256xf32>, i32 -> vector<8x256xf32>
    %c23_241 = arith.constant 23 : index
    %c0_242 = arith.constant 0 : index
    %c0_243 = arith.constant 0 : index
    %356 = vector.load %arg6[%c23_241, %c0_242, %c0_243] : memref<36x8x256xf32, #tpu.memory_space<vmem>>, vector<1x8x256xf32>
    %357 = vector.shape_cast %356 : vector<1x8x256xf32> to vector<8x256xf32>
    %358 = arith.mulf %355, %357 : vector<8x256xf32>
    %c241_i32_244 = arith.constant 241 : i32
    %359 = tpu.dynamic_rotate %335 by %c241_i32_244 dim 1 : vector<8x256xf32>, i32 -> vector<8x256xf32>
    %c24_245 = arith.constant 24 : index
    %c0_246 = arith.constant 0 : index
    %c0_247 = arith.constant 0 : index
    %360 = vector.load %arg6[%c24_245, %c0_246, %c0_247] : memref<36x8x256xf32, #tpu.memory_space<vmem>>, vector<1x8x256xf32>
    %361 = vector.shape_cast %360 : vector<1x8x256xf32> to vector<8x256xf32>
    %362 = arith.mulf %359, %361 : vector<8x256xf32>
    %c240_i32_248 = arith.constant 240 : i32
    %363 = tpu.dynamic_rotate %335 by %c240_i32_248 dim 1 : vector<8x256xf32>, i32 -> vector<8x256xf32>
    %c25_249 = arith.constant 25 : index
    %c0_250 = arith.constant 0 : index
    %c0_251 = arith.constant 0 : index
    %364 = vector.load %arg6[%c25_249, %c0_250, %c0_251] : memref<36x8x256xf32, #tpu.memory_space<vmem>>, vector<1x8x256xf32>
    %365 = vector.shape_cast %364 : vector<1x8x256xf32> to vector<8x256xf32>
    %366 = arith.mulf %363, %365 : vector<8x256xf32>
    %c239_i32_252 = arith.constant 239 : i32
    %367 = tpu.dynamic_rotate %335 by %c239_i32_252 dim 1 : vector<8x256xf32>, i32 -> vector<8x256xf32>
    %c26_253 = arith.constant 26 : index
    %c0_254 = arith.constant 0 : index
    %c0_255 = arith.constant 0 : index
    %368 = vector.load %arg6[%c26_253, %c0_254, %c0_255] : memref<36x8x256xf32, #tpu.memory_space<vmem>>, vector<1x8x256xf32>
    %369 = vector.shape_cast %368 : vector<1x8x256xf32> to vector<8x256xf32>
    %370 = arith.mulf %367, %369 : vector<8x256xf32>
    %371 = arith.addf %339, %343 : vector<8x256xf32>
    %372 = arith.addf %347, %351 : vector<8x256xf32>
    %373 = arith.addf %354, %358 : vector<8x256xf32>
    %374 = arith.addf %362, %366 : vector<8x256xf32>
    %375 = arith.addf %371, %372 : vector<8x256xf32>
    %376 = arith.addf %373, %374 : vector<8x256xf32>
    %377 = arith.addf %375, %376 : vector<8x256xf32>
    %378 = arith.addf %377, %370 : vector<8x256xf32>
    %c16_256 = arith.constant 16 : index
    %c0_257 = arith.constant 0 : index
    %379 = vector.load %arg15[%c16_256, %c0_257] : memref<40x256xf32, #tpu.memory_space<vmem>>, vector<8x256xf32>
    tpu.vector_store %arg15[%c16_256, %c0_257], %378 {strides = array<i32>} : memref<40x256xf32, #tpu.memory_space<vmem>>, vector<8x256xf32>,
    %380 = vector.extract_strided_slice %242 {offsets = [24, 0], sizes = [8, 256], strides = [1, 1]} : vector<32x256xf32> to vector<8x256xf32>
    %381 = arith.addf %378, %380 : vector<8x256xf32>
    %c17_i32_258 = arith.constant 17 : i32
    %382 = tpu.dynamic_rotate %381 by %c17_i32_258 dim 1 : vector<8x256xf32>, i32 -> vector<8x256xf32>
    %c27_259 = arith.constant 27 : index
    %c0_260 = arith.constant 0 : index
    %c0_261 = arith.constant 0 : index
    %383 = vector.load %arg6[%c27_259, %c0_260, %c0_261] : memref<36x8x256xf32, #tpu.memory_space<vmem>>, vector<1x8x256xf32>
    %384 = vector.shape_cast %383 : vector<1x8x256xf32> to vector<8x256xf32>
    %385 = arith.mulf %382, %384 : vector<8x256xf32>
    %c16_i32_262 = arith.constant 16 : i32
    %386 = tpu.dynamic_rotate %381 by %c16_i32_262 dim 1 : vector<8x256xf32>, i32 -> vector<8x256xf32>
    %c28_263 = arith.constant 28 : index
    %c0_264 = arith.constant 0 : index
    %c0_265 = arith.constant 0 : index
    %387 = vector.load %arg6[%c28_263, %c0_264, %c0_265] : memref<36x8x256xf32, #tpu.memory_space<vmem>>, vector<1x8x256xf32>
    %388 = vector.shape_cast %387 : vector<1x8x256xf32> to vector<8x256xf32>
    %389 = arith.mulf %386, %388 : vector<8x256xf32>
    %c15_i32_266 = arith.constant 15 : i32
    %390 = tpu.dynamic_rotate %381 by %c15_i32_266 dim 1 : vector<8x256xf32>, i32 -> vector<8x256xf32>
    %c29_267 = arith.constant 29 : index
    %c0_268 = arith.constant 0 : index
    %c0_269 = arith.constant 0 : index
    %391 = vector.load %arg6[%c29_267, %c0_268, %c0_269] : memref<36x8x256xf32, #tpu.memory_space<vmem>>, vector<1x8x256xf32>
    %392 = vector.shape_cast %391 : vector<1x8x256xf32> to vector<8x256xf32>
    %393 = arith.mulf %390, %392 : vector<8x256xf32>
    %c1_i32_270 = arith.constant 1 : i32
    %394 = tpu.dynamic_rotate %381 by %c1_i32_270 dim 1 : vector<8x256xf32>, i32 -> vector<8x256xf32>
    %c30_271 = arith.constant 30 : index
    %c0_272 = arith.constant 0 : index
    %c0_273 = arith.constant 0 : index
    %395 = vector.load %arg6[%c30_271, %c0_272, %c0_273] : memref<36x8x256xf32, #tpu.memory_space<vmem>>, vector<1x8x256xf32>
    %396 = vector.shape_cast %395 : vector<1x8x256xf32> to vector<8x256xf32>
    %397 = arith.mulf %394, %396 : vector<8x256xf32>
    %c31_274 = arith.constant 31 : index
    %c0_275 = arith.constant 0 : index
    %c0_276 = arith.constant 0 : index
    %398 = vector.load %arg6[%c31_274, %c0_275, %c0_276] : memref<36x8x256xf32, #tpu.memory_space<vmem>>, vector<1x8x256xf32>
    %399 = vector.shape_cast %398 : vector<1x8x256xf32> to vector<8x256xf32>
    %400 = arith.mulf %381, %399 : vector<8x256xf32>
    %c255_i32_277 = arith.constant 255 : i32
    %401 = tpu.dynamic_rotate %381 by %c255_i32_277 dim 1 : vector<8x256xf32>, i32 -> vector<8x256xf32>
    %c32_278 = arith.constant 32 : index
    %c0_279 = arith.constant 0 : index
    %c0_280 = arith.constant 0 : index
    %402 = vector.load %arg6[%c32_278, %c0_279, %c0_280] : memref<36x8x256xf32, #tpu.memory_space<vmem>>, vector<1x8x256xf32>
    %403 = vector.shape_cast %402 : vector<1x8x256xf32> to vector<8x256xf32>
    %404 = arith.mulf %401, %403 : vector<8x256xf32>
    %c241_i32_281 = arith.constant 241 : i32
    %405 = tpu.dynamic_rotate %381 by %c241_i32_281 dim 1 : vector<8x256xf32>, i32 -> vector<8x256xf32>
    %c33_282 = arith.constant 33 : index
    %c0_283 = arith.constant 0 : index
    %c0_284 = arith.constant 0 : index
    %406 = vector.load %arg6[%c33_282, %c0_283, %c0_284] : memref<36x8x256xf32, #tpu.memory_space<vmem>>, vector<1x8x256xf32>
    %407 = vector.shape_cast %406 : vector<1x8x256xf32> to vector<8x256xf32>
    %408 = arith.mulf %405, %407 : vector<8x256xf32>
    %c240_i32_285 = arith.constant 240 : i32
    %409 = tpu.dynamic_rotate %381 by %c240_i32_285 dim 1 : vector<8x256xf32>, i32 -> vector<8x256xf32>
    %c34_286 = arith.constant 34 : index
    %c0_287 = arith.constant 0 : index
    %c0_288 = arith.constant 0 : index
    %410 = vector.load %arg6[%c34_286, %c0_287, %c0_288] : memref<36x8x256xf32, #tpu.memory_space<vmem>>, vector<1x8x256xf32>
    %411 = vector.shape_cast %410 : vector<1x8x256xf32> to vector<8x256xf32>
    %412 = arith.mulf %409, %411 : vector<8x256xf32>
    %c239_i32_289 = arith.constant 239 : i32
    %413 = tpu.dynamic_rotate %381 by %c239_i32_289 dim 1 : vector<8x256xf32>, i32 -> vector<8x256xf32>
    %c35_290 = arith.constant 35 : index
    %c0_291 = arith.constant 0 : index
    %c0_292 = arith.constant 0 : index
    %414 = vector.load %arg6[%c35_290, %c0_291, %c0_292] : memref<36x8x256xf32, #tpu.memory_space<vmem>>, vector<1x8x256xf32>
    %415 = vector.shape_cast %414 : vector<1x8x256xf32> to vector<8x256xf32>
    %416 = arith.mulf %413, %415 : vector<8x256xf32>
    %417 = arith.addf %385, %389 : vector<8x256xf32>
    %418 = arith.addf %393, %397 : vector<8x256xf32>
    %419 = arith.addf %400, %404 : vector<8x256xf32>
    %420 = arith.addf %408, %412 : vector<8x256xf32>
    %421 = arith.addf %417, %418 : vector<8x256xf32>
    %422 = arith.addf %419, %420 : vector<8x256xf32>
    %423 = arith.addf %421, %422 : vector<8x256xf32>
    %424 = arith.addf %423, %416 : vector<8x256xf32>
    %c24_293 = arith.constant 24 : index
    %c0_294 = arith.constant 0 : index
    %425 = vector.load %arg15[%c24_293, %c0_294] : memref<40x256xf32, #tpu.memory_space<vmem>>, vector<8x256xf32>
    tpu.vector_store %arg15[%c24_293, %c0_294], %424 {strides = array<i32>} : memref<40x256xf32, #tpu.memory_space<vmem>>, vector<8x256xf32>,
    %c0_295 = arith.constant 0 : index
    %c0_296 = arith.constant 0 : index
    %426 = vector.load %arg7[%c0_295, %c0_296] : memref<24x32xf32, #tpu.memory_space<vmem>>, vector<24x32xf32>
    %c0_297 = arith.constant 0 : index
    %c0_298 = arith.constant 0 : index
    %427 = vector.load %arg15[%c0_297, %c0_298] : memref<40x256xf32, #tpu.memory_space<vmem>>, vector<32x256xf32>
    %cst_299 = arith.constant dense<0.000000e+00> : vector<24x256xf32>
    %428 = tpu.matmul %426, %427, %cst_299 {dimension_numbers = #tpu.dot_dimension_numbers<[1], [0], [0], [1], [0, 0, 1, 1], [], []>} : vector<24x32xf32>, vector<32x256xf32>, vector<24x256xf32> -> vector<24x256xf32>
    %cst_300 = arith.constant 0.000000e+00 : f32
    %429 = vector.broadcast %cst_300 : f32 to vector<24x256xf32>
    %430 = arith.maximumf %428, %429 : vector<24x256xf32>
    %c0_301 = arith.constant 0 : index
    %c0_302 = arith.constant 0 : index
    %431 = vector.load %arg8[%c0_301, %c0_302] : memref<40x24xf32, #tpu.memory_space<vmem>>, vector<40x24xf32>
    %cst_303 = arith.constant dense<0.000000e+00> : vector<40x256xf32>
    %432 = tpu.matmul %431, %430, %cst_303 {dimension_numbers = #tpu.dot_dimension_numbers<[1], [0], [0], [1], [0, 0, 1, 1], [], []>} : vector<40x24xf32>, vector<24x256xf32>, vector<40x256xf32> -> vector<40x256xf32>
    %cst_304 = arith.constant 0.000000e+00 : f32
    %433 = vector.broadcast %cst_304 : f32 to vector<40x256xf32>
    %434 = arith.maximumf %432, %433 : vector<40x256xf32>
    %435 = vector.extract_strided_slice %434 {offsets = [0, 0], sizes = [8, 256], strides = [1, 1]} : vector<40x256xf32> to vector<8x256xf32>
    %c17_i32_305 = arith.constant 17 : i32
    %436 = tpu.dynamic_rotate %435 by %c17_i32_305 dim 1 : vector<8x256xf32>, i32 -> vector<8x256xf32>
    %c0_306 = arith.constant 0 : index
    %c0_307 = arith.constant 0 : index
    %c0_308 = arith.constant 0 : index
    %437 = vector.load %arg9[%c0_306, %c0_307, %c0_308] : memref<45x8x256xf32, #tpu.memory_space<vmem>>, vector<1x8x256xf32>
    %438 = vector.shape_cast %437 : vector<1x8x256xf32> to vector<8x256xf32>
    %439 = arith.mulf %436, %438 : vector<8x256xf32>
    %c16_i32_309 = arith.constant 16 : i32
    %440 = tpu.dynamic_rotate %435 by %c16_i32_309 dim 1 : vector<8x256xf32>, i32 -> vector<8x256xf32>
    %c1_310 = arith.constant 1 : index
    %c0_311 = arith.constant 0 : index
    %c0_312 = arith.constant 0 : index
    %441 = vector.load %arg9[%c1_310, %c0_311, %c0_312] : memref<45x8x256xf32, #tpu.memory_space<vmem>>, vector<1x8x256xf32>
    %442 = vector.shape_cast %441 : vector<1x8x256xf32> to vector<8x256xf32>
    %443 = arith.mulf %440, %442 : vector<8x256xf32>
    %c15_i32_313 = arith.constant 15 : i32
    %444 = tpu.dynamic_rotate %435 by %c15_i32_313 dim 1 : vector<8x256xf32>, i32 -> vector<8x256xf32>
    %c2_314 = arith.constant 2 : index
    %c0_315 = arith.constant 0 : index
    %c0_316 = arith.constant 0 : index
    %445 = vector.load %arg9[%c2_314, %c0_315, %c0_316] : memref<45x8x256xf32, #tpu.memory_space<vmem>>, vector<1x8x256xf32>
    %446 = vector.shape_cast %445 : vector<1x8x256xf32> to vector<8x256xf32>
    %447 = arith.mulf %444, %446 : vector<8x256xf32>
    %c1_i32_317 = arith.constant 1 : i32
    %448 = tpu.dynamic_rotate %435 by %c1_i32_317 dim 1 : vector<8x256xf32>, i32 -> vector<8x256xf32>
    %c3_318 = arith.constant 3 : index
    %c0_319 = arith.constant 0 : index
    %c0_320 = arith.constant 0 : index
    %449 = vector.load %arg9[%c3_318, %c0_319, %c0_320] : memref<45x8x256xf32, #tpu.memory_space<vmem>>, vector<1x8x256xf32>
    %450 = vector.shape_cast %449 : vector<1x8x256xf32> to vector<8x256xf32>
    %451 = arith.mulf %448, %450 : vector<8x256xf32>
    %c4_321 = arith.constant 4 : index
    %c0_322 = arith.constant 0 : index
    %c0_323 = arith.constant 0 : index
    %452 = vector.load %arg9[%c4_321, %c0_322, %c0_323] : memref<45x8x256xf32, #tpu.memory_space<vmem>>, vector<1x8x256xf32>
    %453 = vector.shape_cast %452 : vector<1x8x256xf32> to vector<8x256xf32>
    %454 = arith.mulf %435, %453 : vector<8x256xf32>
    %c255_i32_324 = arith.constant 255 : i32
    %455 = tpu.dynamic_rotate %435 by %c255_i32_324 dim 1 : vector<8x256xf32>, i32 -> vector<8x256xf32>
    %c5_325 = arith.constant 5 : index
    %c0_326 = arith.constant 0 : index
    %c0_327 = arith.constant 0 : index
    %456 = vector.load %arg9[%c5_325, %c0_326, %c0_327] : memref<45x8x256xf32, #tpu.memory_space<vmem>>, vector<1x8x256xf32>
    %457 = vector.shape_cast %456 : vector<1x8x256xf32> to vector<8x256xf32>
    %458 = arith.mulf %455, %457 : vector<8x256xf32>
    %c241_i32_328 = arith.constant 241 : i32
    %459 = tpu.dynamic_rotate %435 by %c241_i32_328 dim 1 : vector<8x256xf32>, i32 -> vector<8x256xf32>
    %c6_329 = arith.constant 6 : index
    %c0_330 = arith.constant 0 : index
    %c0_331 = arith.constant 0 : index
    %460 = vector.load %arg9[%c6_329, %c0_330, %c0_331] : memref<45x8x256xf32, #tpu.memory_space<vmem>>, vector<1x8x256xf32>
    %461 = vector.shape_cast %460 : vector<1x8x256xf32> to vector<8x256xf32>
    %462 = arith.mulf %459, %461 : vector<8x256xf32>
    %c240_i32_332 = arith.constant 240 : i32
    %463 = tpu.dynamic_rotate %435 by %c240_i32_332 dim 1 : vector<8x256xf32>, i32 -> vector<8x256xf32>
    %c7_333 = arith.constant 7 : index
    %c0_334 = arith.constant 0 : index
    %c0_335 = arith.constant 0 : index
    %464 = vector.load %arg9[%c7_333, %c0_334, %c0_335] : memref<45x8x256xf32, #tpu.memory_space<vmem>>, vector<1x8x256xf32>
    %465 = vector.shape_cast %464 : vector<1x8x256xf32> to vector<8x256xf32>
    %466 = arith.mulf %463, %465 : vector<8x256xf32>
    %c239_i32_336 = arith.constant 239 : i32
    %467 = tpu.dynamic_rotate %435 by %c239_i32_336 dim 1 : vector<8x256xf32>, i32 -> vector<8x256xf32>
    %c8_337 = arith.constant 8 : index
    %c0_338 = arith.constant 0 : index
    %c0_339 = arith.constant 0 : index
    %468 = vector.load %arg9[%c8_337, %c0_338, %c0_339] : memref<45x8x256xf32, #tpu.memory_space<vmem>>, vector<1x8x256xf32>
    %469 = vector.shape_cast %468 : vector<1x8x256xf32> to vector<8x256xf32>
    %470 = arith.mulf %467, %469 : vector<8x256xf32>
    %471 = arith.addf %439, %443 : vector<8x256xf32>
    %472 = arith.addf %447, %451 : vector<8x256xf32>
    %473 = arith.addf %454, %458 : vector<8x256xf32>
    %474 = arith.addf %462, %466 : vector<8x256xf32>
    %475 = arith.addf %471, %472 : vector<8x256xf32>
    %476 = arith.addf %473, %474 : vector<8x256xf32>
    %477 = arith.addf %475, %476 : vector<8x256xf32>
    %478 = arith.addf %477, %470 : vector<8x256xf32>
    %c0_340 = arith.constant 0 : index
    %c0_341 = arith.constant 0 : index
    %479 = vector.load %arg15[%c0_340, %c0_341] : memref<40x256xf32, #tpu.memory_space<vmem>>, vector<8x256xf32>
    tpu.vector_store %arg15[%c0_340, %c0_341], %478 {strides = array<i32>} : memref<40x256xf32, #tpu.memory_space<vmem>>, vector<8x256xf32>,
    %480 = vector.extract_strided_slice %434 {offsets = [8, 0], sizes = [8, 256], strides = [1, 1]} : vector<40x256xf32> to vector<8x256xf32>
    %481 = arith.addf %478, %480 : vector<8x256xf32>
    %c17_i32_342 = arith.constant 17 : i32
    %482 = tpu.dynamic_rotate %481 by %c17_i32_342 dim 1 : vector<8x256xf32>, i32 -> vector<8x256xf32>
    %c9_343 = arith.constant 9 : index
    %c0_344 = arith.constant 0 : index
    %c0_345 = arith.constant 0 : index
    %483 = vector.load %arg9[%c9_343, %c0_344, %c0_345] : memref<45x8x256xf32, #tpu.memory_space<vmem>>, vector<1x8x256xf32>
    %484 = vector.shape_cast %483 : vector<1x8x256xf32> to vector<8x256xf32>
    %485 = arith.mulf %482, %484 : vector<8x256xf32>
    %c16_i32_346 = arith.constant 16 : i32
    %486 = tpu.dynamic_rotate %481 by %c16_i32_346 dim 1 : vector<8x256xf32>, i32 -> vector<8x256xf32>
    %c10_347 = arith.constant 10 : index
    %c0_348 = arith.constant 0 : index
    %c0_349 = arith.constant 0 : index
    %487 = vector.load %arg9[%c10_347, %c0_348, %c0_349] : memref<45x8x256xf32, #tpu.memory_space<vmem>>, vector<1x8x256xf32>
    %488 = vector.shape_cast %487 : vector<1x8x256xf32> to vector<8x256xf32>
    %489 = arith.mulf %486, %488 : vector<8x256xf32>
    %c15_i32_350 = arith.constant 15 : i32
    %490 = tpu.dynamic_rotate %481 by %c15_i32_350 dim 1 : vector<8x256xf32>, i32 -> vector<8x256xf32>
    %c11_351 = arith.constant 11 : index
    %c0_352 = arith.constant 0 : index
    %c0_353 = arith.constant 0 : index
    %491 = vector.load %arg9[%c11_351, %c0_352, %c0_353] : memref<45x8x256xf32, #tpu.memory_space<vmem>>, vector<1x8x256xf32>
    %492 = vector.shape_cast %491 : vector<1x8x256xf32> to vector<8x256xf32>
    %493 = arith.mulf %490, %492 : vector<8x256xf32>
    %c1_i32_354 = arith.constant 1 : i32
    %494 = tpu.dynamic_rotate %481 by %c1_i32_354 dim 1 : vector<8x256xf32>, i32 -> vector<8x256xf32>
    %c12_355 = arith.constant 12 : index
    %c0_356 = arith.constant 0 : index
    %c0_357 = arith.constant 0 : index
    %495 = vector.load %arg9[%c12_355, %c0_356, %c0_357] : memref<45x8x256xf32, #tpu.memory_space<vmem>>, vector<1x8x256xf32>
    %496 = vector.shape_cast %495 : vector<1x8x256xf32> to vector<8x256xf32>
    %497 = arith.mulf %494, %496 : vector<8x256xf32>
    %c13_358 = arith.constant 13 : index
    %c0_359 = arith.constant 0 : index
    %c0_360 = arith.constant 0 : index
    %498 = vector.load %arg9[%c13_358, %c0_359, %c0_360] : memref<45x8x256xf32, #tpu.memory_space<vmem>>, vector<1x8x256xf32>
    %499 = vector.shape_cast %498 : vector<1x8x256xf32> to vector<8x256xf32>
    %500 = arith.mulf %481, %499 : vector<8x256xf32>
    %c255_i32_361 = arith.constant 255 : i32
    %501 = tpu.dynamic_rotate %481 by %c255_i32_361 dim 1 : vector<8x256xf32>, i32 -> vector<8x256xf32>
    %c14_362 = arith.constant 14 : index
    %c0_363 = arith.constant 0 : index
    %c0_364 = arith.constant 0 : index
    %502 = vector.load %arg9[%c14_362, %c0_363, %c0_364] : memref<45x8x256xf32, #tpu.memory_space<vmem>>, vector<1x8x256xf32>
    %503 = vector.shape_cast %502 : vector<1x8x256xf32> to vector<8x256xf32>
    %504 = arith.mulf %501, %503 : vector<8x256xf32>
    %c241_i32_365 = arith.constant 241 : i32
    %505 = tpu.dynamic_rotate %481 by %c241_i32_365 dim 1 : vector<8x256xf32>, i32 -> vector<8x256xf32>
    %c15_366 = arith.constant 15 : index
    %c0_367 = arith.constant 0 : index
    %c0_368 = arith.constant 0 : index
    %506 = vector.load %arg9[%c15_366, %c0_367, %c0_368] : memref<45x8x256xf32, #tpu.memory_space<vmem>>, vector<1x8x256xf32>
    %507 = vector.shape_cast %506 : vector<1x8x256xf32> to vector<8x256xf32>
    %508 = arith.mulf %505, %507 : vector<8x256xf32>
    %c240_i32_369 = arith.constant 240 : i32
    %509 = tpu.dynamic_rotate %481 by %c240_i32_369 dim 1 : vector<8x256xf32>, i32 -> vector<8x256xf32>
    %c16_370 = arith.constant 16 : index
    %c0_371 = arith.constant 0 : index
    %c0_372 = arith.constant 0 : index
    %510 = vector.load %arg9[%c16_370, %c0_371, %c0_372] : memref<45x8x256xf32, #tpu.memory_space<vmem>>, vector<1x8x256xf32>
    %511 = vector.shape_cast %510 : vector<1x8x256xf32> to vector<8x256xf32>
    %512 = arith.mulf %509, %511 : vector<8x256xf32>
    %c239_i32_373 = arith.constant 239 : i32
    %513 = tpu.dynamic_rotate %481 by %c239_i32_373 dim 1 : vector<8x256xf32>, i32 -> vector<8x256xf32>
    %c17_374 = arith.constant 17 : index
    %c0_375 = arith.constant 0 : index
    %c0_376 = arith.constant 0 : index
    %514 = vector.load %arg9[%c17_374, %c0_375, %c0_376] : memref<45x8x256xf32, #tpu.memory_space<vmem>>, vector<1x8x256xf32>
    %515 = vector.shape_cast %514 : vector<1x8x256xf32> to vector<8x256xf32>
    %516 = arith.mulf %513, %515 : vector<8x256xf32>
    %517 = arith.addf %485, %489 : vector<8x256xf32>
    %518 = arith.addf %493, %497 : vector<8x256xf32>
    %519 = arith.addf %500, %504 : vector<8x256xf32>
    %520 = arith.addf %508, %512 : vector<8x256xf32>
    %521 = arith.addf %517, %518 : vector<8x256xf32>
    %522 = arith.addf %519, %520 : vector<8x256xf32>
    %523 = arith.addf %521, %522 : vector<8x256xf32>
    %524 = arith.addf %523, %516 : vector<8x256xf32>
    %c8_377 = arith.constant 8 : index
    %c0_378 = arith.constant 0 : index
    %525 = vector.load %arg15[%c8_377, %c0_378] : memref<40x256xf32, #tpu.memory_space<vmem>>, vector<8x256xf32>
    tpu.vector_store %arg15[%c8_377, %c0_378], %524 {strides = array<i32>} : memref<40x256xf32, #tpu.memory_space<vmem>>, vector<8x256xf32>,
    %526 = vector.extract_strided_slice %434 {offsets = [16, 0], sizes = [8, 256], strides = [1, 1]} : vector<40x256xf32> to vector<8x256xf32>
    %527 = arith.addf %524, %526 : vector<8x256xf32>
    %c17_i32_379 = arith.constant 17 : i32
    %528 = tpu.dynamic_rotate %527 by %c17_i32_379 dim 1 : vector<8x256xf32>, i32 -> vector<8x256xf32>
    %c18_380 = arith.constant 18 : index
    %c0_381 = arith.constant 0 : index
    %c0_382 = arith.constant 0 : index
    %529 = vector.load %arg9[%c18_380, %c0_381, %c0_382] : memref<45x8x256xf32, #tpu.memory_space<vmem>>, vector<1x8x256xf32>
    %530 = vector.shape_cast %529 : vector<1x8x256xf32> to vector<8x256xf32>
    %531 = arith.mulf %528, %530 : vector<8x256xf32>
    %c16_i32_383 = arith.constant 16 : i32
    %532 = tpu.dynamic_rotate %527 by %c16_i32_383 dim 1 : vector<8x256xf32>, i32 -> vector<8x256xf32>
    %c19_384 = arith.constant 19 : index
    %c0_385 = arith.constant 0 : index
    %c0_386 = arith.constant 0 : index
    %533 = vector.load %arg9[%c19_384, %c0_385, %c0_386] : memref<45x8x256xf32, #tpu.memory_space<vmem>>, vector<1x8x256xf32>
    %534 = vector.shape_cast %533 : vector<1x8x256xf32> to vector<8x256xf32>
    %535 = arith.mulf %532, %534 : vector<8x256xf32>
    %c15_i32_387 = arith.constant 15 : i32
    %536 = tpu.dynamic_rotate %527 by %c15_i32_387 dim 1 : vector<8x256xf32>, i32 -> vector<8x256xf32>
    %c20_388 = arith.constant 20 : index
    %c0_389 = arith.constant 0 : index
    %c0_390 = arith.constant 0 : index
    %537 = vector.load %arg9[%c20_388, %c0_389, %c0_390] : memref<45x8x256xf32, #tpu.memory_space<vmem>>, vector<1x8x256xf32>
    %538 = vector.shape_cast %537 : vector<1x8x256xf32> to vector<8x256xf32>
    %539 = arith.mulf %536, %538 : vector<8x256xf32>
    %c1_i32_391 = arith.constant 1 : i32
    %540 = tpu.dynamic_rotate %527 by %c1_i32_391 dim 1 : vector<8x256xf32>, i32 -> vector<8x256xf32>
    %c21_392 = arith.constant 21 : index
    %c0_393 = arith.constant 0 : index
    %c0_394 = arith.constant 0 : index
    %541 = vector.load %arg9[%c21_392, %c0_393, %c0_394] : memref<45x8x256xf32, #tpu.memory_space<vmem>>, vector<1x8x256xf32>
    %542 = vector.shape_cast %541 : vector<1x8x256xf32> to vector<8x256xf32>
    %543 = arith.mulf %540, %542 : vector<8x256xf32>
    %c22_395 = arith.constant 22 : index
    %c0_396 = arith.constant 0 : index
    %c0_397 = arith.constant 0 : index
    %544 = vector.load %arg9[%c22_395, %c0_396, %c0_397] : memref<45x8x256xf32, #tpu.memory_space<vmem>>, vector<1x8x256xf32>
    %545 = vector.shape_cast %544 : vector<1x8x256xf32> to vector<8x256xf32>
    %546 = arith.mulf %527, %545 : vector<8x256xf32>
    %c255_i32_398 = arith.constant 255 : i32
    %547 = tpu.dynamic_rotate %527 by %c255_i32_398 dim 1 : vector<8x256xf32>, i32 -> vector<8x256xf32>
    %c23_399 = arith.constant 23 : index
    %c0_400 = arith.constant 0 : index
    %c0_401 = arith.constant 0 : index
    %548 = vector.load %arg9[%c23_399, %c0_400, %c0_401] : memref<45x8x256xf32, #tpu.memory_space<vmem>>, vector<1x8x256xf32>
    %549 = vector.shape_cast %548 : vector<1x8x256xf32> to vector<8x256xf32>
    %550 = arith.mulf %547, %549 : vector<8x256xf32>
    %c241_i32_402 = arith.constant 241 : i32
    %551 = tpu.dynamic_rotate %527 by %c241_i32_402 dim 1 : vector<8x256xf32>, i32 -> vector<8x256xf32>
    %c24_403 = arith.constant 24 : index
    %c0_404 = arith.constant 0 : index
    %c0_405 = arith.constant 0 : index
    %552 = vector.load %arg9[%c24_403, %c0_404, %c0_405] : memref<45x8x256xf32, #tpu.memory_space<vmem>>, vector<1x8x256xf32>
    %553 = vector.shape_cast %552 : vector<1x8x256xf32> to vector<8x256xf32>
    %554 = arith.mulf %551, %553 : vector<8x256xf32>
    %c240_i32_406 = arith.constant 240 : i32
    %555 = tpu.dynamic_rotate %527 by %c240_i32_406 dim 1 : vector<8x256xf32>, i32 -> vector<8x256xf32>
    %c25_407 = arith.constant 25 : index
    %c0_408 = arith.constant 0 : index
    %c0_409 = arith.constant 0 : index
    %556 = vector.load %arg9[%c25_407, %c0_408, %c0_409] : memref<45x8x256xf32, #tpu.memory_space<vmem>>, vector<1x8x256xf32>
    %557 = vector.shape_cast %556 : vector<1x8x256xf32> to vector<8x256xf32>
    %558 = arith.mulf %555, %557 : vector<8x256xf32>
    %c239_i32_410 = arith.constant 239 : i32
    %559 = tpu.dynamic_rotate %527 by %c239_i32_410 dim 1 : vector<8x256xf32>, i32 -> vector<8x256xf32>
    %c26_411 = arith.constant 26 : index
    %c0_412 = arith.constant 0 : index
    %c0_413 = arith.constant 0 : index
    %560 = vector.load %arg9[%c26_411, %c0_412, %c0_413] : memref<45x8x256xf32, #tpu.memory_space<vmem>>, vector<1x8x256xf32>
    %561 = vector.shape_cast %560 : vector<1x8x256xf32> to vector<8x256xf32>
    %562 = arith.mulf %559, %561 : vector<8x256xf32>
    %563 = arith.addf %531, %535 : vector<8x256xf32>
    %564 = arith.addf %539, %543 : vector<8x256xf32>
    %565 = arith.addf %546, %550 : vector<8x256xf32>
    %566 = arith.addf %554, %558 : vector<8x256xf32>
    %567 = arith.addf %563, %564 : vector<8x256xf32>
    %568 = arith.addf %565, %566 : vector<8x256xf32>
    %569 = arith.addf %567, %568 : vector<8x256xf32>
    %570 = arith.addf %569, %562 : vector<8x256xf32>
    %c16_414 = arith.constant 16 : index
    %c0_415 = arith.constant 0 : index
    %571 = vector.load %arg15[%c16_414, %c0_415] : memref<40x256xf32, #tpu.memory_space<vmem>>, vector<8x256xf32>
    tpu.vector_store %arg15[%c16_414, %c0_415], %570 {strides = array<i32>} : memref<40x256xf32, #tpu.memory_space<vmem>>, vector<8x256xf32>,
    %572 = vector.extract_strided_slice %434 {offsets = [24, 0], sizes = [8, 256], strides = [1, 1]} : vector<40x256xf32> to vector<8x256xf32>
    %573 = arith.addf %570, %572 : vector<8x256xf32>
    %c17_i32_416 = arith.constant 17 : i32
    %574 = tpu.dynamic_rotate %573 by %c17_i32_416 dim 1 : vector<8x256xf32>, i32 -> vector<8x256xf32>
    %c27_417 = arith.constant 27 : index
    %c0_418 = arith.constant 0 : index
    %c0_419 = arith.constant 0 : index
    %575 = vector.load %arg9[%c27_417, %c0_418, %c0_419] : memref<45x8x256xf32, #tpu.memory_space<vmem>>, vector<1x8x256xf32>
    %576 = vector.shape_cast %575 : vector<1x8x256xf32> to vector<8x256xf32>
    %577 = arith.mulf %574, %576 : vector<8x256xf32>
    %c16_i32_420 = arith.constant 16 : i32
    %578 = tpu.dynamic_rotate %573 by %c16_i32_420 dim 1 : vector<8x256xf32>, i32 -> vector<8x256xf32>
    %c28_421 = arith.constant 28 : index
    %c0_422 = arith.constant 0 : index
    %c0_423 = arith.constant 0 : index
    %579 = vector.load %arg9[%c28_421, %c0_422, %c0_423] : memref<45x8x256xf32, #tpu.memory_space<vmem>>, vector<1x8x256xf32>
    %580 = vector.shape_cast %579 : vector<1x8x256xf32> to vector<8x256xf32>
    %581 = arith.mulf %578, %580 : vector<8x256xf32>
    %c15_i32_424 = arith.constant 15 : i32
    %582 = tpu.dynamic_rotate %573 by %c15_i32_424 dim 1 : vector<8x256xf32>, i32 -> vector<8x256xf32>
    %c29_425 = arith.constant 29 : index
    %c0_426 = arith.constant 0 : index
    %c0_427 = arith.constant 0 : index
    %583 = vector.load %arg9[%c29_425, %c0_426, %c0_427] : memref<45x8x256xf32, #tpu.memory_space<vmem>>, vector<1x8x256xf32>
    %584 = vector.shape_cast %583 : vector<1x8x256xf32> to vector<8x256xf32>
    %585 = arith.mulf %582, %584 : vector<8x256xf32>
    %c1_i32_428 = arith.constant 1 : i32
    %586 = tpu.dynamic_rotate %573 by %c1_i32_428 dim 1 : vector<8x256xf32>, i32 -> vector<8x256xf32>
    %c30_429 = arith.constant 30 : index
    %c0_430 = arith.constant 0 : index
    %c0_431 = arith.constant 0 : index
    %587 = vector.load %arg9[%c30_429, %c0_430, %c0_431] : memref<45x8x256xf32, #tpu.memory_space<vmem>>, vector<1x8x256xf32>
    %588 = vector.shape_cast %587 : vector<1x8x256xf32> to vector<8x256xf32>
    %589 = arith.mulf %586, %588 : vector<8x256xf32>
    %c31_432 = arith.constant 31 : index
    %c0_433 = arith.constant 0 : index
    %c0_434 = arith.constant 0 : index
    %590 = vector.load %arg9[%c31_432, %c0_433, %c0_434] : memref<45x8x256xf32, #tpu.memory_space<vmem>>, vector<1x8x256xf32>
    %591 = vector.shape_cast %590 : vector<1x8x256xf32> to vector<8x256xf32>
    %592 = arith.mulf %573, %591 : vector<8x256xf32>
    %c255_i32_435 = arith.constant 255 : i32
    %593 = tpu.dynamic_rotate %573 by %c255_i32_435 dim 1 : vector<8x256xf32>, i32 -> vector<8x256xf32>
    %c32_436 = arith.constant 32 : index
    %c0_437 = arith.constant 0 : index
    %c0_438 = arith.constant 0 : index
    %594 = vector.load %arg9[%c32_436, %c0_437, %c0_438] : memref<45x8x256xf32, #tpu.memory_space<vmem>>, vector<1x8x256xf32>
    %595 = vector.shape_cast %594 : vector<1x8x256xf32> to vector<8x256xf32>
    %596 = arith.mulf %593, %595 : vector<8x256xf32>
    %c241_i32_439 = arith.constant 241 : i32
    %597 = tpu.dynamic_rotate %573 by %c241_i32_439 dim 1 : vector<8x256xf32>, i32 -> vector<8x256xf32>
    %c33_440 = arith.constant 33 : index
    %c0_441 = arith.constant 0 : index
    %c0_442 = arith.constant 0 : index
    %598 = vector.load %arg9[%c33_440, %c0_441, %c0_442] : memref<45x8x256xf32, #tpu.memory_space<vmem>>, vector<1x8x256xf32>
    %599 = vector.shape_cast %598 : vector<1x8x256xf32> to vector<8x256xf32>
    %600 = arith.mulf %597, %599 : vector<8x256xf32>
    %c240_i32_443 = arith.constant 240 : i32
    %601 = tpu.dynamic_rotate %573 by %c240_i32_443 dim 1 : vector<8x256xf32>, i32 -> vector<8x256xf32>
    %c34_444 = arith.constant 34 : index
    %c0_445 = arith.constant 0 : index
    %c0_446 = arith.constant 0 : index
    %602 = vector.load %arg9[%c34_444, %c0_445, %c0_446] : memref<45x8x256xf32, #tpu.memory_space<vmem>>, vector<1x8x256xf32>
    %603 = vector.shape_cast %602 : vector<1x8x256xf32> to vector<8x256xf32>
    %604 = arith.mulf %601, %603 : vector<8x256xf32>
    %c239_i32_447 = arith.constant 239 : i32
    %605 = tpu.dynamic_rotate %573 by %c239_i32_447 dim 1 : vector<8x256xf32>, i32 -> vector<8x256xf32>
    %c35_448 = arith.constant 35 : index
    %c0_449 = arith.constant 0 : index
    %c0_450 = arith.constant 0 : index
    %606 = vector.load %arg9[%c35_448, %c0_449, %c0_450] : memref<45x8x256xf32, #tpu.memory_space<vmem>>, vector<1x8x256xf32>
    %607 = vector.shape_cast %606 : vector<1x8x256xf32> to vector<8x256xf32>
    %608 = arith.mulf %605, %607 : vector<8x256xf32>
    %609 = arith.addf %577, %581 : vector<8x256xf32>
    %610 = arith.addf %585, %589 : vector<8x256xf32>
    %611 = arith.addf %592, %596 : vector<8x256xf32>
    %612 = arith.addf %600, %604 : vector<8x256xf32>
    %613 = arith.addf %609, %610 : vector<8x256xf32>
    %614 = arith.addf %611, %612 : vector<8x256xf32>
    %615 = arith.addf %613, %614 : vector<8x256xf32>
    %616 = arith.addf %615, %608 : vector<8x256xf32>
    %c24_451 = arith.constant 24 : index
    %c0_452 = arith.constant 0 : index
    %617 = vector.load %arg15[%c24_451, %c0_452] : memref<40x256xf32, #tpu.memory_space<vmem>>, vector<8x256xf32>
    tpu.vector_store %arg15[%c24_451, %c0_452], %616 {strides = array<i32>} : memref<40x256xf32, #tpu.memory_space<vmem>>, vector<8x256xf32>,
    %618 = vector.extract_strided_slice %434 {offsets = [32, 0], sizes = [8, 256], strides = [1, 1]} : vector<40x256xf32> to vector<8x256xf32>
    %619 = arith.addf %616, %618 : vector<8x256xf32>
    %c17_i32_453 = arith.constant 17 : i32
    %620 = tpu.dynamic_rotate %619 by %c17_i32_453 dim 1 : vector<8x256xf32>, i32 -> vector<8x256xf32>
    %c36_454 = arith.constant 36 : index
    %c0_455 = arith.constant 0 : index
    %c0_456 = arith.constant 0 : index
    %621 = vector.load %arg9[%c36_454, %c0_455, %c0_456] : memref<45x8x256xf32, #tpu.memory_space<vmem>>, vector<1x8x256xf32>
    %622 = vector.shape_cast %621 : vector<1x8x256xf32> to vector<8x256xf32>
    %623 = arith.mulf %620, %622 : vector<8x256xf32>
    %c16_i32_457 = arith.constant 16 : i32
    %624 = tpu.dynamic_rotate %619 by %c16_i32_457 dim 1 : vector<8x256xf32>, i32 -> vector<8x256xf32>
    %c37_458 = arith.constant 37 : index
    %c0_459 = arith.constant 0 : index
    %c0_460 = arith.constant 0 : index
    %625 = vector.load %arg9[%c37_458, %c0_459, %c0_460] : memref<45x8x256xf32, #tpu.memory_space<vmem>>, vector<1x8x256xf32>
    %626 = vector.shape_cast %625 : vector<1x8x256xf32> to vector<8x256xf32>
    %627 = arith.mulf %624, %626 : vector<8x256xf32>
    %c15_i32_461 = arith.constant 15 : i32
    %628 = tpu.dynamic_rotate %619 by %c15_i32_461 dim 1 : vector<8x256xf32>, i32 -> vector<8x256xf32>
    %c38_462 = arith.constant 38 : index
    %c0_463 = arith.constant 0 : index
    %c0_464 = arith.constant 0 : index
    %629 = vector.load %arg9[%c38_462, %c0_463, %c0_464] : memref<45x8x256xf32, #tpu.memory_space<vmem>>, vector<1x8x256xf32>
    %630 = vector.shape_cast %629 : vector<1x8x256xf32> to vector<8x256xf32>
    %631 = arith.mulf %628, %630 : vector<8x256xf32>
    %c1_i32_465 = arith.constant 1 : i32
    %632 = tpu.dynamic_rotate %619 by %c1_i32_465 dim 1 : vector<8x256xf32>, i32 -> vector<8x256xf32>
    %c39_466 = arith.constant 39 : index
    %c0_467 = arith.constant 0 : index
    %c0_468 = arith.constant 0 : index
    %633 = vector.load %arg9[%c39_466, %c0_467, %c0_468] : memref<45x8x256xf32, #tpu.memory_space<vmem>>, vector<1x8x256xf32>
    %634 = vector.shape_cast %633 : vector<1x8x256xf32> to vector<8x256xf32>
    %635 = arith.mulf %632, %634 : vector<8x256xf32>
    %c40_469 = arith.constant 40 : index
    %c0_470 = arith.constant 0 : index
    %c0_471 = arith.constant 0 : index
    %636 = vector.load %arg9[%c40_469, %c0_470, %c0_471] : memref<45x8x256xf32, #tpu.memory_space<vmem>>, vector<1x8x256xf32>
    %637 = vector.shape_cast %636 : vector<1x8x256xf32> to vector<8x256xf32>
    %638 = arith.mulf %619, %637 : vector<8x256xf32>
    %c255_i32_472 = arith.constant 255 : i32
    %639 = tpu.dynamic_rotate %619 by %c255_i32_472 dim 1 : vector<8x256xf32>, i32 -> vector<8x256xf32>
    %c41_473 = arith.constant 41 : index
    %c0_474 = arith.constant 0 : index
    %c0_475 = arith.constant 0 : index
    %640 = vector.load %arg9[%c41_473, %c0_474, %c0_475] : memref<45x8x256xf32, #tpu.memory_space<vmem>>, vector<1x8x256xf32>
    %641 = vector.shape_cast %640 : vector<1x8x256xf32> to vector<8x256xf32>
    %642 = arith.mulf %639, %641 : vector<8x256xf32>
    %c241_i32_476 = arith.constant 241 : i32
    %643 = tpu.dynamic_rotate %619 by %c241_i32_476 dim 1 : vector<8x256xf32>, i32 -> vector<8x256xf32>
    %c42_477 = arith.constant 42 : index
    %c0_478 = arith.constant 0 : index
    %c0_479 = arith.constant 0 : index
    %644 = vector.load %arg9[%c42_477, %c0_478, %c0_479] : memref<45x8x256xf32, #tpu.memory_space<vmem>>, vector<1x8x256xf32>
    %645 = vector.shape_cast %644 : vector<1x8x256xf32> to vector<8x256xf32>
    %646 = arith.mulf %643, %645 : vector<8x256xf32>
    %c240_i32_480 = arith.constant 240 : i32
    %647 = tpu.dynamic_rotate %619 by %c240_i32_480 dim 1 : vector<8x256xf32>, i32 -> vector<8x256xf32>
    %c43_481 = arith.constant 43 : index
    %c0_482 = arith.constant 0 : index
    %c0_483 = arith.constant 0 : index
    %648 = vector.load %arg9[%c43_481, %c0_482, %c0_483] : memref<45x8x256xf32, #tpu.memory_space<vmem>>, vector<1x8x256xf32>
    %649 = vector.shape_cast %648 : vector<1x8x256xf32> to vector<8x256xf32>
    %650 = arith.mulf %647, %649 : vector<8x256xf32>
    %c239_i32_484 = arith.constant 239 : i32
    %651 = tpu.dynamic_rotate %619 by %c239_i32_484 dim 1 : vector<8x256xf32>, i32 -> vector<8x256xf32>
    %c44_485 = arith.constant 44 : index
    %c0_486 = arith.constant 0 : index
    %c0_487 = arith.constant 0 : index
    %652 = vector.load %arg9[%c44_485, %c0_486, %c0_487] : memref<45x8x256xf32, #tpu.memory_space<vmem>>, vector<1x8x256xf32>
    %653 = vector.shape_cast %652 : vector<1x8x256xf32> to vector<8x256xf32>
    %654 = arith.mulf %651, %653 : vector<8x256xf32>
    %655 = arith.addf %623, %627 : vector<8x256xf32>
    %656 = arith.addf %631, %635 : vector<8x256xf32>
    %657 = arith.addf %638, %642 : vector<8x256xf32>
    %658 = arith.addf %646, %650 : vector<8x256xf32>
    %659 = arith.addf %655, %656 : vector<8x256xf32>
    %660 = arith.addf %657, %658 : vector<8x256xf32>
    %661 = arith.addf %659, %660 : vector<8x256xf32>
    %662 = arith.addf %661, %654 : vector<8x256xf32>
    %c32_488 = arith.constant 32 : index
    %c0_489 = arith.constant 0 : index
    %663 = vector.load %arg15[%c32_488, %c0_489] : memref<40x256xf32, #tpu.memory_space<vmem>>, vector<8x256xf32>
    tpu.vector_store %arg15[%c32_488, %c0_489], %662 {strides = array<i32>} : memref<40x256xf32, #tpu.memory_space<vmem>>, vector<8x256xf32>,
    %c0_490 = arith.constant 0 : index
    %c0_491 = arith.constant 0 : index
    %664 = vector.load %arg10[%c0_490, %c0_491] : memref<30x40xf32, #tpu.memory_space<vmem>>, vector<30x40xf32>
    %c0_492 = arith.constant 0 : index
    %c0_493 = arith.constant 0 : index
    %665 = vector.load %arg15[%c0_492, %c0_493] : memref<40x256xf32, #tpu.memory_space<vmem>>, vector<40x256xf32>
    %cst_494 = arith.constant dense<0.000000e+00> : vector<30x256xf32>
    %666 = tpu.matmul %664, %665, %cst_494 {dimension_numbers = #tpu.dot_dimension_numbers<[1], [0], [0], [1], [0, 0, 1, 1], [], []>} : vector<30x40xf32>, vector<40x256xf32>, vector<30x256xf32> -> vector<30x256xf32>
    %cst_495 = arith.constant 0.000000e+00 : f32
    %667 = vector.broadcast %cst_495 : f32 to vector<30x256xf32>
    %668 = arith.maximumf %666, %667 : vector<30x256xf32>
    %c0_496 = arith.constant 0 : index
    %c0_497 = arith.constant 0 : index
    %669 = vector.load %arg11[%c0_496, %c0_497] : memref<32x30xf32, #tpu.memory_space<vmem>>, vector<32x30xf32>
    %cst_498 = arith.constant dense<0.000000e+00> : vector<32x256xf32>
    %670 = tpu.matmul %669, %668, %cst_498 {dimension_numbers = #tpu.dot_dimension_numbers<[1], [0], [0], [1], [0, 0, 1, 1], [], []>} : vector<32x30xf32>, vector<30x256xf32>, vector<32x256xf32> -> vector<32x256xf32>
    %cst_499 = arith.constant 0.000000e+00 : f32
    %671 = vector.broadcast %cst_499 : f32 to vector<32x256xf32>
    %672 = arith.maximumf %670, %671 : vector<32x256xf32>
    %673 = vector.extract_strided_slice %672 {offsets = [0, 0], sizes = [8, 256], strides = [1, 1]} : vector<32x256xf32> to vector<8x256xf32>
    %c17_i32_500 = arith.constant 17 : i32
    %674 = tpu.dynamic_rotate %673 by %c17_i32_500 dim 1 : vector<8x256xf32>, i32 -> vector<8x256xf32>
    %c0_501 = arith.constant 0 : index
    %c0_502 = arith.constant 0 : index
    %c0_503 = arith.constant 0 : index
    %675 = vector.load %arg12[%c0_501, %c0_502, %c0_503] : memref<36x8x256xf32, #tpu.memory_space<vmem>>, vector<1x8x256xf32>
    %676 = vector.shape_cast %675 : vector<1x8x256xf32> to vector<8x256xf32>
    %677 = arith.mulf %674, %676 : vector<8x256xf32>
    %c16_i32_504 = arith.constant 16 : i32
    %678 = tpu.dynamic_rotate %673 by %c16_i32_504 dim 1 : vector<8x256xf32>, i32 -> vector<8x256xf32>
    %c1_505 = arith.constant 1 : index
    %c0_506 = arith.constant 0 : index
    %c0_507 = arith.constant 0 : index
    %679 = vector.load %arg12[%c1_505, %c0_506, %c0_507] : memref<36x8x256xf32, #tpu.memory_space<vmem>>, vector<1x8x256xf32>
    %680 = vector.shape_cast %679 : vector<1x8x256xf32> to vector<8x256xf32>
    %681 = arith.mulf %678, %680 : vector<8x256xf32>
    %c15_i32_508 = arith.constant 15 : i32
    %682 = tpu.dynamic_rotate %673 by %c15_i32_508 dim 1 : vector<8x256xf32>, i32 -> vector<8x256xf32>
    %c2_509 = arith.constant 2 : index
    %c0_510 = arith.constant 0 : index
    %c0_511 = arith.constant 0 : index
    %683 = vector.load %arg12[%c2_509, %c0_510, %c0_511] : memref<36x8x256xf32, #tpu.memory_space<vmem>>, vector<1x8x256xf32>
    %684 = vector.shape_cast %683 : vector<1x8x256xf32> to vector<8x256xf32>
    %685 = arith.mulf %682, %684 : vector<8x256xf32>
    %c1_i32_512 = arith.constant 1 : i32
    %686 = tpu.dynamic_rotate %673 by %c1_i32_512 dim 1 : vector<8x256xf32>, i32 -> vector<8x256xf32>
    %c3_513 = arith.constant 3 : index
    %c0_514 = arith.constant 0 : index
    %c0_515 = arith.constant 0 : index
    %687 = vector.load %arg12[%c3_513, %c0_514, %c0_515] : memref<36x8x256xf32, #tpu.memory_space<vmem>>, vector<1x8x256xf32>
    %688 = vector.shape_cast %687 : vector<1x8x256xf32> to vector<8x256xf32>
    %689 = arith.mulf %686, %688 : vector<8x256xf32>
    %c4_516 = arith.constant 4 : index
    %c0_517 = arith.constant 0 : index
    %c0_518 = arith.constant 0 : index
    %690 = vector.load %arg12[%c4_516, %c0_517, %c0_518] : memref<36x8x256xf32, #tpu.memory_space<vmem>>, vector<1x8x256xf32>
    %691 = vector.shape_cast %690 : vector<1x8x256xf32> to vector<8x256xf32>
    %692 = arith.mulf %673, %691 : vector<8x256xf32>
    %c255_i32_519 = arith.constant 255 : i32
    %693 = tpu.dynamic_rotate %673 by %c255_i32_519 dim 1 : vector<8x256xf32>, i32 -> vector<8x256xf32>
    %c5_520 = arith.constant 5 : index
    %c0_521 = arith.constant 0 : index
    %c0_522 = arith.constant 0 : index
    %694 = vector.load %arg12[%c5_520, %c0_521, %c0_522] : memref<36x8x256xf32, #tpu.memory_space<vmem>>, vector<1x8x256xf32>
    %695 = vector.shape_cast %694 : vector<1x8x256xf32> to vector<8x256xf32>
    %696 = arith.mulf %693, %695 : vector<8x256xf32>
    %c241_i32_523 = arith.constant 241 : i32
    %697 = tpu.dynamic_rotate %673 by %c241_i32_523 dim 1 : vector<8x256xf32>, i32 -> vector<8x256xf32>
    %c6_524 = arith.constant 6 : index
    %c0_525 = arith.constant 0 : index
    %c0_526 = arith.constant 0 : index
    %698 = vector.load %arg12[%c6_524, %c0_525, %c0_526] : memref<36x8x256xf32, #tpu.memory_space<vmem>>, vector<1x8x256xf32>
    %699 = vector.shape_cast %698 : vector<1x8x256xf32> to vector<8x256xf32>
    %700 = arith.mulf %697, %699 : vector<8x256xf32>
    %c240_i32_527 = arith.constant 240 : i32
    %701 = tpu.dynamic_rotate %673 by %c240_i32_527 dim 1 : vector<8x256xf32>, i32 -> vector<8x256xf32>
    %c7_528 = arith.constant 7 : index
    %c0_529 = arith.constant 0 : index
    %c0_530 = arith.constant 0 : index
    %702 = vector.load %arg12[%c7_528, %c0_529, %c0_530] : memref<36x8x256xf32, #tpu.memory_space<vmem>>, vector<1x8x256xf32>
    %703 = vector.shape_cast %702 : vector<1x8x256xf32> to vector<8x256xf32>
    %704 = arith.mulf %701, %703 : vector<8x256xf32>
    %c239_i32_531 = arith.constant 239 : i32
    %705 = tpu.dynamic_rotate %673 by %c239_i32_531 dim 1 : vector<8x256xf32>, i32 -> vector<8x256xf32>
    %c8_532 = arith.constant 8 : index
    %c0_533 = arith.constant 0 : index
    %c0_534 = arith.constant 0 : index
    %706 = vector.load %arg12[%c8_532, %c0_533, %c0_534] : memref<36x8x256xf32, #tpu.memory_space<vmem>>, vector<1x8x256xf32>
    %707 = vector.shape_cast %706 : vector<1x8x256xf32> to vector<8x256xf32>
    %708 = arith.mulf %705, %707 : vector<8x256xf32>
    %709 = arith.addf %677, %681 : vector<8x256xf32>
    %710 = arith.addf %685, %689 : vector<8x256xf32>
    %711 = arith.addf %692, %696 : vector<8x256xf32>
    %712 = arith.addf %700, %704 : vector<8x256xf32>
    %713 = arith.addf %709, %710 : vector<8x256xf32>
    %714 = arith.addf %711, %712 : vector<8x256xf32>
    %715 = arith.addf %713, %714 : vector<8x256xf32>
    %716 = arith.addf %715, %708 : vector<8x256xf32>
    %c0_535 = arith.constant 0 : index
    %c0_536 = arith.constant 0 : index
    %717 = vector.load %arg15[%c0_535, %c0_536] : memref<40x256xf32, #tpu.memory_space<vmem>>, vector<8x256xf32>
    tpu.vector_store %arg15[%c0_535, %c0_536], %716 {strides = array<i32>} : memref<40x256xf32, #tpu.memory_space<vmem>>, vector<8x256xf32>,
    %718 = vector.extract_strided_slice %672 {offsets = [8, 0], sizes = [8, 256], strides = [1, 1]} : vector<32x256xf32> to vector<8x256xf32>
    %719 = arith.addf %716, %718 : vector<8x256xf32>
    %c17_i32_537 = arith.constant 17 : i32
    %720 = tpu.dynamic_rotate %719 by %c17_i32_537 dim 1 : vector<8x256xf32>, i32 -> vector<8x256xf32>
    %c9_538 = arith.constant 9 : index
    %c0_539 = arith.constant 0 : index
    %c0_540 = arith.constant 0 : index
    %721 = vector.load %arg12[%c9_538, %c0_539, %c0_540] : memref<36x8x256xf32, #tpu.memory_space<vmem>>, vector<1x8x256xf32>
    %722 = vector.shape_cast %721 : vector<1x8x256xf32> to vector<8x256xf32>
    %723 = arith.mulf %720, %722 : vector<8x256xf32>
    %c16_i32_541 = arith.constant 16 : i32
    %724 = tpu.dynamic_rotate %719 by %c16_i32_541 dim 1 : vector<8x256xf32>, i32 -> vector<8x256xf32>
    %c10_542 = arith.constant 10 : index
    %c0_543 = arith.constant 0 : index
    %c0_544 = arith.constant 0 : index
    %725 = vector.load %arg12[%c10_542, %c0_543, %c0_544] : memref<36x8x256xf32, #tpu.memory_space<vmem>>, vector<1x8x256xf32>
    %726 = vector.shape_cast %725 : vector<1x8x256xf32> to vector<8x256xf32>
    %727 = arith.mulf %724, %726 : vector<8x256xf32>
    %c15_i32_545 = arith.constant 15 : i32
    %728 = tpu.dynamic_rotate %719 by %c15_i32_545 dim 1 : vector<8x256xf32>, i32 -> vector<8x256xf32>
    %c11_546 = arith.constant 11 : index
    %c0_547 = arith.constant 0 : index
    %c0_548 = arith.constant 0 : index
    %729 = vector.load %arg12[%c11_546, %c0_547, %c0_548] : memref<36x8x256xf32, #tpu.memory_space<vmem>>, vector<1x8x256xf32>
    %730 = vector.shape_cast %729 : vector<1x8x256xf32> to vector<8x256xf32>
    %731 = arith.mulf %728, %730 : vector<8x256xf32>
    %c1_i32_549 = arith.constant 1 : i32
    %732 = tpu.dynamic_rotate %719 by %c1_i32_549 dim 1 : vector<8x256xf32>, i32 -> vector<8x256xf32>
    %c12_550 = arith.constant 12 : index
    %c0_551 = arith.constant 0 : index
    %c0_552 = arith.constant 0 : index
    %733 = vector.load %arg12[%c12_550, %c0_551, %c0_552] : memref<36x8x256xf32, #tpu.memory_space<vmem>>, vector<1x8x256xf32>
    %734 = vector.shape_cast %733 : vector<1x8x256xf32> to vector<8x256xf32>
    %735 = arith.mulf %732, %734 : vector<8x256xf32>
    %c13_553 = arith.constant 13 : index
    %c0_554 = arith.constant 0 : index
    %c0_555 = arith.constant 0 : index
    %736 = vector.load %arg12[%c13_553, %c0_554, %c0_555] : memref<36x8x256xf32, #tpu.memory_space<vmem>>, vector<1x8x256xf32>
    %737 = vector.shape_cast %736 : vector<1x8x256xf32> to vector<8x256xf32>
    %738 = arith.mulf %719, %737 : vector<8x256xf32>
    %c255_i32_556 = arith.constant 255 : i32
    %739 = tpu.dynamic_rotate %719 by %c255_i32_556 dim 1 : vector<8x256xf32>, i32 -> vector<8x256xf32>
    %c14_557 = arith.constant 14 : index
    %c0_558 = arith.constant 0 : index
    %c0_559 = arith.constant 0 : index
    %740 = vector.load %arg12[%c14_557, %c0_558, %c0_559] : memref<36x8x256xf32, #tpu.memory_space<vmem>>, vector<1x8x256xf32>
    %741 = vector.shape_cast %740 : vector<1x8x256xf32> to vector<8x256xf32>
    %742 = arith.mulf %739, %741 : vector<8x256xf32>
    %c241_i32_560 = arith.constant 241 : i32
    %743 = tpu.dynamic_rotate %719 by %c241_i32_560 dim 1 : vector<8x256xf32>, i32 -> vector<8x256xf32>
    %c15_561 = arith.constant 15 : index
    %c0_562 = arith.constant 0 : index
    %c0_563 = arith.constant 0 : index
    %744 = vector.load %arg12[%c15_561, %c0_562, %c0_563] : memref<36x8x256xf32, #tpu.memory_space<vmem>>, vector<1x8x256xf32>
    %745 = vector.shape_cast %744 : vector<1x8x256xf32> to vector<8x256xf32>
    %746 = arith.mulf %743, %745 : vector<8x256xf32>
    %c240_i32_564 = arith.constant 240 : i32
    %747 = tpu.dynamic_rotate %719 by %c240_i32_564 dim 1 : vector<8x256xf32>, i32 -> vector<8x256xf32>
    %c16_565 = arith.constant 16 : index
    %c0_566 = arith.constant 0 : index
    %c0_567 = arith.constant 0 : index
    %748 = vector.load %arg12[%c16_565, %c0_566, %c0_567] : memref<36x8x256xf32, #tpu.memory_space<vmem>>, vector<1x8x256xf32>
    %749 = vector.shape_cast %748 : vector<1x8x256xf32> to vector<8x256xf32>
    %750 = arith.mulf %747, %749 : vector<8x256xf32>
    %c239_i32_568 = arith.constant 239 : i32
    %751 = tpu.dynamic_rotate %719 by %c239_i32_568 dim 1 : vector<8x256xf32>, i32 -> vector<8x256xf32>
    %c17_569 = arith.constant 17 : index
    %c0_570 = arith.constant 0 : index
    %c0_571 = arith.constant 0 : index
    %752 = vector.load %arg12[%c17_569, %c0_570, %c0_571] : memref<36x8x256xf32, #tpu.memory_space<vmem>>, vector<1x8x256xf32>
    %753 = vector.shape_cast %752 : vector<1x8x256xf32> to vector<8x256xf32>
    %754 = arith.mulf %751, %753 : vector<8x256xf32>
    %755 = arith.addf %723, %727 : vector<8x256xf32>
    %756 = arith.addf %731, %735 : vector<8x256xf32>
    %757 = arith.addf %738, %742 : vector<8x256xf32>
    %758 = arith.addf %746, %750 : vector<8x256xf32>
    %759 = arith.addf %755, %756 : vector<8x256xf32>
    %760 = arith.addf %757, %758 : vector<8x256xf32>
    %761 = arith.addf %759, %760 : vector<8x256xf32>
    %762 = arith.addf %761, %754 : vector<8x256xf32>
    %c8_572 = arith.constant 8 : index
    %c0_573 = arith.constant 0 : index
    %763 = vector.load %arg15[%c8_572, %c0_573] : memref<40x256xf32, #tpu.memory_space<vmem>>, vector<8x256xf32>
    tpu.vector_store %arg15[%c8_572, %c0_573], %762 {strides = array<i32>} : memref<40x256xf32, #tpu.memory_space<vmem>>, vector<8x256xf32>,
    %764 = vector.extract_strided_slice %672 {offsets = [16, 0], sizes = [8, 256], strides = [1, 1]} : vector<32x256xf32> to vector<8x256xf32>
    %765 = arith.addf %762, %764 : vector<8x256xf32>
    %c17_i32_574 = arith.constant 17 : i32
    %766 = tpu.dynamic_rotate %765 by %c17_i32_574 dim 1 : vector<8x256xf32>, i32 -> vector<8x256xf32>
    %c18_575 = arith.constant 18 : index
    %c0_576 = arith.constant 0 : index
    %c0_577 = arith.constant 0 : index
    %767 = vector.load %arg12[%c18_575, %c0_576, %c0_577] : memref<36x8x256xf32, #tpu.memory_space<vmem>>, vector<1x8x256xf32>
    %768 = vector.shape_cast %767 : vector<1x8x256xf32> to vector<8x256xf32>
    %769 = arith.mulf %766, %768 : vector<8x256xf32>
    %c16_i32_578 = arith.constant 16 : i32
    %770 = tpu.dynamic_rotate %765 by %c16_i32_578 dim 1 : vector<8x256xf32>, i32 -> vector<8x256xf32>
    %c19_579 = arith.constant 19 : index
    %c0_580 = arith.constant 0 : index
    %c0_581 = arith.constant 0 : index
    %771 = vector.load %arg12[%c19_579, %c0_580, %c0_581] : memref<36x8x256xf32, #tpu.memory_space<vmem>>, vector<1x8x256xf32>
    %772 = vector.shape_cast %771 : vector<1x8x256xf32> to vector<8x256xf32>
    %773 = arith.mulf %770, %772 : vector<8x256xf32>
    %c15_i32_582 = arith.constant 15 : i32
    %774 = tpu.dynamic_rotate %765 by %c15_i32_582 dim 1 : vector<8x256xf32>, i32 -> vector<8x256xf32>
    %c20_583 = arith.constant 20 : index
    %c0_584 = arith.constant 0 : index
    %c0_585 = arith.constant 0 : index
    %775 = vector.load %arg12[%c20_583, %c0_584, %c0_585] : memref<36x8x256xf32, #tpu.memory_space<vmem>>, vector<1x8x256xf32>
    %776 = vector.shape_cast %775 : vector<1x8x256xf32> to vector<8x256xf32>
    %777 = arith.mulf %774, %776 : vector<8x256xf32>
    %c1_i32_586 = arith.constant 1 : i32
    %778 = tpu.dynamic_rotate %765 by %c1_i32_586 dim 1 : vector<8x256xf32>, i32 -> vector<8x256xf32>
    %c21_587 = arith.constant 21 : index
    %c0_588 = arith.constant 0 : index
    %c0_589 = arith.constant 0 : index
    %779 = vector.load %arg12[%c21_587, %c0_588, %c0_589] : memref<36x8x256xf32, #tpu.memory_space<vmem>>, vector<1x8x256xf32>
    %780 = vector.shape_cast %779 : vector<1x8x256xf32> to vector<8x256xf32>
    %781 = arith.mulf %778, %780 : vector<8x256xf32>
    %c22_590 = arith.constant 22 : index
    %c0_591 = arith.constant 0 : index
    %c0_592 = arith.constant 0 : index
    %782 = vector.load %arg12[%c22_590, %c0_591, %c0_592] : memref<36x8x256xf32, #tpu.memory_space<vmem>>, vector<1x8x256xf32>
    %783 = vector.shape_cast %782 : vector<1x8x256xf32> to vector<8x256xf32>
    %784 = arith.mulf %765, %783 : vector<8x256xf32>
    %c255_i32_593 = arith.constant 255 : i32
    %785 = tpu.dynamic_rotate %765 by %c255_i32_593 dim 1 : vector<8x256xf32>, i32 -> vector<8x256xf32>
    %c23_594 = arith.constant 23 : index
    %c0_595 = arith.constant 0 : index
    %c0_596 = arith.constant 0 : index
    %786 = vector.load %arg12[%c23_594, %c0_595, %c0_596] : memref<36x8x256xf32, #tpu.memory_space<vmem>>, vector<1x8x256xf32>
    %787 = vector.shape_cast %786 : vector<1x8x256xf32> to vector<8x256xf32>
    %788 = arith.mulf %785, %787 : vector<8x256xf32>
    %c241_i32_597 = arith.constant 241 : i32
    %789 = tpu.dynamic_rotate %765 by %c241_i32_597 dim 1 : vector<8x256xf32>, i32 -> vector<8x256xf32>
    %c24_598 = arith.constant 24 : index
    %c0_599 = arith.constant 0 : index
    %c0_600 = arith.constant 0 : index
    %790 = vector.load %arg12[%c24_598, %c0_599, %c0_600] : memref<36x8x256xf32, #tpu.memory_space<vmem>>, vector<1x8x256xf32>
    %791 = vector.shape_cast %790 : vector<1x8x256xf32> to vector<8x256xf32>
    %792 = arith.mulf %789, %791 : vector<8x256xf32>
    %c240_i32_601 = arith.constant 240 : i32
    %793 = tpu.dynamic_rotate %765 by %c240_i32_601 dim 1 : vector<8x256xf32>, i32 -> vector<8x256xf32>
    %c25_602 = arith.constant 25 : index
    %c0_603 = arith.constant 0 : index
    %c0_604 = arith.constant 0 : index
    %794 = vector.load %arg12[%c25_602, %c0_603, %c0_604] : memref<36x8x256xf32, #tpu.memory_space<vmem>>, vector<1x8x256xf32>
    %795 = vector.shape_cast %794 : vector<1x8x256xf32> to vector<8x256xf32>
    %796 = arith.mulf %793, %795 : vector<8x256xf32>
    %c239_i32_605 = arith.constant 239 : i32
    %797 = tpu.dynamic_rotate %765 by %c239_i32_605 dim 1 : vector<8x256xf32>, i32 -> vector<8x256xf32>
    %c26_606 = arith.constant 26 : index
    %c0_607 = arith.constant 0 : index
    %c0_608 = arith.constant 0 : index
    %798 = vector.load %arg12[%c26_606, %c0_607, %c0_608] : memref<36x8x256xf32, #tpu.memory_space<vmem>>, vector<1x8x256xf32>
    %799 = vector.shape_cast %798 : vector<1x8x256xf32> to vector<8x256xf32>
    %800 = arith.mulf %797, %799 : vector<8x256xf32>
    %801 = arith.addf %769, %773 : vector<8x256xf32>
    %802 = arith.addf %777, %781 : vector<8x256xf32>
    %803 = arith.addf %784, %788 : vector<8x256xf32>
    %804 = arith.addf %792, %796 : vector<8x256xf32>
    %805 = arith.addf %801, %802 : vector<8x256xf32>
    %806 = arith.addf %803, %804 : vector<8x256xf32>
    %807 = arith.addf %805, %806 : vector<8x256xf32>
    %808 = arith.addf %807, %800 : vector<8x256xf32>
    %c16_609 = arith.constant 16 : index
    %c0_610 = arith.constant 0 : index
    %809 = vector.load %arg15[%c16_609, %c0_610] : memref<40x256xf32, #tpu.memory_space<vmem>>, vector<8x256xf32>
    tpu.vector_store %arg15[%c16_609, %c0_610], %808 {strides = array<i32>} : memref<40x256xf32, #tpu.memory_space<vmem>>, vector<8x256xf32>,
    %810 = vector.extract_strided_slice %672 {offsets = [24, 0], sizes = [8, 256], strides = [1, 1]} : vector<32x256xf32> to vector<8x256xf32>
    %811 = arith.addf %808, %810 : vector<8x256xf32>
    %c17_i32_611 = arith.constant 17 : i32
    %812 = tpu.dynamic_rotate %811 by %c17_i32_611 dim 1 : vector<8x256xf32>, i32 -> vector<8x256xf32>
    %c27_612 = arith.constant 27 : index
    %c0_613 = arith.constant 0 : index
    %c0_614 = arith.constant 0 : index
    %813 = vector.load %arg12[%c27_612, %c0_613, %c0_614] : memref<36x8x256xf32, #tpu.memory_space<vmem>>, vector<1x8x256xf32>
    %814 = vector.shape_cast %813 : vector<1x8x256xf32> to vector<8x256xf32>
    %815 = arith.mulf %812, %814 : vector<8x256xf32>
    %c16_i32_615 = arith.constant 16 : i32
    %816 = tpu.dynamic_rotate %811 by %c16_i32_615 dim 1 : vector<8x256xf32>, i32 -> vector<8x256xf32>
    %c28_616 = arith.constant 28 : index
    %c0_617 = arith.constant 0 : index
    %c0_618 = arith.constant 0 : index
    %817 = vector.load %arg12[%c28_616, %c0_617, %c0_618] : memref<36x8x256xf32, #tpu.memory_space<vmem>>, vector<1x8x256xf32>
    %818 = vector.shape_cast %817 : vector<1x8x256xf32> to vector<8x256xf32>
    %819 = arith.mulf %816, %818 : vector<8x256xf32>
    %c15_i32_619 = arith.constant 15 : i32
    %820 = tpu.dynamic_rotate %811 by %c15_i32_619 dim 1 : vector<8x256xf32>, i32 -> vector<8x256xf32>
    %c29_620 = arith.constant 29 : index
    %c0_621 = arith.constant 0 : index
    %c0_622 = arith.constant 0 : index
    %821 = vector.load %arg12[%c29_620, %c0_621, %c0_622] : memref<36x8x256xf32, #tpu.memory_space<vmem>>, vector<1x8x256xf32>
    %822 = vector.shape_cast %821 : vector<1x8x256xf32> to vector<8x256xf32>
    %823 = arith.mulf %820, %822 : vector<8x256xf32>
    %c1_i32_623 = arith.constant 1 : i32
    %824 = tpu.dynamic_rotate %811 by %c1_i32_623 dim 1 : vector<8x256xf32>, i32 -> vector<8x256xf32>
    %c30_624 = arith.constant 30 : index
    %c0_625 = arith.constant 0 : index
    %c0_626 = arith.constant 0 : index
    %825 = vector.load %arg12[%c30_624, %c0_625, %c0_626] : memref<36x8x256xf32, #tpu.memory_space<vmem>>, vector<1x8x256xf32>
    %826 = vector.shape_cast %825 : vector<1x8x256xf32> to vector<8x256xf32>
    %827 = arith.mulf %824, %826 : vector<8x256xf32>
    %c31_627 = arith.constant 31 : index
    %c0_628 = arith.constant 0 : index
    %c0_629 = arith.constant 0 : index
    %828 = vector.load %arg12[%c31_627, %c0_628, %c0_629] : memref<36x8x256xf32, #tpu.memory_space<vmem>>, vector<1x8x256xf32>
    %829 = vector.shape_cast %828 : vector<1x8x256xf32> to vector<8x256xf32>
    %830 = arith.mulf %811, %829 : vector<8x256xf32>
    %c255_i32_630 = arith.constant 255 : i32
    %831 = tpu.dynamic_rotate %811 by %c255_i32_630 dim 1 : vector<8x256xf32>, i32 -> vector<8x256xf32>
    %c32_631 = arith.constant 32 : index
    %c0_632 = arith.constant 0 : index
    %c0_633 = arith.constant 0 : index
    %832 = vector.load %arg12[%c32_631, %c0_632, %c0_633] : memref<36x8x256xf32, #tpu.memory_space<vmem>>, vector<1x8x256xf32>
    %833 = vector.shape_cast %832 : vector<1x8x256xf32> to vector<8x256xf32>
    %834 = arith.mulf %831, %833 : vector<8x256xf32>
    %c241_i32_634 = arith.constant 241 : i32
    %835 = tpu.dynamic_rotate %811 by %c241_i32_634 dim 1 : vector<8x256xf32>, i32 -> vector<8x256xf32>
    %c33_635 = arith.constant 33 : index
    %c0_636 = arith.constant 0 : index
    %c0_637 = arith.constant 0 : index
    %836 = vector.load %arg12[%c33_635, %c0_636, %c0_637] : memref<36x8x256xf32, #tpu.memory_space<vmem>>, vector<1x8x256xf32>
    %837 = vector.shape_cast %836 : vector<1x8x256xf32> to vector<8x256xf32>
    %838 = arith.mulf %835, %837 : vector<8x256xf32>
    %c240_i32_638 = arith.constant 240 : i32
    %839 = tpu.dynamic_rotate %811 by %c240_i32_638 dim 1 : vector<8x256xf32>, i32 -> vector<8x256xf32>
    %c34_639 = arith.constant 34 : index
    %c0_640 = arith.constant 0 : index
    %c0_641 = arith.constant 0 : index
    %840 = vector.load %arg12[%c34_639, %c0_640, %c0_641] : memref<36x8x256xf32, #tpu.memory_space<vmem>>, vector<1x8x256xf32>
    %841 = vector.shape_cast %840 : vector<1x8x256xf32> to vector<8x256xf32>
    %842 = arith.mulf %839, %841 : vector<8x256xf32>
    %c239_i32_642 = arith.constant 239 : i32
    %843 = tpu.dynamic_rotate %811 by %c239_i32_642 dim 1 : vector<8x256xf32>, i32 -> vector<8x256xf32>
    %c35_643 = arith.constant 35 : index
    %c0_644 = arith.constant 0 : index
    %c0_645 = arith.constant 0 : index
    %844 = vector.load %arg12[%c35_643, %c0_644, %c0_645] : memref<36x8x256xf32, #tpu.memory_space<vmem>>, vector<1x8x256xf32>
    %845 = vector.shape_cast %844 : vector<1x8x256xf32> to vector<8x256xf32>
    %846 = arith.mulf %843, %845 : vector<8x256xf32>
    %847 = arith.addf %815, %819 : vector<8x256xf32>
    %848 = arith.addf %823, %827 : vector<8x256xf32>
    %849 = arith.addf %830, %834 : vector<8x256xf32>
    %850 = arith.addf %838, %842 : vector<8x256xf32>
    %851 = arith.addf %847, %848 : vector<8x256xf32>
    %852 = arith.addf %849, %850 : vector<8x256xf32>
    %853 = arith.addf %851, %852 : vector<8x256xf32>
    %854 = arith.addf %853, %846 : vector<8x256xf32>
    %c24_646 = arith.constant 24 : index
    %c0_647 = arith.constant 0 : index
    %855 = vector.load %arg15[%c24_646, %c0_647] : memref<40x256xf32, #tpu.memory_space<vmem>>, vector<8x256xf32>
    tpu.vector_store %arg15[%c24_646, %c0_647], %854 {strides = array<i32>} : memref<40x256xf32, #tpu.memory_space<vmem>>, vector<8x256xf32>,
    %c0_648 = arith.constant 0 : index
    %c0_649 = arith.constant 0 : index
    %856 = vector.load %arg13[%c0_648, %c0_649] : memref<24x32xf32, #tpu.memory_space<vmem>>, vector<24x32xf32>
    %c0_650 = arith.constant 0 : index
    %c0_651 = arith.constant 0 : index
    %857 = vector.load %arg15[%c0_650, %c0_651] : memref<40x256xf32, #tpu.memory_space<vmem>>, vector<32x256xf32>
    %cst_652 = arith.constant dense<0.000000e+00> : vector<24x256xf32>
    %858 = tpu.matmul %856, %857, %cst_652 {dimension_numbers = #tpu.dot_dimension_numbers<[1], [0], [0], [1], [0, 0, 1, 1], [], []>} : vector<24x32xf32>, vector<32x256xf32>, vector<24x256xf32> -> vector<24x256xf32>
    %cst_653 = arith.constant 0.000000e+00 : f32
    %859 = vector.broadcast %cst_653 : f32 to vector<24x256xf32>
    %860 = arith.maximumf %858, %859 : vector<24x256xf32>
    %c0_654 = arith.constant 0 : index
    %c0_655 = arith.constant 0 : index
    %861 = vector.load %arg14[%c0_654, %c0_655] : memref<24x256xf32, #tpu.memory_space<vmem>>, vector<24x256xf32>
    tpu.vector_store %arg14[%c0_654, %c0_655], %860 {strides = array<i32>} : memref<24x256xf32, #tpu.memory_space<vmem>>, vector<24x256xf32>,
    return
  }
  func.func @transform_0(%arg0: i32) -> (i32, i32) {
    %c0_i32 = arith.constant 0 : i32
    %c0_i32_0 = arith.constant 0 : i32
    return %c0_i32, %arg0 : i32, i32
  }
  func.func @transform_1(%arg0: i32) -> (i32, i32) {
    %c0_i32 = arith.constant 0 : i32
    %c0_i32_0 = arith.constant 0 : i32
    %c0_i32_1 = arith.constant 0 : i32
    return %c0_i32, %c0_i32_0 : i32, i32
  }
  func.func @transform_2(%arg0: i32) -> (i32, i32, i32) {
    %c0_i32 = arith.constant 0 : i32
    %c0_i32_0 = arith.constant 0 : i32
    %c0_i32_1 = arith.constant 0 : i32
    %c0_i32_2 = arith.constant 0 : i32
    return %c0_i32, %c0_i32_0, %c0_i32_1 : i32, i32, i32
  }
  func.func @transform_3(%arg0: i32) -> (i32, i32) {
    %c0_i32 = arith.constant 0 : i32
    %c0_i32_0 = arith.constant 0 : i32
    %c0_i32_1 = arith.constant 0 : i32
    return %c0_i32, %c0_i32_0 : i32, i32
  }
  func.func @transform_4(%arg0: i32) -> (i32, i32) {
    %c0_i32 = arith.constant 0 : i32
    %c0_i32_0 = arith.constant 0 : i32
    %c0_i32_1 = arith.constant 0 : i32
    return %c0_i32, %c0_i32_0 : i32, i32
  }
  func.func @transform_5(%arg0: i32) -> (i32, i32, i32) {
    %c0_i32 = arith.constant 0 : i32
    %c0_i32_0 = arith.constant 0 : i32
    %c0_i32_1 = arith.constant 0 : i32
    %c0_i32_2 = arith.constant 0 : i32
    return %c0_i32, %c0_i32_0, %c0_i32_1 : i32, i32, i32
  }
  func.func @transform_6(%arg0: i32) -> (i32, i32) {
    %c0_i32 = arith.constant 0 : i32
    %c0_i32_0 = arith.constant 0 : i32
    %c0_i32_1 = arith.constant 0 : i32
    return %c0_i32, %c0_i32_0 : i32, i32
  }
  func.func @transform_7(%arg0: i32) -> (i32, i32) {
    %c0_i32 = arith.constant 0 : i32
    %c0_i32_0 = arith.constant 0 : i32
    %c0_i32_1 = arith.constant 0 : i32
    return %c0_i32, %c0_i32_0 : i32, i32
  }
  func.func @transform_8(%arg0: i32) -> (i32, i32, i32) {
    %c0_i32 = arith.constant 0 : i32
    %c0_i32_0 = arith.constant 0 : i32
    %c0_i32_1 = arith.constant 0 : i32
    %c0_i32_2 = arith.constant 0 : i32
    return %c0_i32, %c0_i32_0, %c0_i32_1 : i32, i32, i32
  }
  func.func @transform_9(%arg0: i32) -> (i32, i32) {
    %c0_i32 = arith.constant 0 : i32
    %c0_i32_0 = arith.constant 0 : i32
    %c0_i32_1 = arith.constant 0 : i32
    return %c0_i32, %c0_i32_0 : i32, i32
  }
  func.func @transform_10(%arg0: i32) -> (i32, i32) {
    %c0_i32 = arith.constant 0 : i32
    %c0_i32_0 = arith.constant 0 : i32
    %c0_i32_1 = arith.constant 0 : i32
    return %c0_i32, %c0_i32_0 : i32, i32
  }
  func.func @transform_11(%arg0: i32) -> (i32, i32, i32) {
    %c0_i32 = arith.constant 0 : i32
    %c0_i32_0 = arith.constant 0 : i32
    %c0_i32_1 = arith.constant 0 : i32
    %c0_i32_2 = arith.constant 0 : i32
    return %c0_i32, %c0_i32_0, %c0_i32_1 : i32, i32, i32
  }
  func.func @transform_12(%arg0: i32) -> (i32, i32) {
    %c0_i32 = arith.constant 0 : i32
    %c0_i32_0 = arith.constant 0 : i32
    %c0_i32_1 = arith.constant 0 : i32
    return %c0_i32, %c0_i32_0 : i32, i32
  }
  func.func @transform_13(%arg0: i32) -> (i32, i32) {
    %c0_i32 = arith.constant 0 : i32
    %c0_i32_0 = arith.constant 0 : i32
    return %c0_i32, %arg0 : i32, i32
  }
}

</mosaic_0001>

<llo_original>
// kernel: tpu_custom_call.1
$region0: #{tpu_custom_call.1}
  #allocation0 [shape = 'u32[]', space=smem, size = 0x4, offset = 0x4, fixed_abs, tag = 'smem constant byte address 0x4 - core index']
  #allocation1 [shape = 'u32[72,128]{1,0:T(1,128)}', space=vmem, size = 0x9000, scoped, tag = 'internal scratch']
  #allocation2 [shape = 'f32[40,256]{1,0:T(8,128)}', space=vmem, size = 0xa000, scoped, tag = 'scratch operand']
  %s0 = inlined_call_operand.hbm [shape: f32[4,512], index: 0, kind: input, shape index: {}]
  %s1 = inlined_call_operand.vmem [shape: f32[40,4], index: 1, kind: input, shape index: {}]
  %s2 = inlined_call_operand.hbm [shape: f32[45,8,256], index: 2, kind: input, shape index: {}]
  %s3 = inlined_call_operand.vmem [shape: f32[30,40], index: 3, kind: input, shape index: {}]
  %s4 = inlined_call_operand.vmem [shape: f32[32,30], index: 4, kind: input, shape index: {}]
  %s5 = inlined_call_operand.hbm [shape: f32[36,8,256], index: 5, kind: input, shape index: {}]
  %s6 = inlined_call_operand.vmem [shape: f32[24,32], index: 6, kind: input, shape index: {}]
  %s7 = inlined_call_operand.vmem [shape: f32[40,24], index: 7, kind: input, shape index: {}]
  %s8 = inlined_call_operand.hbm [shape: f32[45,8,256], index: 8, kind: input, shape index: {}]
  %s9 = inlined_call_operand.hbm [shape: f32[30,40], index: 9, kind: input, shape index: {}]
  %s10 = inlined_call_operand.hbm [shape: f32[32,30], index: 10, kind: input, shape index: {}]
  %s11 = inlined_call_operand.hbm [shape: f32[36,8,256], index: 11, kind: input, shape index: {}]
  %s12 = inlined_call_operand.hbm [shape: f32[24,32], index: 12, kind: input, shape index: {}]
  %s13 = inlined_call_operand.hbm [shape: f32[24,512], index: 13, kind: output, shape index: {}]
  %s14 = sld [smem:[#allocation0]]
  $region117: #{tpu_custom_call.1} parent=0
    _
  %s16 = ssub.s32 1, %s14
  %s17 = scalar_select 0, %s16, %s14
  $region1: #{tpu_custom_call.1} parent=0
    #allocation3 [shape = 'u8[8192]{0}', space=vmem, size = 0x2000, scoped, tag = 'input window, operand 0']
    #allocation4 [shape = 's32[2]{0}', space=sflag, size = 0x8, scoped, tag = 'scoped memory for tpu_custom_call.1']
    #allocation5 [shape = 's32[2]{0}', space=sflag, size = 0x8, scoped, tag = 'scoped memory for tpu_custom_call.1']
    #allocation6 [shape = 'u8[368640]{0}', space=vmem, size = 0x5a000, scoped, tag = 'input window, operand 2, single buffered']
    #allocation7 [shape = 's32[1]{0}', space=sflag, size = 0x4, scoped, tag = 'scoped memory for tpu_custom_call.1']
    #allocation8 [shape = 'u8[294912]{0}', space=vmem, size = 0x48000, scoped, tag = 'input window, operand 5, single buffered']
    #allocation9 [shape = 'u8[368640]{0}', space=vmem, size = 0x5a000, scoped, tag = 'input window, operand 8, single buffered']
    #allocation10 [shape = 's32[1]{0}', space=sflag, size = 0x4, scoped, tag = 'scoped memory for tpu_custom_call.1']
    #allocation11 [shape = 'u8[16384]{0}', space=vmem, size = 0x4000, scoped, tag = 'input window, operand 9, single buffered']
    #allocation12 [shape = 'u8[16384]{0}', space=vmem, size = 0x4000, scoped, tag = 'input window, operand 10, single buffered']
    #allocation13 [shape = 's32[1]{0}', space=sflag, size = 0x4, scoped, tag = 'scoped memory for tpu_custom_call.1']
    #allocation14 [shape = 'u8[294912]{0}', space=vmem, size = 0x48000, scoped, tag = 'input window, operand 11, single buffered']
    #allocation15 [shape = 'u8[12288]{0}', space=vmem, size = 0x3000, scoped, tag = 'input window, operand 12, single buffered']
    #allocation16 [shape = 's32[1]{0}', space=sflag, size = 0x4, scoped, tag = 'scoped memory for tpu_custom_call.1']
    #allocation17 [shape = 'u8[49152]{0}', space=vmem, size = 0xc000, scoped, tag = 'output window, operand 0']
    %18 = vsyncpa [#allocation4], 0
    %s19 = scalar_lea.sflag [#allocation4], 1
    %20 = vsyncpa %s19, 0
    %21 = vsyncpa [#allocation7], 0
    %22 = vsyncpa [#allocation10], 0
    %23 = vsyncpa [#allocation13], 0
    %24 = vsyncpa [#allocation16], 0
    %25 = vsyncpa [#allocation5], 0
    %s26 = scalar_lea.sflag [#allocation5], 1
    %27 = vsyncpa %s26, 0
    loop: start=0, step=1, limit=4
    $region2: #{tpu_custom_call.1} parent=1 // loop_pre_header
      _
    $region3: #{tpu_custom_call.1} parent=1 // loop_header
      %s29 = sphi 0, %s33
      %p30 = scmp.ge.s32.totalorder %s29, 4
      %s39 = sphi 0, %s41
      %s42 = sphi 0, %s39
      %s43 = sphi 0, %s42
      %s59 = sphi 0, %s43
      %s63 = sphi 0, %s63
      %s65 = sphi 0, %s63
      %s66 = sphi 0, %s65
      %s80 = sphi 0, %s66
      %s84 = sphi 0, %s84
      %s86 = sphi 0, %s84
      %s87 = sphi 0, %s86
      %s101 = sphi 0, %s87
      %s105 = sphi 0, %s105
      %s107 = sphi 0, %s105
      %s108 = sphi 0, %s107
      %s122 = sphi 0, %s108
      %s126 = sphi 0, %s126
      %s128 = sphi 0, %s126
      %s129 = sphi 0, %s128
      %s143 = sphi 0, %s129
      %s147 = sphi 0, %s147
      %s149 = sphi 0, %s147
      %s150 = sphi 0, %s149
      %s164 = sphi 0, %s150
      %s168 = sphi 0, %s168
      %s170 = sphi 0, %s168
      %s171 = sphi 0, %s170
      %s185 = sphi 0, %s171
      %s189 = sphi 0, %s189
      %s191 = sphi 0, %s189
      %s192 = sphi 0, %s191
      %s206 = sphi 0, %s192
      %s210 = sphi 0, %s210
      %s212 = sphi 0, %s210
      %s213 = sphi 0, %s212
      %s227 = sphi 0, %s213
      %s231 = sphi 0, %s231
      %s233 = sphi 0, %s231
      %s234 = sphi 0, %s233
      %s248 = sphi 0, %s234
      %s252 = sphi 0, %s252
      %s254 = sphi 0, %s252
      %s255 = sphi 0, %s254
      %s269 = sphi 0, %s255
      %s273 = sphi 0, %s273
      %s275 = sphi 0, %s273
      %s276 = sphi 0, %s275
      %s290 = sphi 0, %s276
      %s294 = sphi 0, %s294
      %s296 = sphi 0, %s294
      %s297 = sphi 0, %s296
      %s311 = sphi 0, %s297
      %s317 = sphi 0, %s319
      %s320 = sphi 0, %s317
      %s321 = sphi 0, %s320
      %s337 = sphi 0, %s321
    $region4: #{tpu_custom_call.1} parent=1 // loop_header_branch
      %32 = sbr.rel (%p30) target = $region8
    $region5: #{tpu_custom_call.1} parent=1 // loop_body
      %s34 = ssub.s32 %s29, 1
      %s35 = ssub.s32 %s29, 2
      %s36 = sadd.s32 %s29, 1
      %s37 = ssub.s32 %s29, %s36
      %p38 = scmp.eq.s32.totalorder %s37, 0
      %s40 = sadd.s32 %s39, 1
      %s41 = scalar_select %p38, %s39, %s40
      %p44 = pneg %p38
      %p45 = scmp.eq.s32.totalorder %s29, 1
      %p46 = por %p44, %p45
      %p47 = scmp.ne.s32.totalorder %s39, %s42
      %p48 = scmp.eq.s32.totalorder %s29, 0
      %p49 = por %p47, %p48
      %p50 = scmp.ne.s32.totalorder %s39, %s42
      %p51 = scmp.eq.s32.totalorder %s34, 1
      %p52 = por %p50, %p51
      %p53 = scmp.ne.s32.totalorder %s42, %s43
      %p54 = scmp.eq.s32.totalorder %s34, 0
      %p55 = por %p53, %p54
      %p56 = scmp.ne.s32.totalorder %s42, %s43
      %p57 = scmp.eq.s32.totalorder %s35, 1
      %p58 = por %p56, %p57
      %p60 = scmp.ne.s32.totalorder %s43, %s59
      %p61 = scmp.eq.s32.totalorder %s35, 0
      %p62 = por %p60, %p61
      %s64 = sadd.s32 %s63, 1
      %p67 = scmp.eq.s32.totalorder %s29, 1
      %p68 = scmp.ne.s32.totalorder %s63, %s65
      %p69 = scmp.eq.s32.totalorder %s29, 0
      %p70 = por %p68, %p69
      %p71 = scmp.ne.s32.totalorder %s63, %s65
      %p72 = scmp.eq.s32.totalorder %s34, 1
      %p73 = por %p71, %p72
      %p74 = scmp.ne.s32.totalorder %s65, %s66
      %p75 = scmp.eq.s32.totalorder %s34, 0
      %p76 = por %p74, %p75
      %p77 = scmp.ne.s32.totalorder %s65, %s66
      %p78 = scmp.eq.s32.totalorder %s35, 1
      %p79 = por %p77, %p78
      %p81 = scmp.ne.s32.totalorder %s66, %s80
      %p82 = scmp.eq.s32.totalorder %s35, 0
      %p83 = por %p81, %p82
      %s85 = sadd.s32 %s84, 1
      %p88 = scmp.eq.s32.totalorder %s29, 1
      %p89 = scmp.ne.s32.totalorder %s84, %s86
      %p90 = scmp.eq.s32.totalorder %s29, 0
      %p91 = por %p89, %p90
      %p92 = scmp.ne.s32.totalorder %s84, %s86
      %p93 = scmp.eq.s32.totalorder %s34, 1
      %p94 = por %p92, %p93
      %p95 = scmp.ne.s32.totalorder %s86, %s87
      %p96 = scmp.eq.s32.totalorder %s34, 0
      %p97 = por %p95, %p96
      %p98 = scmp.ne.s32.totalorder %s86, %s87
      %p99 = scmp.eq.s32.totalorder %s35, 1
      %p100 = por %p98, %p99
      %p102 = scmp.ne.s32.totalorder %s87, %s101
      %p103 = scmp.eq.s32.totalorder %s35, 0
      %p104 = por %p102, %p103
      %s106 = sadd.s32 %s105, 1
      %p109 = scmp.eq.s32.totalorder %s29, 1
      %p110 = scmp.ne.s32.totalorder %s105, %s107
      %p111 = scmp.eq.s32.totalorder %s29, 0
      %p112 = por %p110, %p111
      %p113 = scmp.ne.s32.totalorder %s105, %s107
      %p114 = scmp.eq.s32.totalorder %s34, 1
      %p115 = por %p113, %p114
      %p116 = scmp.ne.s32.totalorder %s107, %s108
      %p117 = scmp.eq.s32.totalorder %s34, 0
      %p118 = por %p116, %p117
      %p119 = scmp.ne.s32.totalorder %s107, %s108
      %p120 = scmp.eq.s32.totalorder %s35, 1
      %p121 = por %p119, %p120
      %p123 = scmp.ne.s32.totalorder %s108, %s122
      %p124 = scmp.eq.s32.totalorder %s35, 0
      %p125 = por %p123, %p124
      %s127 = sadd.s32 %s126, 1
      %p130 = scmp.eq.s32.totalorder %s29, 1
      %p131 = scmp.ne.s32.totalorder %s126, %s128
      %p132 = scmp.eq.s32.totalorder %s29, 0
      %p133 = por %p131, %p132
      %p134 = scmp.ne.s32.totalorder %s126, %s128
      %p135 = scmp.eq.s32.totalorder %s34, 1
      %p136 = por %p134, %p135
      %p137 = scmp.ne.s32.totalorder %s128, %s129
      %p138 = scmp.eq.s32.totalorder %s34, 0
      %p139 = por %p137, %p138
      %p140 = scmp.ne.s32.totalorder %s128, %s129
      %p141 = scmp.eq.s32.totalorder %s35, 1
      %p142 = por %p140, %p141
      %p144 = scmp.ne.s32.totalorder %s129, %s143
      %p145 = scmp.eq.s32.totalorder %s35, 0
      %p146 = por %p144, %p145
      %s148 = sadd.s32 %s147, 1
      %p151 = scmp.eq.s32.totalorder %s29, 1
      %p152 = scmp.ne.s32.totalorder %s147, %s149
      %p153 = scmp.eq.s32.totalorder %s29, 0
      %p154 = por %p152, %p153
      %p155 = scmp.ne.s32.totalorder %s147, %s149
      %p156 = scmp.eq.s32.totalorder %s34, 1
      %p157 = por %p155, %p156
      %p158 = scmp.ne.s32.totalorder %s149, %s150
      %p159 = scmp.eq.s32.totalorder %s34, 0
      %p160 = por %p158, %p159
      %p161 = scmp.ne.s32.totalorder %s149, %s150
      %p162 = scmp.eq.s32.totalorder %s35, 1
      %p163 = por %p161, %p162
      %p165 = scmp.ne.s32.totalorder %s150, %s164
      %p166 = scmp.eq.s32.totalorder %s35, 0
      %p167 = por %p165, %p166
      %s169 = sadd.s32 %s168, 1
      %p172 = scmp.eq.s32.totalorder %s29, 1
      %p173 = scmp.ne.s32.totalorder %s168, %s170
      %p174 = scmp.eq.s32.totalorder %s29, 0
      %p175 = por %p173, %p174
      %p176 = scmp.ne.s32.totalorder %s168, %s170
      %p177 = scmp.eq.s32.totalorder %s34, 1
      %p178 = por %p176, %p177
      %p179 = scmp.ne.s32.totalorder %s170, %s171
      %p180 = scmp.eq.s32.totalorder %s34, 0
      %p181 = por %p179, %p180
      %p182 = scmp.ne.s32.totalorder %s170, %s171
      %p183 = scmp.eq.s32.totalorder %s35, 1
      %p184 = por %p182, %p183
      %p186 = scmp.ne.s32.totalorder %s171, %s185
      %p187 = scmp.eq.s32.totalorder %s35, 0
      %p188 = por %p186, %p187
      %s190 = sadd.s32 %s189, 1
      %p193 = scmp.eq.s32.totalorder %s29, 1
      %p194 = scmp.ne.s32.totalorder %s189, %s191
      %p195 = scmp.eq.s32.totalorder %s29, 0
      %p196 = por %p194, %p195
      %p197 = scmp.ne.s32.totalorder %s189, %s191
      %p198 = scmp.eq.s32.totalorder %s34, 1
      %p199 = por %p197, %p198
      %p200 = scmp.ne.s32.totalorder %s191, %s192
      %p201 = scmp.eq.s32.totalorder %s34, 0
      %p202 = por %p200, %p201
      %p203 = scmp.ne.s32.totalorder %s191, %s192
      %p204 = scmp.eq.s32.totalorder %s35, 1
      %p205 = por %p203, %p204
      %p207 = scmp.ne.s32.totalorder %s192, %s206
      %p208 = scmp.eq.s32.totalorder %s35, 0
      %p209 = por %p207, %p208
      %s211 = sadd.s32 %s210, 1
      %p214 = scmp.eq.s32.totalorder %s29, 1
      %p215 = scmp.ne.s32.totalorder %s210, %s212
      %p216 = scmp.eq.s32.totalorder %s29, 0
      %p217 = por %p215, %p216
      %p218 = scmp.ne.s32.totalorder %s210, %s212
      %p219 = scmp.eq.s32.totalorder %s34, 1
      %p220 = por %p218, %p219
      %p221 = scmp.ne.s32.totalorder %s212, %s213
      %p222 = scmp.eq.s32.totalorder %s34, 0
      %p223 = por %p221, %p222
      %p224 = scmp.ne.s32.totalorder %s212, %s213
      %p225 = scmp.eq.s32.totalorder %s35, 1
      %p226 = por %p224, %p225
      %p228 = scmp.ne.s32.totalorder %s213, %s227
      %p229 = scmp.eq.s32.totalorder %s35, 0
      %p230 = por %p228, %p229
      %s232 = sadd.s32 %s231, 1
      %p235 = scmp.eq.s32.totalorder %s29, 1
      %p236 = scmp.ne.s32.totalorder %s231, %s233
      %p237 = scmp.eq.s32.totalorder %s29, 0
      %p238 = por %p236, %p237
      %p239 = scmp.ne.s32.totalorder %s231, %s233
      %p240 = scmp.eq.s32.totalorder %s34, 1
      %p241 = por %p239, %p240
      %p242 = scmp.ne.s32.totalorder %s233, %s234
      %p243 = scmp.eq.s32.totalorder %s34, 0
      %p244 = por %p242, %p243
      %p245 = scmp.ne.s32.totalorder %s233, %s234
      %p246 = scmp.eq.s32.totalorder %s35, 1
      %p247 = por %p245, %p246
      %p249 = scmp.ne.s32.totalorder %s234, %s248
      %p250 = scmp.eq.s32.totalorder %s35, 0
      %p251 = por %p249, %p250
      %s253 = sadd.s32 %s252, 1
      %p256 = scmp.eq.s32.totalorder %s29, 1
      %p257 = scmp.ne.s32.totalorder %s252, %s254
      %p258 = scmp.eq.s32.totalorder %s29, 0
      %p259 = por %p257, %p258
      %p260 = scmp.ne.s32.totalorder %s252, %s254
      %p261 = scmp.eq.s32.totalorder %s34, 1
      %p262 = por %p260, %p261
      %p263 = scmp.ne.s32.totalorder %s254, %s255
      %p264 = scmp.eq.s32.totalorder %s34, 0
      %p265 = por %p263, %p264
      %p266 = scmp.ne.s32.totalorder %s254, %s255
      %p267 = scmp.eq.s32.totalorder %s35, 1
      %p268 = por %p266, %p267
      %p270 = scmp.ne.s32.totalorder %s255, %s269
      %p271 = scmp.eq.s32.totalorder %s35, 0
      %p272 = por %p270, %p271
      %s274 = sadd.s32 %s273, 1
      %p277 = scmp.eq.s32.totalorder %s29, 1
      %p278 = scmp.ne.s32.totalorder %s273, %s275
      %p279 = scmp.eq.s32.totalorder %s29, 0
      %p280 = por %p278, %p279
      %p281 = scmp.ne.s32.totalorder %s273, %s275
      %p282 = scmp.eq.s32.totalorder %s34, 1
      %p283 = por %p281, %p282
      %p284 = scmp.ne.s32.totalorder %s275, %s276
      %p285 = scmp.eq.s32.totalorder %s34, 0
      %p286 = por %p284, %p285
      %p287 = scmp.ne.s32.totalorder %s275, %s276
      %p288 = scmp.eq.s32.totalorder %s35, 1
      %p289 = por %p287, %p288
      %p291 = scmp.ne.s32.totalorder %s276, %s290
      %p292 = scmp.eq.s32.totalorder %s35, 0
      %p293 = por %p291, %p292
      %s295 = sadd.s32 %s294, 1
      %p298 = scmp.eq.s32.totalorder %s29, 1
      %p299 = scmp.ne.s32.totalorder %s294, %s296
      %p300 = scmp.eq.s32.totalorder %s29, 0
      %p301 = por %p299, %p300
      %p302 = scmp.ne.s32.totalorder %s294, %s296
      %p303 = scmp.eq.s32.totalorder %s34, 1
      %p304 = por %p302, %p303
      %p305 = scmp.ne.s32.totalorder %s296, %s297
      %p306 = scmp.eq.s32.totalorder %s34, 0
      %p307 = por %p305, %p306
      %p308 = scmp.ne.s32.totalorder %s296, %s297
      %p309 = scmp.eq.s32.totalorder %s35, 1
      %p310 = por %p308, %p309
      %p312 = scmp.ne.s32.totalorder %s297, %s311
      %p313 = scmp.eq.s32.totalorder %s35, 0
      %p314 = por %p312, %p313
      %s315 = ssub.s32 %s29, %s36
      %p316 = scmp.eq.s32.totalorder %s315, 0
      %s318 = sadd.s32 %s317, 1
      %s319 = scalar_select %p316, %s317, %s318
      %p322 = pneg %p316
      %p323 = scmp.eq.s32.totalorder %s29, 1
      %p324 = por %p322, %p323
      %p325 = scmp.ne.s32.totalorder %s317, %s320
      %p326 = scmp.eq.s32.totalorder %s29, 0
      %p327 = por %p325, %p326
      %p328 = scmp.ne.s32.totalorder %s317, %s320
      %p329 = scmp.eq.s32.totalorder %s34, 1
      %p330 = por %p328, %p329
      %p331 = scmp.ne.s32.totalorder %s320, %s321
      %p332 = scmp.eq.s32.totalorder %s34, 0
      %p333 = por %p331, %p332
      %p334 = scmp.ne.s32.totalorder %s320, %s321
      %p335 = scmp.eq.s32.totalorder %s35, 1
      %p336 = por %p334, %p335
      %p338 = scmp.ne.s32.totalorder %s321, %s337
      %p339 = scmp.eq.s32.totalorder %s35, 0
      %p340 = por %p338, %p339
      %p341 = scmp.le.s32.totalorder 1, %s29
      %p342 = scmp.lt.s32.totalorder %s29, 3
      %p343 = pnand %p341, %p342
      %p344 = pneg %p343
      // Predicated region
      $region9: #{tpu_custom_call.1} parent=5 // pred_check
        _
      $region10: #{tpu_custom_call.1} parent=5 // pred_check_branch
        %346 = sbr.rel (%p343) target = $region12
      $region11: #{tpu_custom_call.1} parent=5 // pred_region
        %s347 = ssub.s32 %s29, 1
        // Predicated region
        $region13: #{tpu_custom_call.1} parent=11 // pred_check
          %p348 = pneg %p76
        $region14: #{tpu_custom_call.1} parent=11 // pred_check_branch
          %350 = sbr.rel (%p348) target = $region16
        $region15: #{tpu_custom_call.1} parent=11 // pred_region
          _
        $region16: #{tpu_custom_call.1} parent=11 // pred_fallthru
          _
        // Predicated region
        $region17: #{tpu_custom_call.1} parent=11 // pred_check
          %p351 = pneg %p97
        $region18: #{tpu_custom_call.1} parent=11 // pred_check_branch
          %353 = sbr.rel (%p351) target = $region20
        $region19: #{tpu_custom_call.1} parent=11 // pred_region
          %355 = vsyncadd [#allocation7], 0
          %s356 = sshll.u32 %s2, 4
          %s357 = int_to_ptr.hbm [resolvable:$true] %s356
          %s358 = sshll.u32 [#allocation6], 4
          %s359 = int_to_ptr.vmem [resolvable:$true] %s358
          %364 = dma.hbm_to_vmem [thread:$0]  %s357, 11520, %s359, [#allocation7], 256, 256, 16
        $region20: #{tpu_custom_call.1} parent=11 // pred_fallthru
          _
        // Predicated region
        $region21: #{tpu_custom_call.1} parent=11 // pred_check
          %p365 = pneg %p118
        $region22: #{tpu_custom_call.1} parent=11 // pred_check_branch
          %367 = sbr.rel (%p365) target = $region24
        $region23: #{tpu_custom_call.1} parent=11 // pred_region
          _
        $region24: #{tpu_custom_call.1} parent=11 // pred_fallthru
          _
        // Predicated region
        $region25: #{tpu_custom_call.1} parent=11 // pred_check
          %p368 = pneg %p139
        $region26: #{tpu_custom_call.1} parent=11 // pred_check_branch
          %370 = sbr.rel (%p368) target = $region28
        $region27: #{tpu_custom_call.1} parent=11 // pred_region
          _
        $region28: #{tpu_custom_call.1} parent=11 // pred_fallthru
          _
        // Predicated region
        $region29: #{tpu_custom_call.1} parent=11 // pred_check
          %p371 = pneg %p160
        $region30: #{tpu_custom_call.1} parent=11 // pred_check_branch
          %373 = sbr.rel (%p371) target = $region32
        $region31: #{tpu_custom_call.1} parent=11 // pred_region
          %375 = vsyncadd [#allocation7], 0
          %s376 = sshll.u32 %s5, 4
          %s377 = int_to_ptr.hbm [resolvable:$true] %s376
          %s378 = sshll.u32 [#allocation8], 4
          %s379 = int_to_ptr.vmem [resolvable:$true] %s378
          %384 = dma.hbm_to_vmem [thread:$0]  %s377, 9216, %s379, [#allocation7], 256, 256, 16
        $region32: #{tpu_custom_call.1} parent=11 // pred_fallthru
          _
        // Predicated region
        $region33: #{tpu_custom_call.1} parent=11 // pred_check
          %p385 = pneg %p181
        $region34: #{tpu_custom_call.1} parent=11 // pred_check_branch
          %387 = sbr.rel (%p385) target = $region36
        $region35: #{tpu_custom_call.1} parent=11 // pred_region
          _
        $region36: #{tpu_custom_call.1} parent=11 // pred_fallthru
          _
        // Predicated region
        $region37: #{tpu_custom_call.1} parent=11 // pred_check
          %p388 = pneg %p202
        $region38: #{tpu_custom_call.1} parent=11 // pred_check_branch
          %390 = sbr.rel (%p388) target = $region40
        $region39: #{tpu_custom_call.1} parent=11 // pred_region
          _
        $region40: #{tpu_custom_call.1} parent=11 // pred_fallthru
          _
        // Predicated region
        $region41: #{tpu_custom_call.1} parent=11 // pred_check
          %p391 = pneg %p223
        $region42: #{tpu_custom_call.1} parent=11 // pred_check_branch
          %393 = sbr.rel (%p391) target = $region44
        $region43: #{tpu_custom_call.1} parent=11 // pred_region
          %395 = vsyncadd [#allocation10], 0
          %s396 = sshll.u32 %s8, 4
          %s397 = int_to_ptr.hbm [resolvable:$true] %s396
          %s398 = sshll.u32 [#allocation9], 4
          %s399 = int_to_ptr.vmem [resolvable:$true] %s398
          %404 = dma.hbm_to_vmem [thread:$0]  %s397, 11520, %s399, [#allocation10], 256, 256, 16
        $region44: #{tpu_custom_call.1} parent=11 // pred_fallthru
          _
        // Predicated region
        $region45: #{tpu_custom_call.1} parent=11 // pred_check
          %p405 = pneg %p244
        $region46: #{tpu_custom_call.1} parent=11 // pred_check_branch
          %407 = sbr.rel (%p405) target = $region48
        $region47: #{tpu_custom_call.1} parent=11 // pred_region
          %409 = vsyncadd [#allocation10], 0
          %s410 = sshll.u32 %s9, 4
          %s411 = int_to_ptr.hbm [resolvable:$true] %s410
          %s412 = sshll.u32 [#allocation11], 4
          %s413 = int_to_ptr.vmem [resolvable:$true] %s412
          %418 = dma.hbm_to_vmem [thread:$0]  %s411, 512, %s413, [#allocation10], 128, 128, 8
        $region48: #{tpu_custom_call.1} parent=11 // pred_fallthru
          _
        // Predicated region
        $region49: #{tpu_custom_call.1} parent=11 // pred_check
          %p419 = pneg %p265
        $region50: #{tpu_custom_call.1} parent=11 // pred_check_branch
          %421 = sbr.rel (%p419) target = $region52
        $region51: #{tpu_custom_call.1} parent=11 // pred_region
          %423 = vsyncadd [#allocation13], 0
          %s424 = sshll.u32 %s10, 4
          %s425 = int_to_ptr.hbm [resolvable:$true] %s424
          %s426 = sshll.u32 [#allocation12], 4
          %s427 = int_to_ptr.vmem [resolvable:$true] %s426
          %432 = dma.hbm_to_vmem [thread:$0]  %s425, 512, %s427, [#allocation13], 128, 128, 8
        $region52: #{tpu_custom_call.1} parent=11 // pred_fallthru
          _
        // Predicated region
        $region53: #{tpu_custom_call.1} parent=11 // pred_check
          %p433 = pneg %p286
        $region54: #{tpu_custom_call.1} parent=11 // pred_check_branch
          %435 = sbr.rel (%p433) target = $region56
        $region55: #{tpu_custom_call.1} parent=11 // pred_region
          %437 = vsyncadd [#allocation13], 0
          %s438 = sshll.u32 %s11, 4
          %s439 = int_to_ptr.hbm [resolvable:$true] %s438
          %s440 = sshll.u32 [#allocation14], 4
          %s441 = int_to_ptr.vmem [resolvable:$true] %s440
          %446 = dma.hbm_to_vmem [thread:$0]  %s439, 9216, %s441, [#allocation13], 256, 256, 16
        $region56: #{tpu_custom_call.1} parent=11 // pred_fallthru
          _
        // Predicated region
        $region57: #{tpu_custom_call.1} parent=11 // pred_check
          %p447 = pneg %p307
        $region58: #{tpu_custom_call.1} parent=11 // pred_check_branch
          %449 = sbr.rel (%p447) target = $region60
        $region59: #{tpu_custom_call.1} parent=11 // pred_region
          %451 = vsyncadd [#allocation16], 0
          %s452 = sshll.u32 %s12, 4
          %s453 = int_to_ptr.hbm [resolvable:$true] %s452
          %s454 = sshll.u32 [#allocation15], 4
          %s455 = int_to_ptr.vmem [resolvable:$true] %s454
          %460 = dma.hbm_to_vmem [thread:$0]  %s453, 384, %s455, [#allocation16], 128, 128, 8
        $region60: #{tpu_custom_call.1} parent=11 // pred_fallthru
          _
      $region12: #{tpu_custom_call.1} parent=5 // pred_fallthru
        _
      %p461 = scmp.lt.s32.totalorder %s29, 2
      // Predicated region
      $region61: #{tpu_custom_call.1} parent=5 // pred_check
        %p462 = pneg %p461
      $region62: #{tpu_custom_call.1} parent=5 // pred_check_branch
        %464 = sbr.rel (%p462) target = $region64
      $region63: #{tpu_custom_call.1} parent=5 // pred_region
        // Predicated region
        $region65: #{tpu_custom_call.1} parent=63 // pred_check
          %p465 = pneg %p49
        $region66: #{tpu_custom_call.1} parent=63 // pred_check_branch
          %467 = sbr.rel (%p465) target = $region68
        $region67: #{tpu_custom_call.1} parent=63 // pred_region
          %s468 = sand.u32 %s39, 1
          %s469 = scalar_lea.sflag [#allocation4], %s468
          %s470 = sand.u32 %s39, 1
          %s471 = smul.addr %s470, 8
          %s472 = scalar_lea.vmem [#allocation3], %s471
          %s473 = smul.u32 2, %s29
          %475 = vsyncadd %s469, 0
          %s476 = smul.addr %s473, 4
          %s477 = scalar_lea.hbm %s0, %s476
          %s479 = sshll.u32 %s477, 4
          %s480 = int_to_ptr.hbm [resolvable:$true] %s479
          %s481 = sshll.u32 %s472, 4
          %s482 = int_to_ptr.vmem [resolvable:$true] %s481
          %484 = dma.hbm_to_vmem [thread:$0]  %s480, 128, %s482, %s469
        $region68: #{tpu_custom_call.1} parent=63 // pred_fallthru
          _
      $region64: #{tpu_custom_call.1} parent=5 // pred_fallthru
        _
      %p485 = scmp.le.s32.totalorder 1, %s29
      %p486 = scmp.lt.s32.totalorder %s29, 3
      %p487 = pnand %p485, %p486
      %p488 = pneg %p487
      // Predicated region
      $region69: #{tpu_custom_call.1} parent=5 // pred_check
        _
      $region70: #{tpu_custom_call.1} parent=5 // pred_check_branch
        %490 = sbr.rel (%p487) target = $region72
      $region71: #{tpu_custom_call.1} parent=5 // pred_region
        %s491 = ssub.s32 %s29, 1
        %s492 = sand.u32 %s42, 1
        %s493 = scalar_lea.sflag [#allocation4], %s492
        %s494 = sand.u32 %s42, 1
        %s495 = smul.addr %s494, 8
        %s496 = scalar_lea.vmem [#allocation3], %s495
        // Predicated region
        $region73: #{tpu_custom_call.1} parent=71 // pred_check
          %p497 = pneg %p55
        $region74: #{tpu_custom_call.1} parent=71 // pred_check_branch
          %499 = sbr.rel (%p497) target = $region76
        $region75: #{tpu_custom_call.1} parent=71 // pred_region
          %501 = dma.done %s493, 128
        $region76: #{tpu_custom_call.1} parent=71 // pred_fallthru
          _
        // Predicated region
        $region77: #{tpu_custom_call.1} parent=71 // pred_check
          %p502 = pneg %p97
        $region78: #{tpu_custom_call.1} parent=71 // pred_check_branch
          %504 = sbr.rel (%p502) target = $region80
        $region79: #{tpu_custom_call.1} parent=71 // pred_region
          %506 = dma.done [#allocation7], 11520
        $region80: #{tpu_custom_call.1} parent=71 // pred_fallthru
          _
        // Predicated region
        $region81: #{tpu_custom_call.1} parent=71 // pred_check
          %p507 = pneg %p160
        $region82: #{tpu_custom_call.1} parent=71 // pred_check_branch
          %509 = sbr.rel (%p507) target = $region84
        $region83: #{tpu_custom_call.1} parent=71 // pred_region
          %511 = dma.done [#allocation7], 9216
        $region84: #{tpu_custom_call.1} parent=71 // pred_fallthru
          _
        // Predicated region
        $region85: #{tpu_custom_call.1} parent=71 // pred_check
          %p512 = pneg %p223
        $region86: #{tpu_custom_call.1} parent=71 // pred_check_branch
          %514 = sbr.rel (%p512) target = $region88
        $region87: #{tpu_custom_call.1} parent=71 // pred_region
          %516 = dma.done [#allocation10], 11520
        $region88: #{tpu_custom_call.1} parent=71 // pred_fallthru
          _
        // Predicated region
        $region89: #{tpu_custom_call.1} parent=71 // pred_check
          %p517 = pneg %p244
        $region90: #{tpu_custom_call.1} parent=71 // pred_check_branch
          %519 = sbr.rel (%p517) target = $region92
        $region91: #{tpu_custom_call.1} parent=71 // pred_region
          %521 = dma.done [#allocation10], 512
        $region92: #{tpu_custom_call.1} parent=71 // pred_fallthru
          _
        // Predicated region
        $region93: #{tpu_custom_call.1} parent=71 // pred_check
          %p522 = pneg %p265
        $region94: #{tpu_custom_call.1} parent=71 // pred_check_branch
          %524 = sbr.rel (%p522) target = $region96
        $region95: #{tpu_custom_call.1} parent=71 // pred_region
          %526 = dma.done [#allocation13], 512
        $region96: #{tpu_custom_call.1} parent=71 // pred_fallthru
          _
        // Predicated region
        $region97: #{tpu_custom_call.1} parent=71 // pred_check
          %p527 = pneg %p286
        $region98: #{tpu_custom_call.1} parent=71 // pred_check_branch
          %529 = sbr.rel (%p527) target = $region100
        $region99: #{tpu_custom_call.1} parent=71 // pred_region
          %531 = dma.done [#allocation13], 9216
        $region100: #{tpu_custom_call.1} parent=71 // pred_fallthru
          _
        // Predicated region
        $region101: #{tpu_custom_call.1} parent=71 // pred_check
          %p532 = pneg %p307
        $region102: #{tpu_custom_call.1} parent=71 // pred_check_branch
          %534 = sbr.rel (%p532) target = $region104
        $region103: #{tpu_custom_call.1} parent=71 // pred_region
          %536 = dma.done [#allocation16], 384
        $region104: #{tpu_custom_call.1} parent=71 // pred_fallthru
          _
        %s537 = sand.u32 %s42, 1
        %s538 = scalar_lea.sflag [#allocation4], %s537
        %s539 = sand.u32 %s42, 1
        %s540 = smul.addr %s539, 8
        %s541 = scalar_lea.vmem [#allocation3], %s540
        %p542 = pneg %p55
        %p543 = pneg %p52
        %p544 = pneg %p76
        %p545 = pneg %p73
        %p546 = pneg %p97
        %p547 = pneg %p94
        %p548 = pneg %p118
        %p549 = pneg %p115
        %p550 = pneg %p139
        %p551 = pneg %p136
        %p552 = pneg %p160
        %p553 = pneg %p157
        %p554 = pneg %p181
        %p555 = pneg %p178
        %p556 = pneg %p202
        %p557 = pneg %p199
        %p558 = pneg %p223
        %p559 = pneg %p220
        %p560 = pneg %p244
        %p561 = pneg %p241
        %p562 = pneg %p265
        %p563 = pneg %p262
        %p564 = pneg %p286
        %p565 = pneg %p283
        %p566 = pneg %p307
        %p567 = pneg %p304
        %p568 = pneg %p333
        %p569 = pneg %p330
        %s570 = sand.u32 %s320, 1
        %s571 = scalar_lea.sflag [#allocation5], %s570
        %s572 = sand.u32 %s320, 1
        %s573 = smul.addr %s572, 48
        %s574 = scalar_lea.vmem [#allocation17], %s573
        %s575 = smul.u32 2, %s34
        %s576 = smul.u32 2, %s34
        %v577 = vld [vmem:[%s496] sm:$0xff]
        %v578 = vld [vmem:[%s1] sm:$0xff]
        %v579 = vld [vmem:[%s1 + $0x8] sm:$0xff]
        %v580 = vld [vmem:[%s1 + $0x10] sm:$0xff]
        %v581 = vld [vmem:[%s1 + $0x18] sm:$0xff]
        %v582 = vld [vmem:[%s1 + $0x20] sm:$0xff]
        %584 = vst [vmem:[#allocation1] ss:$2 sm:$0xff] %v577
        %v585 = vld.sshfl [vmem:[#allocation1] sm:$0xff pattern:$0x75316420]
        %v586 = vld.sshfl [vmem:[#allocation1 + $0x8] sm:$0xff pattern:$0x75316420]
        %vm587 = vcmask 31744
        %v589 = vsel %vm587, %v578, 0
        %v592 = vsel %vm587, %v579, 0
        %v595 = vsel %vm587, %v580, 0
        %v598 = vsel %vm587, %v581, 0
        %v601 = vsel %vm587, %v582, 0
        %vm603 = vcmask 1043456
        %v604 = vsel %vm603, %v585, 0
        %v606 = vsel %vm603, %v586, 0
        %608 = vmatpush.msra.mxu0 0.0
        %609 = vmatpush.msra.mxu0 0.0
        %610 = vmatpush.msra.mxu0 0.0
        %611 = vmatpush.msra.mxu0 0.0
        %612 = vmatpush.msra.mxu0 0.0
        %613 = vmatpush.msra.mxu0 0.0
        %614 = vmatpush.msra.mxu0 0.0
        %615 = vmatpush.msra.mxu0 0.0
        %616 = vmatpush.msra.mxu0 0.0
        %617 = vmatpush.msra.mxu0 0.0
        %618 = vmatpush.msra.mxu0 0.0
        %619 = vmatpush.msra.mxu0 0.0
        %620 = vmatpush.msra.mxu0 0.0
        %621 = vmatpush.msra.mxu0 0.0
        %622 = vmatpush.msra.mxu0 0.0
        %623 = vmatpush.msra.mxu0 %v604
        %624 = vmatmul.f32.gmra.mxu0 %v589
        %v625 = vpop.f32.mrf.mxu0
        %v626 = vadd.f32 0.0, %v625
        %627 = vmatmul.f32.gmra.mxu0 %v592
        %v628 = vpop.f32.mrf.mxu0
        %v629 = vadd.f32 0.0, %v628
        %630 = vmatmul.f32.gmra.mxu0 %v595
        %v631 = vpop.f32.mrf.mxu0
        %v632 = vadd.f32 0.0, %v631
        %633 = vmatmul.f32.gmra.mxu0 %v598
        %v634 = vpop.f32.mrf.mxu0
        %v635 = vadd.f32 0.0, %v634
        %636 = vmatmul.f32.gmra.mxu0 %v601
        %v637 = vpop.f32.mrf.mxu0
        %v638 = vadd.f32 0.0, %v637
        %639 = vdwg.mxu0
        %640 = vmatpush.msra.mxu0 0.0
        %641 = vmatpush.msra.mxu0 0.0
        %642 = vmatpush.msra.mxu0 0.0
        %643 = vmatpush.msra.mxu0 0.0
        %644 = vmatpush.msra.mxu0 0.0
        %645 = vmatpush.msra.mxu0 0.0
        %646 = vmatpush.msra.mxu0 0.0
        %647 = vmatpush.msra.mxu0 0.0
        %648 = vmatpush.msra.mxu0 0.0
        %649 = vmatpush.msra.mxu0 0.0
        %650 = vmatpush.msra.mxu0 0.0
        %651 = vmatpush.msra.mxu0 0.0
        %652 = vmatpush.msra.mxu0 0.0
        %653 = vmatpush.msra.mxu0 0.0
        %654 = vmatpush.msra.mxu0 0.0
        %655 = vmatpush.msra.mxu0 %v606
        %656 = vmatmul.f32.gmra.mxu0 %v589
        %v657 = vpop.f32.mrf.mxu0
        %v658 = vadd.f32 0.0, %v657
        %659 = vmatmul.f32.gmra.mxu0 %v592
        %v660 = vpop.f32.mrf.mxu0
        %v661 = vadd.f32 0.0, %v660
        %662 = vmatmul.f32.gmra.mxu0 %v595
        %v663 = vpop.f32.mrf.mxu0
        %v664 = vadd.f32 0.0, %v663
        %665 = vmatmul.f32.gmra.mxu0 %v598
        %v666 = vpop.f32.mrf.mxu0
        %v667 = vadd.f32 0.0, %v666
        %668 = vmatmul.f32.gmra.mxu0 %v601
        %v669 = vpop.f32.mrf.mxu0
        %v670 = vadd.f32 0.0, %v669
        %671 = vdwg.mxu0
        %v672 = vmax.f32 %v626, 0.0
        %v673 = vmax.f32 %v658, 0.0
        %v674 = vmax.f32 %v629, 0.0
        %v675 = vmax.f32 %v661, 0.0
        %v676 = vmax.f32 %v632, 0.0
        %v677 = vmax.f32 %v664, 0.0
        %v678 = vmax.f32 %v635, 0.0
        %v679 = vmax.f32 %v667, 0.0
        %v680 = vmax.f32 %v638, 0.0
        %v681 = vmax.f32 %v670, 0.0
        %682 = vrot.lane.b32.xlu0 %v672, 17
        %v683 = vpop.permute.xlu0 %682
        %684 = vrot.lane.b32.xlu0 %v673, 17
        %v685 = vpop.permute.xlu0 %684
        %v686 = vlaneseq
        %v687 = vand.u32 %v686, 127
        %vm688 = vcmp.lt.s32.totalorder %v687, 17
        %v689 = vsel %vm688, %v683, %v685
        %v690 = vsel %vm688, %v685, %v683
        %v691 = vld [vmem:[#allocation6] sm:$0xff]
        %v692 = vld [vmem:[#allocation6 + $0x8] sm:$0xff]
        %v693 = vmul.f32 %v690, %v691
        %v694 = vmul.f32 %v689, %v692
        %695 = vrot.lane.b32.xlu0 %v672, 16
        %v696 = vpop.permute.xlu0 %695
        %697 = vrot.lane.b32.xlu0 %v673, 16
        %v698 = vpop.permute.xlu0 %697
        %vm699 = vcmp.lt.s32.totalorder %v687, 16
        %v700 = vsel %vm699, %v696, %v698
        %v701 = vsel %vm699, %v698, %v696
        %s702 = scalar_lea.vmem [#allocation6], 16
        %v703 = vld [vmem:[%s702] sm:$0xff]
        %v704 = vld [vmem:[%s702 + $0x8] sm:$0xff]
        %v705 = vmul.f32 %v701, %v703
        %v706 = vmul.f32 %v700, %v704
        %707 = vrot.lane.b32.xlu0 %v672, 15
        %v708 = vpop.permute.xlu0 %707
        %709 = vrot.lane.b32.xlu0 %v673, 15
        %v710 = vpop.permute.xlu0 %709
        %vm711 = vcmp.lt.s32.totalorder %v687, 15
        %v712 = vsel %vm711, %v708, %v710
        %v713 = vsel %vm711, %v710, %v708
        %s714 = scalar_lea.vmem [#allocation6], 32
        %v715 = vld [vmem:[%s714] sm:$0xff]
        %v716 = vld [vmem:[%s714 + $0x8] sm:$0xff]
        %v717 = vmul.f32 %v713, %v715
        %v718 = vmul.f32 %v712, %v716
        %719 = vrot.lane.b32.xlu0 %v672, 1
        %v720 = vpop.permute.xlu0 %719
        %721 = vrot.lane.b32.xlu0 %v673, 1
        %v722 = vpop.permute.xlu0 %721
        %vm723 = vcmp.lt.s32.totalorder %v687, 1
        %v724 = vsel %vm723, %v720, %v722
        %v725 = vsel %vm723, %v722, %v720
        %s726 = scalar_lea.vmem [#allocation6], 48
        %v727 = vld [vmem:[%s726] sm:$0xff]
        %v728 = vld [vmem:[%s726 + $0x8] sm:$0xff]
        %v729 = vmul.f32 %v725, %v727
        %v730 = vmul.f32 %v724, %v728
        %s731 = scalar_lea.vmem [#allocation6], 64
        %v732 = vld [vmem:[%s731] sm:$0xff]
        %v733 = vld [vmem:[%s731 + $0x8] sm:$0xff]
        %v734 = vmul.f32 %v672, %v732
        %v735 = vmul.f32 %v673, %v733
        %736 = vrot.lane.b32.xlu0 %v672, 127
        %v737 = vpop.permute.xlu0 %736
        %738 = vrot.lane.b32.xlu0 %v673, 127
        %v739 = vpop.permute.xlu0 %738
        %vm740 = vcmp.lt.s32.totalorder %v687, 127
        %v741 = vsel %vm740, %v737, %v739
        %v742 = vsel %vm740, %v739, %v737
        %s743 = scalar_lea.vmem [#allocation6], 80
        %v744 = vld [vmem:[%s743] sm:$0xff]
        %v745 = vld [vmem:[%s743 + $0x8] sm:$0xff]
        %v746 = vmul.f32 %v741, %v744
        %v747 = vmul.f32 %v742, %v745
        %748 = vrot.lane.b32.xlu0 %v672, 113
        %v749 = vpop.permute.xlu0 %748
        %750 = vrot.lane.b32.xlu0 %v673, 113
        %v751 = vpop.permute.xlu0 %750
        %vm752 = vcmp.lt.s32.totalorder %v687, 113
        %v753 = vsel %vm752, %v749, %v751
        %v754 = vsel %vm752, %v751, %v749
        %s755 = scalar_lea.vmem [#allocation6], 96
        %v756 = vld [vmem:[%s755] sm:$0xff]
        %v757 = vld [vmem:[%s755 + $0x8] sm:$0xff]
        %v758 = vmul.f32 %v753, %v756
        %v759 = vmul.f32 %v754, %v757
        %760 = vrot.lane.b32.xlu0 %v672, 112
        %v761 = vpop.permute.xlu0 %760
        %762 = vrot.lane.b32.xlu0 %v673, 112
        %v763 = vpop.permute.xlu0 %762
        %vm764 = vcmp.lt.s32.totalorder %v687, 112
        %v765 = vsel %vm764, %v761, %v763
        %v766 = vsel %vm764, %v763, %v761
        %s767 = scalar_lea.vmem [#allocation6], 112
        %v768 = vld [vmem:[%s767] sm:$0xff]
        %v769 = vld [vmem:[%s767 + $0x8] sm:$0xff]
        %v770 = vmul.f32 %v765, %v768
        %v771 = vmul.f32 %v766, %v769
        %772 = vrot.lane.b32.xlu0 %v672, 111
        %v773 = vpop.permute.xlu0 %772
        %774 = vrot.lane.b32.xlu0 %v673, 111
        %v775 = vpop.permute.xlu0 %774
        %vm776 = vcmp.lt.s32.totalorder %v687, 111
        %v777 = vsel %vm776, %v773, %v775
        %v778 = vsel %vm776, %v775, %v773
        %s779 = scalar_lea.vmem [#allocation6], 128
        %v780 = vld [vmem:[%s779] sm:$0xff]
        %v781 = vld [vmem:[%s779 + $0x8] sm:$0xff]
        %v782 = vmul.f32 %v777, %v780
        %v783 = vmul.f32 %v778, %v781
        %v784 = vadd.f32 %v693, %v705
        %v785 = vadd.f32 %v694, %v706
        %v786 = vadd.f32 %v717, %v729
        %v787 = vadd.f32 %v718, %v730
        %v788 = vadd.f32 %v734, %v746
        %v789 = vadd.f32 %v735, %v747
        %v790 = vadd.f32 %v758, %v770
        %v791 = vadd.f32 %v759, %v771
        %v792 = vadd.f32 %v784, %v786
        %v793 = vadd.f32 %v785, %v787
        %v794 = vadd.f32 %v788, %v790
        %v795 = vadd.f32 %v789, %v791
        %v796 = vadd.f32 %v792, %v794
        %v797 = vadd.f32 %v793, %v795
        %v798 = vadd.f32 %v796, %v782
        %v799 = vadd.f32 %v797, %v783
        %800 = vst [vmem:[#allocation2] sm:$0xff] %v798
        %801 = vst [vmem:[#allocation2 + $0x8] sm:$0xff] %v799
        %v802 = vadd.f32 %v798, %v674
        %v803 = vadd.f32 %v799, %v675
        %804 = vrot.lane.b32.xlu0 %v802, 17
        %v805 = vpop.permute.xlu0 %804
        %806 = vrot.lane.b32.xlu0 %v803, 17
        %v807 = vpop.permute.xlu0 %806
        %v808 = vsel %vm688, %v805, %v807
        %v809 = vsel %vm688, %v807, %v805
        %s810 = scalar_lea.vmem [#allocation6], 144
        %v811 = vld [vmem:[%s810] sm:$0xff]
        %v812 = vld [vmem:[%s810 + $0x8] sm:$0xff]
        %v813 = vmul.f32 %v809, %v811
        %v814 = vmul.f32 %v808, %v812
        %815 = vrot.lane.b32.xlu0 %v802, 16
        %v816 = vpop.permute.xlu0 %815
        %817 = vrot.lane.b32.xlu0 %v803, 16
        %v818 = vpop.permute.xlu0 %817
        %v819 = vsel %vm699, %v816, %v818
        %v820 = vsel %vm699, %v818, %v816
        %s821 = scalar_lea.vmem [#allocation6], 160
        %v822 = vld [vmem:[%s821] sm:$0xff]
        %v823 = vld [vmem:[%s821 + $0x8] sm:$0xff]
        %v824 = vmul.f32 %v820, %v822
        %v825 = vmul.f32 %v819, %v823
        %826 = vrot.lane.b32.xlu0 %v802, 15
        %v827 = vpop.permute.xlu0 %826
        %828 = vrot.lane.b32.xlu0 %v803, 15
        %v829 = vpop.permute.xlu0 %828
        %v830 = vsel %vm711, %v827, %v829
        %v831 = vsel %vm711, %v829, %v827
        %s832 = scalar_lea.vmem [#allocation6], 176
        %v833 = vld [vmem:[%s832] sm:$0xff]
        %v834 = vld [vmem:[%s832 + $0x8] sm:$0xff]
        %v835 = vmul.f32 %v831, %v833
        %v836 = vmul.f32 %v830, %v834
        %837 = vrot.lane.b32.xlu0 %v802, 1
        %v838 = vpop.permute.xlu0 %837
        %839 = vrot.lane.b32.xlu0 %v803, 1
        %v840 = vpop.permute.xlu0 %839
        %v841 = vsel %vm723, %v838, %v840
        %v842 = vsel %vm723, %v840, %v838
        %s843 = scalar_lea.vmem [#allocation6], 192
        %v844 = vld [vmem:[%s843] sm:$0xff]
        %v845 = vld [vmem:[%s843 + $0x8] sm:$0xff]
        %v846 = vmul.f32 %v842, %v844
        %v847 = vmul.f32 %v841, %v845
        %s848 = scalar_lea.vmem [#allocation6], 208
        %v849 = vld [vmem:[%s848] sm:$0xff]
        %v850 = vld [vmem:[%s848 + $0x8] sm:$0xff]
        %v851 = vmul.f32 %v802, %v849
        %v852 = vmul.f32 %v803, %v850
        %853 = vrot.lane.b32.xlu0 %v802, 127
        %v854 = vpop.permute.xlu0 %853
        %855 = vrot.lane.b32.xlu0 %v803, 127
        %v856 = vpop.permute.xlu0 %855
        %v857 = vsel %vm740, %v854, %v856
        %v858 = vsel %vm740, %v856, %v854
        %s859 = scalar_lea.vmem [#allocation6], 224
        %v860 = vld [vmem:[%s859] sm:$0xff]
        %v861 = vld [vmem:[%s859 + $0x8] sm:$0xff]
        %v862 = vmul.f32 %v857, %v860
        %v863 = vmul.f32 %v858, %v861
        %864 = vrot.lane.b32.xlu0 %v802, 113
        %v865 = vpop.permute.xlu0 %864
        %866 = vrot.lane.b32.xlu0 %v803, 113
        %v867 = vpop.permute.xlu0 %866
        %v868 = vsel %vm752, %v865, %v867
        %v869 = vsel %vm752, %v867, %v865
        %s870 = scalar_lea.vmem [#allocation6], 240
        %v871 = vld [vmem:[%s870] sm:$0xff]
        %v872 = vld [vmem:[%s870 + $0x8] sm:$0xff]
        %v873 = vmul.f32 %v868, %v871
        %v874 = vmul.f32 %v869, %v872
        %875 = vrot.lane.b32.xlu0 %v802, 112
        %v876 = vpop.permute.xlu0 %875
        %877 = vrot.lane.b32.xlu0 %v803, 112
        %v878 = vpop.permute.xlu0 %877
        %v879 = vsel %vm764, %v876, %v878
        %v880 = vsel %vm764, %v878, %v876
        %s881 = scalar_lea.vmem [#allocation6], 256
        %v882 = vld [vmem:[%s881] sm:$0xff]
        %v883 = vld [vmem:[%s881 + $0x8] sm:$0xff]
        %v884 = vmul.f32 %v879, %v882
        %v885 = vmul.f32 %v880, %v883
        %886 = vrot.lane.b32.xlu0 %v802, 111
        %v887 = vpop.permute.xlu0 %886
        %888 = vrot.lane.b32.xlu0 %v803, 111
        %v889 = vpop.permute.xlu0 %888
        %v890 = vsel %vm776, %v887, %v889
        %v891 = vsel %vm776, %v889, %v887
        %s892 = scalar_lea.vmem [#allocation6], 272
        %v893 = vld [vmem:[%s892] sm:$0xff]
        %v894 = vld [vmem:[%s892 + $0x8] sm:$0xff]
        %v895 = vmul.f32 %v890, %v893
        %v896 = vmul.f32 %v891, %v894
        %v897 = vadd.f32 %v813, %v824
        %v898 = vadd.f32 %v814, %v825
        %v899 = vadd.f32 %v835, %v846
        %v900 = vadd.f32 %v836, %v847
        %v901 = vadd.f32 %v851, %v862
        %v902 = vadd.f32 %v852, %v863
        %v903 = vadd.f32 %v873, %v884
        %v904 = vadd.f32 %v874, %v885
        %v905 = vadd.f32 %v897, %v899
        %v906 = vadd.f32 %v898, %v900
        %v907 = vadd.f32 %v901, %v903
        %v908 = vadd.f32 %v902, %v904
        %v909 = vadd.f32 %v905, %v907
        %v910 = vadd.f32 %v906, %v908
        %v911 = vadd.f32 %v909, %v895
        %v912 = vadd.f32 %v910, %v896
        %913 = vst [vmem:[#allocation2 + $0x10] sm:$0xff] %v911
        %914 = vst [vmem:[#allocation2 + $0x18] sm:$0xff] %v912
        %v915 = vadd.f32 %v911, %v676
        %v916 = vadd.f32 %v912, %v677
        %917 = vrot.lane.b32.xlu0 %v915, 17
        %v918 = vpop.permute.xlu0 %917
        %919 = vrot.lane.b32.xlu0 %v916, 17
        %v920 = vpop.permute.xlu0 %919
        %v921 = vsel %vm688, %v918, %v920
        %v922 = vsel %vm688, %v920, %v918
        %s923 = scalar_lea.vmem [#allocation6], 288
        %v924 = vld [vmem:[%s923] sm:$0xff]
        %v925 = vld [vmem:[%s923 + $0x8] sm:$0xff]
        %v926 = vmul.f32 %v922, %v924
        %v927 = vmul.f32 %v921, %v925
        %928 = vrot.lane.b32.xlu0 %v915, 16
        %v929 = vpop.permute.xlu0 %928
        %930 = vrot.lane.b32.xlu0 %v916, 16
        %v931 = vpop.permute.xlu0 %930
        %v932 = vsel %vm699, %v929, %v931
        %v933 = vsel %vm699, %v931, %v929
        %s934 = scalar_lea.vmem [#allocation6], 304
        %v935 = vld [vmem:[%s934] sm:$0xff]
        %v936 = vld [vmem:[%s934 + $0x8] sm:$0xff]
        %v937 = vmul.f32 %v933, %v935
        %v938 = vmul.f32 %v932, %v936
        %939 = vrot.lane.b32.xlu0 %v915, 15
        %v940 = vpop.permute.xlu0 %939
        %941 = vrot.lane.b32.xlu0 %v916, 15
        %v942 = vpop.permute.xlu0 %941
        %v943 = vsel %vm711, %v940, %v942
        %v944 = vsel %vm711, %v942, %v940
        %s945 = scalar_lea.vmem [#allocation6], 320
        %v946 = vld [vmem:[%s945] sm:$0xff]
        %v947 = vld [vmem:[%s945 + $0x8] sm:$0xff]
        %v948 = vmul.f32 %v944, %v946
        %v949 = vmul.f32 %v943, %v947
        %950 = vrot.lane.b32.xlu0 %v915, 1
        %v951 = vpop.permute.xlu0 %950
        %952 = vrot.lane.b32.xlu0 %v916, 1
        %v953 = vpop.permute.xlu0 %952
        %v954 = vsel %vm723, %v951, %v953
        %v955 = vsel %vm723, %v953, %v951
        %s956 = scalar_lea.vmem [#allocation6], 336
        %v957 = vld [vmem:[%s956] sm:$0xff]
        %v958 = vld [vmem:[%s956 + $0x8] sm:$0xff]
        %v959 = vmul.f32 %v955, %v957
        %v960 = vmul.f32 %v954, %v958
        %s961 = scalar_lea.vmem [#allocation6], 352
        %v962 = vld [vmem:[%s961] sm:$0xff]
        %v963 = vld [vmem:[%s961 + $0x8] sm:$0xff]
        %v964 = vmul.f32 %v915, %v962
        %v965 = vmul.f32 %v916, %v963
        %966 = vrot.lane.b32.xlu0 %v915, 127
        %v967 = vpop.permute.xlu0 %966
        %968 = vrot.lane.b32.xlu0 %v916, 127
        %v969 = vpop.permute.xlu0 %968
        %v970 = vsel %vm740, %v967, %v969
        %v971 = vsel %vm740, %v969, %v967
        %s972 = scalar_lea.vmem [#allocation6], 368
        %v973 = vld [vmem:[%s972] sm:$0xff]
        %v974 = vld [vmem:[%s972 + $0x8] sm:$0xff]
        %v975 = vmul.f32 %v970, %v973
        %v976 = vmul.f32 %v971, %v974
        %977 = vrot.lane.b32.xlu0 %v915, 113
        %v978 = vpop.permute.xlu0 %977
        %979 = vrot.lane.b32.xlu0 %v916, 113
        %v980 = vpop.permute.xlu0 %979
        %v981 = vsel %vm752, %v978, %v980
        %v982 = vsel %vm752, %v980, %v978
        %s983 = scalar_lea.vmem [#allocation6], 384
        %v984 = vld [vmem:[%s983] sm:$0xff]
        %v985 = vld [vmem:[%s983 + $0x8] sm:$0xff]
        %v986 = vmul.f32 %v981, %v984
        %v987 = vmul.f32 %v982, %v985
        %988 = vrot.lane.b32.xlu0 %v915, 112
        %v989 = vpop.permute.xlu0 %988
        %990 = vrot.lane.b32.xlu0 %v916, 112
        %v991 = vpop.permute.xlu0 %990
        %v992 = vsel %vm764, %v989, %v991
        %v993 = vsel %vm764, %v991, %v989
        %s994 = scalar_lea.vmem [#allocation6], 400
        %v995 = vld [vmem:[%s994] sm:$0xff]
        %v996 = vld [vmem:[%s994 + $0x8] sm:$0xff]
        %v997 = vmul.f32 %v992, %v995
        %v998 = vmul.f32 %v993, %v996
        %999 = vrot.lane.b32.xlu0 %v915, 111
        %v1000 = vpop.permute.xlu0 %999
        %1001 = vrot.lane.b32.xlu0 %v916, 111
        %v1002 = vpop.permute.xlu0 %1001
        %v1003 = vsel %vm776, %v1000, %v1002
        %v1004 = vsel %vm776, %v1002, %v1000
        %s1005 = scalar_lea.vmem [#allocation6], 416
        %v1006 = vld [vmem:[%s1005] sm:$0xff]
        %v1007 = vld [vmem:[%s1005 + $0x8] sm:$0xff]
        %v1008 = vmul.f32 %v1003, %v1006
        %v1009 = vmul.f32 %v1004, %v1007
        %v1010 = vadd.f32 %v926, %v937
        %v1011 = vadd.f32 %v927, %v938
        %v1012 = vadd.f32 %v948, %v959
        %v1013 = vadd.f32 %v949, %v960
        %v1014 = vadd.f32 %v964, %v975
        %v1015 = vadd.f32 %v965, %v976
        %v1016 = vadd.f32 %v986, %v997
        %v1017 = vadd.f32 %v987, %v998
        %v1018 = vadd.f32 %v1010, %v1012
        %v1019 = vadd.f32 %v1011, %v1013
        %v1020 = vadd.f32 %v1014, %v1016
        %v1021 = vadd.f32 %v1015, %v1017
        %v1022 = vadd.f32 %v1018, %v1020
        %v1023 = vadd.f32 %v1019, %v1021
        %v1024 = vadd.f32 %v1022, %v1008
        %v1025 = vadd.f32 %v1023, %v1009
        %1026 = vst [vmem:[#allocation2 + $0x20] sm:$0xff] %v1024
        %1027 = vst [vmem:[#allocation2 + $0x28] sm:$0xff] %v1025
        %v1028 = vadd.f32 %v1024, %v678
        %v1029 = vadd.f32 %v1025, %v679
        %1030 = vrot.lane.b32.xlu0 %v1028, 17
        %v1031 = vpop.permute.xlu0 %1030
        %1032 = vrot.lane.b32.xlu0 %v1029, 17
        %v1033 = vpop.permute.xlu0 %1032
        %v1034 = vsel %vm688, %v1031, %v1033
        %v1035 = vsel %vm688, %v1033, %v1031
        %s1036 = scalar_lea.vmem [#allocation6], 432
        %v1037 = vld [vmem:[%s1036] sm:$0xff]
        %v1038 = vld [vmem:[%s1036 + $0x8] sm:$0xff]
        %v1039 = vmul.f32 %v1035, %v1037
        %v1040 = vmul.f32 %v1034, %v1038
        %1041 = vrot.lane.b32.xlu0 %v1028, 16
        %v1042 = vpop.permute.xlu0 %1041
        %1043 = vrot.lane.b32.xlu0 %v1029, 16
        %v1044 = vpop.permute.xlu0 %1043
        %v1045 = vsel %vm699, %v1042, %v1044
        %v1046 = vsel %vm699, %v1044, %v1042
        %s1047 = scalar_lea.vmem [#allocation6], 448
        %v1048 = vld [vmem:[%s1047] sm:$0xff]
        %v1049 = vld [vmem:[%s1047 + $0x8] sm:$0xff]
        %v1050 = vmul.f32 %v1046, %v1048
        %v1051 = vmul.f32 %v1045, %v1049
        %1052 = vrot.lane.b32.xlu0 %v1028, 15
        %v1053 = vpop.permute.xlu0 %1052
        %1054 = vrot.lane.b32.xlu0 %v1029, 15
        %v1055 = vpop.permute.xlu0 %1054
        %v1056 = vsel %vm711, %v1053, %v1055
        %v1057 = vsel %vm711, %v1055, %v1053
        %s1058 = scalar_lea.vmem [#allocation6], 464
        %v1059 = vld [vmem:[%s1058] sm:$0xff]
        %v1060 = vld [vmem:[%s1058 + $0x8] sm:$0xff]
        %v1061 = vmul.f32 %v1057, %v1059
        %v1062 = vmul.f32 %v1056, %v1060
        %1063 = vrot.lane.b32.xlu0 %v1028, 1
        %v1064 = vpop.permute.xlu0 %1063
        %1065 = vrot.lane.b32.xlu0 %v1029, 1
        %v1066 = vpop.permute.xlu0 %1065
        %v1067 = vsel %vm723, %v1064, %v1066
        %v1068 = vsel %vm723, %v1066, %v1064
        %s1069 = scalar_lea.vmem [#allocation6], 480
        %v1070 = vld [vmem:[%s1069] sm:$0xff]
        %v1071 = vld [vmem:[%s1069 + $0x8] sm:$0xff]
        %v1072 = vmul.f32 %v1068, %v1070
        %v1073 = vmul.f32 %v1067, %v1071
        %s1074 = scalar_lea.vmem [#allocation6], 496
        %v1075 = vld [vmem:[%s1074] sm:$0xff]
        %v1076 = vld [vmem:[%s1074 + $0x8] sm:$0xff]
        %v1077 = vmul.f32 %v1028, %v1075
        %v1078 = vmul.f32 %v1029, %v1076
        %1079 = vrot.lane.b32.xlu0 %v1028, 127
        %v1080 = vpop.permute.xlu0 %1079
        %1081 = vrot.lane.b32.xlu0 %v1029, 127
        %v1082 = vpop.permute.xlu0 %1081
        %v1083 = vsel %vm740, %v1080, %v1082
        %v1084 = vsel %vm740, %v1082, %v1080
        %s1085 = scalar_lea.vmem [#allocation6], 512
        %v1086 = vld [vmem:[%s1085] sm:$0xff]
        %v1087 = vld [vmem:[%s1085 + $0x8] sm:$0xff]
        %v1088 = vmul.f32 %v1083, %v1086
        %v1089 = vmul.f32 %v1084, %v1087
        %1090 = vrot.lane.b32.xlu0 %v1028, 113
        %v1091 = vpop.permute.xlu0 %1090
        %1092 = vrot.lane.b32.xlu0 %v1029, 113
        %v1093 = vpop.permute.xlu0 %1092
        %v1094 = vsel %vm752, %v1091, %v1093
        %v1095 = vsel %vm752, %v1093, %v1091
        %s1096 = scalar_lea.vmem [#allocation6], 528
        %v1097 = vld [vmem:[%s1096] sm:$0xff]
        %v1098 = vld [vmem:[%s1096 + $0x8] sm:$0xff]
        %v1099 = vmul.f32 %v1094, %v1097
        %v1100 = vmul.f32 %v1095, %v1098
        %1101 = vrot.lane.b32.xlu0 %v1028, 112
        %v1102 = vpop.permute.xlu0 %1101
        %1103 = vrot.lane.b32.xlu0 %v1029, 112
        %v1104 = vpop.permute.xlu0 %1103
        %v1105 = vsel %vm764, %v1102, %v1104
        %v1106 = vsel %vm764, %v1104, %v1102
        %s1107 = scalar_lea.vmem [#allocation6], 544
        %v1108 = vld [vmem:[%s1107] sm:$0xff]
        %v1109 = vld [vmem:[%s1107 + $0x8] sm:$0xff]
        %v1110 = vmul.f32 %v1105, %v1108
        %v1111 = vmul.f32 %v1106, %v1109
        %1112 = vrot.lane.b32.xlu0 %v1028, 111
        %v1113 = vpop.permute.xlu0 %1112
        %1114 = vrot.lane.b32.xlu0 %v1029, 111
        %v1115 = vpop.permute.xlu0 %1114
        %v1116 = vsel %vm776, %v1113, %v1115
        %v1117 = vsel %vm776, %v1115, %v1113
        %s1118 = scalar_lea.vmem [#allocation6], 560
        %v1119 = vld [vmem:[%s1118] sm:$0xff]
        %v1120 = vld [vmem:[%s1118 + $0x8] sm:$0xff]
        %v1121 = vmul.f32 %v1116, %v1119
        %v1122 = vmul.f32 %v1117, %v1120
        %v1123 = vadd.f32 %v1039, %v1050
        %v1124 = vadd.f32 %v1040, %v1051
        %v1125 = vadd.f32 %v1061, %v1072
        %v1126 = vadd.f32 %v1062, %v1073
        %v1127 = vadd.f32 %v1077, %v1088
        %v1128 = vadd.f32 %v1078, %v1089
        %v1129 = vadd.f32 %v1099, %v1110
        %v1130 = vadd.f32 %v1100, %v1111
        %v1131 = vadd.f32 %v1123, %v1125
        %v1132 = vadd.f32 %v1124, %v1126
        %v1133 = vadd.f32 %v1127, %v1129
        %v1134 = vadd.f32 %v1128, %v1130
        %v1135 = vadd.f32 %v1131, %v1133
        %v1136 = vadd.f32 %v1132, %v1134
        %v1137 = vadd.f32 %v1135, %v1121
        %v1138 = vadd.f32 %v1136, %v1122
        %1139 = vst [vmem:[#allocation2 + $0x30] sm:$0xff] %v1137
        %1140 = vst [vmem:[#allocation2 + $0x38] sm:$0xff] %v1138
        %v1141 = vadd.f32 %v1137, %v680
        %v1142 = vadd.f32 %v1138, %v681
        %1143 = vrot.lane.b32.xlu0 %v1141, 17
        %v1144 = vpop.permute.xlu0 %1143
        %1145 = vrot.lane.b32.xlu0 %v1142, 17
        %v1146 = vpop.permute.xlu0 %1145
        %v1147 = vsel %vm688, %v1144, %v1146
        %v1148 = vsel %vm688, %v1146, %v1144
        %s1149 = scalar_lea.vmem [#allocation6], 576
        %v1150 = vld [vmem:[%s1149] sm:$0xff]
        %v1151 = vld [vmem:[%s1149 + $0x8] sm:$0xff]
        %v1152 = vmul.f32 %v1148, %v1150
        %v1153 = vmul.f32 %v1147, %v1151
        %1154 = vrot.lane.b32.xlu0 %v1141, 16
        %v1155 = vpop.permute.xlu0 %1154
        %1156 = vrot.lane.b32.xlu0 %v1142, 16
        %v1157 = vpop.permute.xlu0 %1156
        %v1158 = vsel %vm699, %v1155, %v1157
        %v1159 = vsel %vm699, %v1157, %v1155
        %s1160 = scalar_lea.vmem [#allocation6], 592
        %v1161 = vld [vmem:[%s1160] sm:$0xff]
        %v1162 = vld [vmem:[%s1160 + $0x8] sm:$0xff]
        %v1163 = vmul.f32 %v1159, %v1161
        %v1164 = vmul.f32 %v1158, %v1162
        %1165 = vrot.lane.b32.xlu0 %v1141, 15
        %v1166 = vpop.permute.xlu0 %1165
        %1167 = vrot.lane.b32.xlu0 %v1142, 15
        %v1168 = vpop.permute.xlu0 %1167
        %v1169 = vsel %vm711, %v1166, %v1168
        %v1170 = vsel %vm711, %v1168, %v1166
        %s1171 = scalar_lea.vmem [#allocation6], 608
        %v1172 = vld [vmem:[%s1171] sm:$0xff]
        %v1173 = vld [vmem:[%s1171 + $0x8] sm:$0xff]
        %v1174 = vmul.f32 %v1170, %v1172
        %v1175 = vmul.f32 %v1169, %v1173
        %1176 = vrot.lane.b32.xlu0 %v1141, 1
        %v1177 = vpop.permute.xlu0 %1176
        %1178 = vrot.lane.b32.xlu0 %v1142, 1
        %v1179 = vpop.permute.xlu0 %1178
        %v1180 = vsel %vm723, %v1177, %v1179
        %v1181 = vsel %vm723, %v1179, %v1177
        %s1182 = scalar_lea.vmem [#allocation6], 624
        %v1183 = vld [vmem:[%s1182] sm:$0xff]
        %v1184 = vld [vmem:[%s1182 + $0x8] sm:$0xff]
        %v1185 = vmul.f32 %v1181, %v1183
        %v1186 = vmul.f32 %v1180, %v1184
        %s1187 = scalar_lea.vmem [#allocation6], 640
        %v1188 = vld [vmem:[%s1187] sm:$0xff]
        %v1189 = vld [vmem:[%s1187 + $0x8] sm:$0xff]
        %v1190 = vmul.f32 %v1141, %v1188
        %v1191 = vmul.f32 %v1142, %v1189
        %1192 = vrot.lane.b32.xlu0 %v1141, 127
        %v1193 = vpop.permute.xlu0 %1192
        %1194 = vrot.lane.b32.xlu0 %v1142, 127
        %v1195 = vpop.permute.xlu0 %1194
        %v1196 = vsel %vm740, %v1193, %v1195
        %v1197 = vsel %vm740, %v1195, %v1193
        %s1198 = scalar_lea.vmem [#allocation6], 656
        %v1199 = vld [vmem:[%s1198] sm:$0xff]
        %v1200 = vld [vmem:[%s1198 + $0x8] sm:$0xff]
        %v1201 = vmul.f32 %v1196, %v1199
        %v1202 = vmul.f32 %v1197, %v1200
        %1203 = vrot.lane.b32.xlu0 %v1141, 113
        %v1204 = vpop.permute.xlu0 %1203
        %1205 = vrot.lane.b32.xlu0 %v1142, 113
        %v1206 = vpop.permute.xlu0 %1205
        %v1207 = vsel %vm752, %v1204, %v1206
        %v1208 = vsel %vm752, %v1206, %v1204
        %s1209 = scalar_lea.vmem [#allocation6], 672
        %v1210 = vld [vmem:[%s1209] sm:$0xff]
        %v1211 = vld [vmem:[%s1209 + $0x8] sm:$0xff]
        %v1212 = vmul.f32 %v1207, %v1210
        %v1213 = vmul.f32 %v1208, %v1211
        %1214 = vrot.lane.b32.xlu0 %v1141, 112
        %v1215 = vpop.permute.xlu0 %1214
        %1216 = vrot.lane.b32.xlu0 %v1142, 112
        %v1217 = vpop.permute.xlu0 %1216
        %v1218 = vsel %vm764, %v1215, %v1217
        %v1219 = vsel %vm764, %v1217, %v1215
        %s1220 = scalar_lea.vmem [#allocation6], 688
        %v1221 = vld [vmem:[%s1220] sm:$0xff]
        %v1222 = vld [vmem:[%s1220 + $0x8] sm:$0xff]
        %v1223 = vmul.f32 %v1218, %v1221
        %v1224 = vmul.f32 %v1219, %v1222
        %1225 = vrot.lane.b32.xlu0 %v1141, 111
        %v1226 = vpop.permute.xlu0 %1225
        %1227 = vrot.lane.b32.xlu0 %v1142, 111
        %v1228 = vpop.permute.xlu0 %1227
        %v1229 = vsel %vm776, %v1226, %v1228
        %v1230 = vsel %vm776, %v1228, %v1226
        %s1231 = scalar_lea.vmem [#allocation6], 704
        %v1232 = vld [vmem:[%s1231] sm:$0xff]
        %v1233 = vld [vmem:[%s1231 + $0x8] sm:$0xff]
        %v1234 = vmul.f32 %v1229, %v1232
        %v1235 = vmul.f32 %v1230, %v1233
        %v1236 = vadd.f32 %v1152, %v1163
        %v1237 = vadd.f32 %v1153, %v1164
        %v1238 = vadd.f32 %v1174, %v1185
        %v1239 = vadd.f32 %v1175, %v1186
        %v1240 = vadd.f32 %v1190, %v1201
        %v1241 = vadd.f32 %v1191, %v1202
        %v1242 = vadd.f32 %v1212, %v1223
        %v1243 = vadd.f32 %v1213, %v1224
        %v1244 = vadd.f32 %v1236, %v1238
        %v1245 = vadd.f32 %v1237, %v1239
        %v1246 = vadd.f32 %v1240, %v1242
        %v1247 = vadd.f32 %v1241, %v1243
        %v1248 = vadd.f32 %v1244, %v1246
        %v1249 = vadd.f32 %v1245, %v1247
        %v1250 = vadd.f32 %v1248, %v1234
        %v1251 = vadd.f32 %v1249, %v1235
        %1252 = vst [vmem:[#allocation2 + $0x40] sm:$0xff] %v1250
        %1253 = vst [vmem:[#allocation2 + $0x48] sm:$0xff] %v1251
        %v1254 = vld [vmem:[%s3] sm:$0xff]
        %v1255 = vld [vmem:[%s3 + $0x8] sm:$0xff]
        %v1256 = vld [vmem:[%s3 + $0x10] sm:$0xff]
        %v1257 = vld [vmem:[%s3 + $0x18] sm:$0x3f]
        %v1258 = vld [vmem:[#allocation2] sm:$0xff]
        %v1259 = vld [vmem:[#allocation2 + $0x8] sm:$0xff]
        %v1260 = vld [vmem:[#allocation2 + $0x10] sm:$0xff]
        %v1261 = vld [vmem:[#allocation2 + $0x18] sm:$0xff]
        %v1262 = vld [vmem:[#allocation2 + $0x20] sm:$0xff]
        %v1263 = vld [vmem:[#allocation2 + $0x28] sm:$0xff]
        %v1264 = vld [vmem:[#allocation2 + $0x30] sm:$0xff]
        %v1265 = vld [vmem:[#allocation2 + $0x38] sm:$0xff]
        %v1266 = vld [vmem:[#allocation2 + $0x40] sm:$0xff]
        %v1267 = vld [vmem:[#allocation2 + $0x48] sm:$0xff]
        %vm1268 = vcmask 326656
        %v1270 = vsel %vm1268, %v1254, 0
        %v1273 = vsel %vm1268, %v1255, 0
        %v1276 = vsel %vm1268, %v1256, 0
        %v1279 = vsel %vm1268, %v1257, 0
        %1281 = vmatpush.msra.mxu0 0.0
        %1282 = vmatpush.msra.mxu0 0.0
        %1283 = vmatpush.msra.mxu0 0.0
        %1284 = vmatpush.msra.mxu0 0.0
        %1285 = vmatpush.msra.mxu0 0.0
        %1286 = vmatpush.msra.mxu0 0.0
        %1287 = vmatpush.msra.mxu0 0.0
        %1288 = vmatpush.msra.mxu0 0.0
        %1289 = vmatpush.msra.mxu0 0.0
        %1290 = vmatpush.msra.mxu0 0.0
        %1291 = vmatpush.msra.mxu0 0.0
        %1292 = vmatpush.msra.mxu0 %v1266
        %1293 = vmatpush.msra.mxu0 %v1264
        %1294 = vmatpush.msra.mxu0 %v1262
        %1295 = vmatpush.msra.mxu0 %v1260
        %1296 = vmatpush.msra.mxu0 %v1258
        %1297 = vmatmul.f32.gmra.mxu0 %v1270
        %v1298 = vpop.f32.mrf.mxu0
        %v1299 = vadd.f32 0.0, %v1298
        %1300 = vmatmul.f32.gmra.mxu0 %v1273
        %v1301 = vpop.f32.mrf.mxu0
        %v1302 = vadd.f32 0.0, %v1301
        %1303 = vmatmul.f32.gmra.mxu0 %v1276
        %v1304 = vpop.f32.mrf.mxu0
        %v1305 = vadd.f32 0.0, %v1304
        %1306 = vmatmul.f32.gmra.mxu0 %v1279
        %v1307 = vpop.f32.mrf.mxu0
        %v1308 = vadd.f32 0.0, %v1307
        %1309 = vdwg.mxu0
        %1310 = vmatpush.msra.mxu0 0.0
        %1311 = vmatpush.msra.mxu0 0.0
        %1312 = vmatpush.msra.mxu0 0.0
        %1313 = vmatpush.msra.mxu0 0.0
        %1314 = vmatpush.msra.mxu0 0.0
        %1315 = vmatpush.msra.mxu0 0.0
        %1316 = vmatpush.msra.mxu0 0.0
        %1317 = vmatpush.msra.mxu0 0.0
        %1318 = vmatpush.msra.mxu0 0.0
        %1319 = vmatpush.msra.mxu0 0.0
        %1320 = vmatpush.msra.mxu0 0.0
        %1321 = vmatpush.msra.mxu0 %v1267
        %1322 = vmatpush.msra.mxu0 %v1265
        %1323 = vmatpush.msra.mxu0 %v1263
        %1324 = vmatpush.msra.mxu0 %v1261
        %1325 = vmatpush.msra.mxu0 %v1259
        %1326 = vmatmul.f32.gmra.mxu0 %v1270
        %v1327 = vpop.f32.mrf.mxu0
        %v1328 = vadd.f32 0.0, %v1327
        %1329 = vmatmul.f32.gmra.mxu0 %v1273
        %v1330 = vpop.f32.mrf.mxu0
        %v1331 = vadd.f32 0.0, %v1330
        %1332 = vmatmul.f32.gmra.mxu0 %v1276
        %v1333 = vpop.f32.mrf.mxu0
        %v1334 = vadd.f32 0.0, %v1333
        %1335 = vmatmul.f32.gmra.mxu0 %v1279
        %v1336 = vpop.f32.mrf.mxu0
        %v1337 = vadd.f32 0.0, %v1336
        %1338 = vdwg.mxu0
        %v1339 = vmax.f32 %v1299, 0.0
        %v1340 = vmax.f32 %v1328, 0.0
        %v1341 = vmax.f32 %v1302, 0.0
        %v1342 = vmax.f32 %v1331, 0.0
        %v1343 = vmax.f32 %v1305, 0.0
        %v1344 = vmax.f32 %v1334, 0.0
        %v1345 = vmax.f32 %v1308, 0.0
        %v1346 = vmax.f32 %v1337, 0.0
        %v1347 = vld [vmem:[%s4] sm:$0xff]
        %v1348 = vld [vmem:[%s4 + $0x8] sm:$0xff]
        %v1349 = vld [vmem:[%s4 + $0x10] sm:$0xff]
        %v1350 = vld [vmem:[%s4 + $0x18] sm:$0xff]
        %vm1351 = vcmask 244736
        %v1353 = vsel %vm1351, %v1347, 0
        %v1356 = vsel %vm1351, %v1348, 0
        %v1359 = vsel %vm1351, %v1349, 0
        %v1362 = vsel %vm1351, %v1350, 0
        %vm1364 = vcmask 1045504
        %v1366 = vsel %vm1364, %v1345, 0
        %v1369 = vsel %vm1364, %v1346, 0
        %1371 = vmatpush.msra.mxu0 0.0
        %1372 = vmatpush.msra.mxu0 0.0
        %1373 = vmatpush.msra.mxu0 0.0
        %1374 = vmatpush.msra.mxu0 0.0
        %1375 = vmatpush.msra.mxu0 0.0
        %1376 = vmatpush.msra.mxu0 0.0
        %1377 = vmatpush.msra.mxu0 0.0
        %1378 = vmatpush.msra.mxu0 0.0
        %1379 = vmatpush.msra.mxu0 0.0
        %1380 = vmatpush.msra.mxu0 0.0
        %1381 = vmatpush.msra.mxu0 0.0
        %1382 = vmatpush.msra.mxu0 0.0
        %1383 = vmatpush.msra.mxu0 %v1366
        %1384 = vmatpush.msra.mxu0 %v1343
        %1385 = vmatpush.msra.mxu0 %v1341
        %1386 = vmatpush.msra.mxu0 %v1339
        %1387 = vmatmul.f32.gmra.mxu0 %v1353
        %v1388 = vpop.f32.mrf.mxu0
        %v1389 = vadd.f32 0.0, %v1388
        %1390 = vmatmul.f32.gmra.mxu0 %v1356
        %v1391 = vpop.f32.mrf.mxu0
        %v1392 = vadd.f32 0.0, %v1391
        %1393 = vmatmul.f32.gmra.mxu0 %v1359
        %v1394 = vpop.f32.mrf.mxu0
        %v1395 = vadd.f32 0.0, %v1394
        %1396 = vmatmul.f32.gmra.mxu0 %v1362
        %v1397 = vpop.f32.mrf.mxu0
        %v1398 = vadd.f32 0.0, %v1397
        %1399 = vdwg.mxu0
        %1400 = vmatpush.msra.mxu0 0.0
        %1401 = vmatpush.msra.mxu0 0.0
        %1402 = vmatpush.msra.mxu0 0.0
        %1403 = vmatpush.msra.mxu0 0.0
        %1404 = vmatpush.msra.mxu0 0.0
        %1405 = vmatpush.msra.mxu0 0.0
        %1406 = vmatpush.msra.mxu0 0.0
        %1407 = vmatpush.msra.mxu0 0.0
        %1408 = vmatpush.msra.mxu0 0.0
        %1409 = vmatpush.msra.mxu0 0.0
        %1410 = vmatpush.msra.mxu0 0.0
        %1411 = vmatpush.msra.mxu0 0.0
        %1412 = vmatpush.msra.mxu0 %v1369
        %1413 = vmatpush.msra.mxu0 %v1344
        %1414 = vmatpush.msra.mxu0 %v1342
        %1415 = vmatpush.msra.mxu0 %v1340
        %1416 = vmatmul.f32.gmra.mxu0 %v1353
        %v1417 = vpop.f32.mrf.mxu0
        %v1418 = vadd.f32 0.0, %v1417
        %1419 = vmatmul.f32.gmra.mxu0 %v1356
        %v1420 = vpop.f32.mrf.mxu0
        %v1421 = vadd.f32 0.0, %v1420
        %1422 = vmatmul.f32.gmra.mxu0 %v1359
        %v1423 = vpop.f32.mrf.mxu0
        %v1424 = vadd.f32 0.0, %v1423
        %1425 = vmatmul.f32.gmra.mxu0 %v1362
        %v1426 = vpop.f32.mrf.mxu0
        %v1427 = vadd.f32 0.0, %v1426
        %1428 = vdwg.mxu0
        %v1429 = vmax.f32 %v1389, 0.0
        %v1430 = vmax.f32 %v1418, 0.0
        %v1431 = vmax.f32 %v1392, 0.0
        %v1432 = vmax.f32 %v1421, 0.0
        %v1433 = vmax.f32 %v1395, 0.0
        %v1434 = vmax.f32 %v1424, 0.0
        %v1435 = vmax.f32 %v1398, 0.0
        %v1436 = vmax.f32 %v1427, 0.0
        %1437 = vrot.lane.b32.xlu0 %v1429, 17
        %v1438 = vpop.permute.xlu0 %1437
        %1439 = vrot.lane.b32.xlu0 %v1430, 17
        %v1440 = vpop.permute.xlu0 %1439
        %v1441 = vsel %vm688, %v1438, %v1440
        %v1442 = vsel %vm688, %v1440, %v1438
        %v1443 = vld [vmem:[#allocation8] sm:$0xff]
        %v1444 = vld [vmem:[#allocation8 + $0x8] sm:$0xff]
        %v1445 = vmul.f32 %v1442, %v1443
        %v1446 = vmul.f32 %v1441, %v1444
        %1447 = vrot.lane.b32.xlu0 %v1429, 16
        %v1448 = vpop.permute.xlu0 %1447
        %1449 = vrot.lane.b32.xlu0 %v1430, 16
        %v1450 = vpop.permute.xlu0 %1449
        %v1451 = vsel %vm699, %v1448, %v1450
        %v1452 = vsel %vm699, %v1450, %v1448
        %s1453 = scalar_lea.vmem [#allocation8], 16
        %v1454 = vld [vmem:[%s1453] sm:$0xff]
        %v1455 = vld [vmem:[%s1453 + $0x8] sm:$0xff]
        %v1456 = vmul.f32 %v1452, %v1454
        %v1457 = vmul.f32 %v1451, %v1455
        %1458 = vrot.lane.b32.xlu0 %v1429, 15
        %v1459 = vpop.permute.xlu0 %1458
        %1460 = vrot.lane.b32.xlu0 %v1430, 15
        %v1461 = vpop.permute.xlu0 %1460
        %v1462 = vsel %vm711, %v1459, %v1461
        %v1463 = vsel %vm711, %v1461, %v1459
        %s1464 = scalar_lea.vmem [#allocation8], 32
        %v1465 = vld [vmem:[%s1464] sm:$0xff]
        %v1466 = vld [vmem:[%s1464 + $0x8] sm:$0xff]
        %v1467 = vmul.f32 %v1463, %v1465
        %v1468 = vmul.f32 %v1462, %v1466
        %1469 = vrot.lane.b32.xlu0 %v1429, 1
        %v1470 = vpop.permute.xlu0 %1469
        %1471 = vrot.lane.b32.xlu0 %v1430, 1
        %v1472 = vpop.permute.xlu0 %1471
        %v1473 = vsel %vm723, %v1470, %v1472
        %v1474 = vsel %vm723, %v1472, %v1470
        %s1475 = scalar_lea.vmem [#allocation8], 48
        %v1476 = vld [vmem:[%s1475] sm:$0xff]
        %v1477 = vld [vmem:[%s1475 + $0x8] sm:$0xff]
        %v1478 = vmul.f32 %v1474, %v1476
        %v1479 = vmul.f32 %v1473, %v1477
        %s1480 = scalar_lea.vmem [#allocation8], 64
        %v1481 = vld [vmem:[%s1480] sm:$0xff]
        %v1482 = vld [vmem:[%s1480 + $0x8] sm:$0xff]
        %v1483 = vmul.f32 %v1429, %v1481
        %v1484 = vmul.f32 %v1430, %v1482
        %1485 = vrot.lane.b32.xlu0 %v1429, 127
        %v1486 = vpop.permute.xlu0 %1485
        %1487 = vrot.lane.b32.xlu0 %v1430, 127
        %v1488 = vpop.permute.xlu0 %1487
        %v1489 = vsel %vm740, %v1486, %v1488
        %v1490 = vsel %vm740, %v1488, %v1486
        %s1491 = scalar_lea.vmem [#allocation8], 80
        %v1492 = vld [vmem:[%s1491] sm:$0xff]
        %v1493 = vld [vmem:[%s1491 + $0x8] sm:$0xff]
        %v1494 = vmul.f32 %v1489, %v1492
        %v1495 = vmul.f32 %v1490, %v1493
        %1496 = vrot.lane.b32.xlu0 %v1429, 113
        %v1497 = vpop.permute.xlu0 %1496
        %1498 = vrot.lane.b32.xlu0 %v1430, 113
        %v1499 = vpop.permute.xlu0 %1498
        %v1500 = vsel %vm752, %v1497, %v1499
        %v1501 = vsel %vm752, %v1499, %v1497
        %s1502 = scalar_lea.vmem [#allocation8], 96
        %v1503 = vld [vmem:[%s1502] sm:$0xff]
        %v1504 = vld [vmem:[%s1502 + $0x8] sm:$0xff]
        %v1505 = vmul.f32 %v1500, %v1503
        %v1506 = vmul.f32 %v1501, %v1504
        %1507 = vrot.lane.b32.xlu0 %v1429, 112
        %v1508 = vpop.permute.xlu0 %1507
        %1509 = vrot.lane.b32.xlu0 %v1430, 112
        %v1510 = vpop.permute.xlu0 %1509
        %v1511 = vsel %vm764, %v1508, %v1510
        %v1512 = vsel %vm764, %v1510, %v1508
        %s1513 = scalar_lea.vmem [#allocation8], 112
        %v1514 = vld [vmem:[%s1513] sm:$0xff]
        %v1515 = vld [vmem:[%s1513 + $0x8] sm:$0xff]
        %v1516 = vmul.f32 %v1511, %v1514
        %v1517 = vmul.f32 %v1512, %v1515
        %1518 = vrot.lane.b32.xlu0 %v1429, 111
        %v1519 = vpop.permute.xlu0 %1518
        %1520 = vrot.lane.b32.xlu0 %v1430, 111
        %v1521 = vpop.permute.xlu0 %1520
        %v1522 = vsel %vm776, %v1519, %v1521
        %v1523 = vsel %vm776, %v1521, %v1519
        %s1524 = scalar_lea.vmem [#allocation8], 128
        %v1525 = vld [vmem:[%s1524] sm:$0xff]
        %v1526 = vld [vmem:[%s1524 + $0x8] sm:$0xff]
        %v1527 = vmul.f32 %v1522, %v1525
        %v1528 = vmul.f32 %v1523, %v1526
        %v1529 = vadd.f32 %v1445, %v1456
        %v1530 = vadd.f32 %v1446, %v1457
        %v1531 = vadd.f32 %v1467, %v1478
        %v1532 = vadd.f32 %v1468, %v1479
        %v1533 = vadd.f32 %v1483, %v1494
        %v1534 = vadd.f32 %v1484, %v1495
        %v1535 = vadd.f32 %v1505, %v1516
        %v1536 = vadd.f32 %v1506, %v1517
        %v1537 = vadd.f32 %v1529, %v1531
        %v1538 = vadd.f32 %v1530, %v1532
        %v1539 = vadd.f32 %v1533, %v1535
        %v1540 = vadd.f32 %v1534, %v1536
        %v1541 = vadd.f32 %v1537, %v1539
        %v1542 = vadd.f32 %v1538, %v1540
        %v1543 = vadd.f32 %v1541, %v1527
        %v1544 = vadd.f32 %v1542, %v1528
        %1545 = vst [vmem:[#allocation2] sm:$0xff] %v1543
        %1546 = vst [vmem:[#allocation2 + $0x8] sm:$0xff] %v1544
        %v1547 = vadd.f32 %v1543, %v1431
        %v1548 = vadd.f32 %v1544, %v1432
        %1549 = vrot.lane.b32.xlu0 %v1547, 17
        %v1550 = vpop.permute.xlu0 %1549
        %1551 = vrot.lane.b32.xlu0 %v1548, 17
        %v1552 = vpop.permute.xlu0 %1551
        %v1553 = vsel %vm688, %v1550, %v1552
        %v1554 = vsel %vm688, %v1552, %v1550
        %s1555 = scalar_lea.vmem [#allocation8], 144
        %v1556 = vld [vmem:[%s1555] sm:$0xff]
        %v1557 = vld [vmem:[%s1555 + $0x8] sm:$0xff]
        %v1558 = vmul.f32 %v1554, %v1556
        %v1559 = vmul.f32 %v1553, %v1557
        %1560 = vrot.lane.b32.xlu0 %v1547, 16
        %v1561 = vpop.permute.xlu0 %1560
        %1562 = vrot.lane.b32.xlu0 %v1548, 16
        %v1563 = vpop.permute.xlu0 %1562
        %v1564 = vsel %vm699, %v1561, %v1563
        %v1565 = vsel %vm699, %v1563, %v1561
        %s1566 = scalar_lea.vmem [#allocation8], 160
        %v1567 = vld [vmem:[%s1566] sm:$0xff]
        %v1568 = vld [vmem:[%s1566 + $0x8] sm:$0xff]
        %v1569 = vmul.f32 %v1565, %v1567
        %v1570 = vmul.f32 %v1564, %v1568
        %1571 = vrot.lane.b32.xlu0 %v1547, 15
        %v1572 = vpop.permute.xlu0 %1571
        %1573 = vrot.lane.b32.xlu0 %v1548, 15
        %v1574 = vpop.permute.xlu0 %1573
        %v1575 = vsel %vm711, %v1572, %v1574
        %v1576 = vsel %vm711, %v1574, %v1572
        %s1577 = scalar_lea.vmem [#allocation8], 176
        %v1578 = vld [vmem:[%s1577] sm:$0xff]
        %v1579 = vld [vmem:[%s1577 + $0x8] sm:$0xff]
        %v1580 = vmul.f32 %v1576, %v1578
        %v1581 = vmul.f32 %v1575, %v1579
        %1582 = vrot.lane.b32.xlu0 %v1547, 1
        %v1583 = vpop.permute.xlu0 %1582
        %1584 = vrot.lane.b32.xlu0 %v1548, 1
        %v1585 = vpop.permute.xlu0 %1584
        %v1586 = vsel %vm723, %v1583, %v1585
        %v1587 = vsel %vm723, %v1585, %v1583
        %s1588 = scalar_lea.vmem [#allocation8], 192
        %v1589 = vld [vmem:[%s1588] sm:$0xff]
        %v1590 = vld [vmem:[%s1588 + $0x8] sm:$0xff]
        %v1591 = vmul.f32 %v1587, %v1589
        %v1592 = vmul.f32 %v1586, %v1590
        %s1593 = scalar_lea.vmem [#allocation8], 208
        %v1594 = vld [vmem:[%s1593] sm:$0xff]
        %v1595 = vld [vmem:[%s1593 + $0x8] sm:$0xff]
        %v1596 = vmul.f32 %v1547, %v1594
        %v1597 = vmul.f32 %v1548, %v1595
        %1598 = vrot.lane.b32.xlu0 %v1547, 127
        %v1599 = vpop.permute.xlu0 %1598
        %1600 = vrot.lane.b32.xlu0 %v1548, 127
        %v1601 = vpop.permute.xlu0 %1600
        %v1602 = vsel %vm740, %v1599, %v1601
        %v1603 = vsel %vm740, %v1601, %v1599
        %s1604 = scalar_lea.vmem [#allocation8], 224
        %v1605 = vld [vmem:[%s1604] sm:$0xff]
        %v1606 = vld [vmem:[%s1604 + $0x8] sm:$0xff]
        %v1607 = vmul.f32 %v1602, %v1605
        %v1608 = vmul.f32 %v1603, %v1606
        %1609 = vrot.lane.b32.xlu0 %v1547, 113
        %v1610 = vpop.permute.xlu0 %1609
        %1611 = vrot.lane.b32.xlu0 %v1548, 113
        %v1612 = vpop.permute.xlu0 %1611
        %v1613 = vsel %vm752, %v1610, %v1612
        %v1614 = vsel %vm752, %v1612, %v1610
        %s1615 = scalar_lea.vmem [#allocation8], 240
        %v1616 = vld [vmem:[%s1615] sm:$0xff]
        %v1617 = vld [vmem:[%s1615 + $0x8] sm:$0xff]
        %v1618 = vmul.f32 %v1613, %v1616
        %v1619 = vmul.f32 %v1614, %v1617
        %1620 = vrot.lane.b32.xlu0 %v1547, 112
        %v1621 = vpop.permute.xlu0 %1620
        %1622 = vrot.lane.b32.xlu0 %v1548, 112
        %v1623 = vpop.permute.xlu0 %1622
        %v1624 = vsel %vm764, %v1621, %v1623
        %v1625 = vsel %vm764, %v1623, %v1621
        %s1626 = scalar_lea.vmem [#allocation8], 256
        %v1627 = vld [vmem:[%s1626] sm:$0xff]
        %v1628 = vld [vmem:[%s1626 + $0x8] sm:$0xff]
        %v1629 = vmul.f32 %v1624, %v1627
        %v1630 = vmul.f32 %v1625, %v1628
        %1631 = vrot.lane.b32.xlu0 %v1547, 111
        %v1632 = vpop.permute.xlu0 %1631
        %1633 = vrot.lane.b32.xlu0 %v1548, 111
        %v1634 = vpop.permute.xlu0 %1633
        %v1635 = vsel %vm776, %v1632, %v1634
        %v1636 = vsel %vm776, %v1634, %v1632
        %s1637 = scalar_lea.vmem [#allocation8], 272
        %v1638 = vld [vmem:[%s1637] sm:$0xff]
        %v1639 = vld [vmem:[%s1637 + $0x8] sm:$0xff]
        %v1640 = vmul.f32 %v1635, %v1638
        %v1641 = vmul.f32 %v1636, %v1639
        %v1642 = vadd.f32 %v1558, %v1569
        %v1643 = vadd.f32 %v1559, %v1570
        %v1644 = vadd.f32 %v1580, %v1591
        %v1645 = vadd.f32 %v1581, %v1592
        %v1646 = vadd.f32 %v1596, %v1607
        %v1647 = vadd.f32 %v1597, %v1608
        %v1648 = vadd.f32 %v1618, %v1629
        %v1649 = vadd.f32 %v1619, %v1630
        %v1650 = vadd.f32 %v1642, %v1644
        %v1651 = vadd.f32 %v1643, %v1645
        %v1652 = vadd.f32 %v1646, %v1648
        %v1653 = vadd.f32 %v1647, %v1649
        %v1654 = vadd.f32 %v1650, %v1652
        %v1655 = vadd.f32 %v1651, %v1653
        %v1656 = vadd.f32 %v1654, %v1640
        %v1657 = vadd.f32 %v1655, %v1641
        %1658 = vst [vmem:[#allocation2 + $0x10] sm:$0xff] %v1656
        %1659 = vst [vmem:[#allocation2 + $0x18] sm:$0xff] %v1657
        %v1660 = vadd.f32 %v1656, %v1433
        %v1661 = vadd.f32 %v1657, %v1434
        %1662 = vrot.lane.b32.xlu0 %v1660, 17
        %v1663 = vpop.permute.xlu0 %1662
        %1664 = vrot.lane.b32.xlu0 %v1661, 17
        %v1665 = vpop.permute.xlu0 %1664
        %v1666 = vsel %vm688, %v1663, %v1665
        %v1667 = vsel %vm688, %v1665, %v1663
        %s1668 = scalar_lea.vmem [#allocation8], 288
        %v1669 = vld [vmem:[%s1668] sm:$0xff]
        %v1670 = vld [vmem:[%s1668 + $0x8] sm:$0xff]
        %v1671 = vmul.f32 %v1667, %v1669
        %v1672 = vmul.f32 %v1666, %v1670
        %1673 = vrot.lane.b32.xlu0 %v1660, 16
        %v1674 = vpop.permute.xlu0 %1673
        %1675 = vrot.lane.b32.xlu0 %v1661, 16
        %v1676 = vpop.permute.xlu0 %1675
        %v1677 = vsel %vm699, %v1674, %v1676
        %v1678 = vsel %vm699, %v1676, %v1674
        %s1679 = scalar_lea.vmem [#allocation8], 304
        %v1680 = vld [vmem:[%s1679] sm:$0xff]
        %v1681 = vld [vmem:[%s1679 + $0x8] sm:$0xff]
        %v1682 = vmul.f32 %v1678, %v1680
        %v1683 = vmul.f32 %v1677, %v1681
        %1684 = vrot.lane.b32.xlu0 %v1660, 15
        %v1685 = vpop.permute.xlu0 %1684
        %1686 = vrot.lane.b32.xlu0 %v1661, 15
        %v1687 = vpop.permute.xlu0 %1686
        %v1688 = vsel %vm711, %v1685, %v1687
        %v1689 = vsel %vm711, %v1687, %v1685
        %s1690 = scalar_lea.vmem [#allocation8], 320
        %v1691 = vld [vmem:[%s1690] sm:$0xff]
        %v1692 = vld [vmem:[%s1690 + $0x8] sm:$0xff]
        %v1693 = vmul.f32 %v1689, %v1691
        %v1694 = vmul.f32 %v1688, %v1692
        %1695 = vrot.lane.b32.xlu0 %v1660, 1
        %v1696 = vpop.permute.xlu0 %1695
        %1697 = vrot.lane.b32.xlu0 %v1661, 1
        %v1698 = vpop.permute.xlu0 %1697
        %v1699 = vsel %vm723, %v1696, %v1698
        %v1700 = vsel %vm723, %v1698, %v1696
        %s1701 = scalar_lea.vmem [#allocation8], 336
        %v1702 = vld [vmem:[%s1701] sm:$0xff]
        %v1703 = vld [vmem:[%s1701 + $0x8] sm:$0xff]
        %v1704 = vmul.f32 %v1700, %v1702
        %v1705 = vmul.f32 %v1699, %v1703
        %s1706 = scalar_lea.vmem [#allocation8], 352
        %v1707 = vld [vmem:[%s1706] sm:$0xff]
        %v1708 = vld [vmem:[%s1706 + $0x8] sm:$0xff]
        %v1709 = vmul.f32 %v1660, %v1707
        %v1710 = vmul.f32 %v1661, %v1708
        %1711 = vrot.lane.b32.xlu0 %v1660, 127
        %v1712 = vpop.permute.xlu0 %1711
        %1713 = vrot.lane.b32.xlu0 %v1661, 127
        %v1714 = vpop.permute.xlu0 %1713
        %v1715 = vsel %vm740, %v1712, %v1714
        %v1716 = vsel %vm740, %v1714, %v1712
        %s1717 = scalar_lea.vmem [#allocation8], 368
        %v1718 = vld [vmem:[%s1717] sm:$0xff]
        %v1719 = vld [vmem:[%s1717 + $0x8] sm:$0xff]
        %v1720 = vmul.f32 %v1715, %v1718
        %v1721 = vmul.f32 %v1716, %v1719
        %1722 = vrot.lane.b32.xlu0 %v1660, 113
        %v1723 = vpop.permute.xlu0 %1722
        %1724 = vrot.lane.b32.xlu0 %v1661, 113
        %v1725 = vpop.permute.xlu0 %1724
        %v1726 = vsel %vm752, %v1723, %v1725
        %v1727 = vsel %vm752, %v1725, %v1723
        %s1728 = scalar_lea.vmem [#allocation8], 384
        %v1729 = vld [vmem:[%s1728] sm:$0xff]
        %v1730 = vld [vmem:[%s1728 + $0x8] sm:$0xff]
        %v1731 = vmul.f32 %v1726, %v1729
        %v1732 = vmul.f32 %v1727, %v1730
        %1733 = vrot.lane.b32.xlu0 %v1660, 112
        %v1734 = vpop.permute.xlu0 %1733
        %1735 = vrot.lane.b32.xlu0 %v1661, 112
        %v1736 = vpop.permute.xlu0 %1735
        %v1737 = vsel %vm764, %v1734, %v1736
        %v1738 = vsel %vm764, %v1736, %v1734
        %s1739 = scalar_lea.vmem [#allocation8], 400
        %v1740 = vld [vmem:[%s1739] sm:$0xff]
        %v1741 = vld [vmem:[%s1739 + $0x8] sm:$0xff]
        %v1742 = vmul.f32 %v1737, %v1740
        %v1743 = vmul.f32 %v1738, %v1741
        %1744 = vrot.lane.b32.xlu0 %v1660, 111
        %v1745 = vpop.permute.xlu0 %1744
        %1746 = vrot.lane.b32.xlu0 %v1661, 111
        %v1747 = vpop.permute.xlu0 %1746
        %v1748 = vsel %vm776, %v1745, %v1747
        %v1749 = vsel %vm776, %v1747, %v1745
        %s1750 = scalar_lea.vmem [#allocation8], 416
        %v1751 = vld [vmem:[%s1750] sm:$0xff]
        %v1752 = vld [vmem:[%s1750 + $0x8] sm:$0xff]
        %v1753 = vmul.f32 %v1748, %v1751
        %v1754 = vmul.f32 %v1749, %v1752
        %v1755 = vadd.f32 %v1671, %v1682
        %v1756 = vadd.f32 %v1672, %v1683
        %v1757 = vadd.f32 %v1693, %v1704
        %v1758 = vadd.f32 %v1694, %v1705
        %v1759 = vadd.f32 %v1709, %v1720
        %v1760 = vadd.f32 %v1710, %v1721
        %v1761 = vadd.f32 %v1731, %v1742
        %v1762 = vadd.f32 %v1732, %v1743
        %v1763 = vadd.f32 %v1755, %v1757
        %v1764 = vadd.f32 %v1756, %v1758
        %v1765 = vadd.f32 %v1759, %v1761
        %v1766 = vadd.f32 %v1760, %v1762
        %v1767 = vadd.f32 %v1763, %v1765
        %v1768 = vadd.f32 %v1764, %v1766
        %v1769 = vadd.f32 %v1767, %v1753
        %v1770 = vadd.f32 %v1768, %v1754
        %1771 = vst [vmem:[#allocation2 + $0x20] sm:$0xff] %v1769
        %1772 = vst [vmem:[#allocation2 + $0x28] sm:$0xff] %v1770
        %v1773 = vadd.f32 %v1769, %v1435
        %v1774 = vadd.f32 %v1770, %v1436
        %1775 = vrot.lane.b32.xlu0 %v1773, 17
        %v1776 = vpop.permute.xlu0 %1775
        %1777 = vrot.lane.b32.xlu0 %v1774, 17
        %v1778 = vpop.permute.xlu0 %1777
        %v1779 = vsel %vm688, %v1776, %v1778
        %v1780 = vsel %vm688, %v1778, %v1776
        %s1781 = scalar_lea.vmem [#allocation8], 432
        %v1782 = vld [vmem:[%s1781] sm:$0xff]
        %v1783 = vld [vmem:[%s1781 + $0x8] sm:$0xff]
        %v1784 = vmul.f32 %v1780, %v1782
        %v1785 = vmul.f32 %v1779, %v1783
        %1786 = vrot.lane.b32.xlu0 %v1773, 16
        %v1787 = vpop.permute.xlu0 %1786
        %1788 = vrot.lane.b32.xlu0 %v1774, 16
        %v1789 = vpop.permute.xlu0 %1788
        %v1790 = vsel %vm699, %v1787, %v1789
        %v1791 = vsel %vm699, %v1789, %v1787
        %s1792 = scalar_lea.vmem [#allocation8], 448
        %v1793 = vld [vmem:[%s1792] sm:$0xff]
        %v1794 = vld [vmem:[%s1792 + $0x8] sm:$0xff]
        %v1795 = vmul.f32 %v1791, %v1793
        %v1796 = vmul.f32 %v1790, %v1794
        %1797 = vrot.lane.b32.xlu0 %v1773, 15
        %v1798 = vpop.permute.xlu0 %1797
        %1799 = vrot.lane.b32.xlu0 %v1774, 15
        %v1800 = vpop.permute.xlu0 %1799
        %v1801 = vsel %vm711, %v1798, %v1800
        %v1802 = vsel %vm711, %v1800, %v1798
        %s1803 = scalar_lea.vmem [#allocation8], 464
        %v1804 = vld [vmem:[%s1803] sm:$0xff]
        %v1805 = vld [vmem:[%s1803 + $0x8] sm:$0xff]
        %v1806 = vmul.f32 %v1802, %v1804
        %v1807 = vmul.f32 %v1801, %v1805
        %1808 = vrot.lane.b32.xlu0 %v1773, 1
        %v1809 = vpop.permute.xlu0 %1808
        %1810 = vrot.lane.b32.xlu0 %v1774, 1
        %v1811 = vpop.permute.xlu0 %1810
        %v1812 = vsel %vm723, %v1809, %v1811
        %v1813 = vsel %vm723, %v1811, %v1809
        %s1814 = scalar_lea.vmem [#allocation8], 480
        %v1815 = vld [vmem:[%s1814] sm:$0xff]
        %v1816 = vld [vmem:[%s1814 + $0x8] sm:$0xff]
        %v1817 = vmul.f32 %v1813, %v1815
        %v1818 = vmul.f32 %v1812, %v1816
        %s1819 = scalar_lea.vmem [#allocation8], 496
        %v1820 = vld [vmem:[%s1819] sm:$0xff]
        %v1821 = vld [vmem:[%s1819 + $0x8] sm:$0xff]
        %v1822 = vmul.f32 %v1773, %v1820
        %v1823 = vmul.f32 %v1774, %v1821
        %1824 = vrot.lane.b32.xlu0 %v1773, 127
        %v1825 = vpop.permute.xlu0 %1824
        %1826 = vrot.lane.b32.xlu0 %v1774, 127
        %v1827 = vpop.permute.xlu0 %1826
        %v1828 = vsel %vm740, %v1825, %v1827
        %v1829 = vsel %vm740, %v1827, %v1825
        %s1830 = scalar_lea.vmem [#allocation8], 512
        %v1831 = vld [vmem:[%s1830] sm:$0xff]
        %v1832 = vld [vmem:[%s1830 + $0x8] sm:$0xff]
        %v1833 = vmul.f32 %v1828, %v1831
        %v1834 = vmul.f32 %v1829, %v1832
        %1835 = vrot.lane.b32.xlu0 %v1773, 113
        %v1836 = vpop.permute.xlu0 %1835
        %1837 = vrot.lane.b32.xlu0 %v1774, 113
        %v1838 = vpop.permute.xlu0 %1837
        %v1839 = vsel %vm752, %v1836, %v1838
        %v1840 = vsel %vm752, %v1838, %v1836
        %s1841 = scalar_lea.vmem [#allocation8], 528
        %v1842 = vld [vmem:[%s1841] sm:$0xff]
        %v1843 = vld [vmem:[%s1841 + $0x8] sm:$0xff]
        %v1844 = vmul.f32 %v1839, %v1842
        %v1845 = vmul.f32 %v1840, %v1843
        %1846 = vrot.lane.b32.xlu0 %v1773, 112
        %v1847 = vpop.permute.xlu0 %1846
        %1848 = vrot.lane.b32.xlu0 %v1774, 112
        %v1849 = vpop.permute.xlu0 %1848
        %v1850 = vsel %vm764, %v1847, %v1849
        %v1851 = vsel %vm764, %v1849, %v1847
        %s1852 = scalar_lea.vmem [#allocation8], 544
        %v1853 = vld [vmem:[%s1852] sm:$0xff]
        %v1854 = vld [vmem:[%s1852 + $0x8] sm:$0xff]
        %v1855 = vmul.f32 %v1850, %v1853
        %v1856 = vmul.f32 %v1851, %v1854
        %1857 = vrot.lane.b32.xlu0 %v1773, 111
        %v1858 = vpop.permute.xlu0 %1857
        %1859 = vrot.lane.b32.xlu0 %v1774, 111
        %v1860 = vpop.permute.xlu0 %1859
        %v1861 = vsel %vm776, %v1858, %v1860
        %v1862 = vsel %vm776, %v1860, %v1858
        %s1863 = scalar_lea.vmem [#allocation8], 560
        %v1864 = vld [vmem:[%s1863] sm:$0xff]
        %v1865 = vld [vmem:[%s1863 + $0x8] sm:$0xff]
        %v1866 = vmul.f32 %v1861, %v1864
        %v1867 = vmul.f32 %v1862, %v1865
        %v1868 = vadd.f32 %v1784, %v1795
        %v1869 = vadd.f32 %v1785, %v1796
        %v1870 = vadd.f32 %v1806, %v1817
        %v1871 = vadd.f32 %v1807, %v1818
        %v1872 = vadd.f32 %v1822, %v1833
        %v1873 = vadd.f32 %v1823, %v1834
        %v1874 = vadd.f32 %v1844, %v1855
        %v1875 = vadd.f32 %v1845, %v1856
        %v1876 = vadd.f32 %v1868, %v1870
        %v1877 = vadd.f32 %v1869, %v1871
        %v1878 = vadd.f32 %v1872, %v1874
        %v1879 = vadd.f32 %v1873, %v1875
        %v1880 = vadd.f32 %v1876, %v1878
        %v1881 = vadd.f32 %v1877, %v1879
        %v1882 = vadd.f32 %v1880, %v1866
        %v1883 = vadd.f32 %v1881, %v1867
        %1884 = vst [vmem:[#allocation2 + $0x30] sm:$0xff] %v1882
        %1885 = vst [vmem:[#allocation2 + $0x38] sm:$0xff] %v1883
        %v1886 = vld [vmem:[%s6] sm:$0xff]
        %v1887 = vld [vmem:[%s6 + $0x8] sm:$0xff]
        %v1888 = vld [vmem:[%s6 + $0x10] sm:$0xff]
        %v1889 = vld [vmem:[#allocation2] sm:$0xff]
        %v1890 = vld [vmem:[#allocation2 + $0x8] sm:$0xff]
        %v1891 = vld [vmem:[#allocation2 + $0x10] sm:$0xff]
        %v1892 = vld [vmem:[#allocation2 + $0x18] sm:$0xff]
        %v1893 = vld [vmem:[#allocation2 + $0x20] sm:$0xff]
        %v1894 = vld [vmem:[#allocation2 + $0x28] sm:$0xff]
        %v1895 = vld [vmem:[#allocation2 + $0x30] sm:$0xff]
        %v1896 = vld [vmem:[#allocation2 + $0x38] sm:$0xff]
        %vm1897 = vcmask 261120
        %v1899 = vsel %vm1897, %v1886, 0
        %v1902 = vsel %vm1897, %v1887, 0
        %v1905 = vsel %vm1897, %v1888, 0
        %1907 = vmatpush.msra.mxu0 0.0
        %1908 = vmatpush.msra.mxu0 0.0
        %1909 = vmatpush.msra.mxu0 0.0
        %1910 = vmatpush.msra.mxu0 0.0
        %1911 = vmatpush.msra.mxu0 0.0
        %1912 = vmatpush.msra.mxu0 0.0
        %1913 = vmatpush.msra.mxu0 0.0
        %1914 = vmatpush.msra.mxu0 0.0
        %1915 = vmatpush.msra.mxu0 0.0
        %1916 = vmatpush.msra.mxu0 0.0
        %1917 = vmatpush.msra.mxu0 0.0
        %1918 = vmatpush.msra.mxu0 0.0
        %1919 = vmatpush.msra.mxu0 %v1895
        %1920 = vmatpush.msra.mxu0 %v1893
        %1921 = vmatpush.msra.mxu0 %v1891
        %1922 = vmatpush.msra.mxu0 %v1889
        %1923 = vmatmul.f32.gmra.mxu0 %v1899
        %v1924 = vpop.f32.mrf.mxu0
        %v1925 = vadd.f32 0.0, %v1924
        %1926 = vmatmul.f32.gmra.mxu0 %v1902
        %v1927 = vpop.f32.mrf.mxu0
        %v1928 = vadd.f32 0.0, %v1927
        %1929 = vmatmul.f32.gmra.mxu0 %v1905
        %v1930 = vpop.f32.mrf.mxu0
        %v1931 = vadd.f32 0.0, %v1930
        %1932 = vdwg.mxu0
        %1933 = vmatpush.msra.mxu0 0.0
        %1934 = vmatpush.msra.mxu0 0.0
        %1935 = vmatpush.msra.mxu0 0.0
        %1936 = vmatpush.msra.mxu0 0.0
        %1937 = vmatpush.msra.mxu0 0.0
        %1938 = vmatpush.msra.mxu0 0.0
        %1939 = vmatpush.msra.mxu0 0.0
        %1940 = vmatpush.msra.mxu0 0.0
        %1941 = vmatpush.msra.mxu0 0.0
        %1942 = vmatpush.msra.mxu0 0.0
        %1943 = vmatpush.msra.mxu0 0.0
        %1944 = vmatpush.msra.mxu0 0.0
        %1945 = vmatpush.msra.mxu0 %v1896
        %1946 = vmatpush.msra.mxu0 %v1894
        %1947 = vmatpush.msra.mxu0 %v1892
        %1948 = vmatpush.msra.mxu0 %v1890
        %1949 = vmatmul.f32.gmra.mxu0 %v1899
        %v1950 = vpop.f32.mrf.mxu0
        %v1951 = vadd.f32 0.0, %v1950
        %1952 = vmatmul.f32.gmra.mxu0 %v1902
        %v1953 = vpop.f32.mrf.mxu0
        %v1954 = vadd.f32 0.0, %v1953
        %1955 = vmatmul.f32.gmra.mxu0 %v1905
        %v1956 = vpop.f32.mrf.mxu0
        %v1957 = vadd.f32 0.0, %v1956
        %1958 = vdwg.mxu0
        %v1959 = vmax.f32 %v1925, 0.0
        %v1960 = vmax.f32 %v1951, 0.0
        %v1961 = vmax.f32 %v1928, 0.0
        %v1962 = vmax.f32 %v1954, 0.0
        %v1963 = vmax.f32 %v1931, 0.0
        %v1964 = vmax.f32 %v1957, 0.0
        %v1965 = vld [vmem:[%s7] sm:$0xff]
        %v1966 = vld [vmem:[%s7 + $0x8] sm:$0xff]
        %v1967 = vld [vmem:[%s7 + $0x10] sm:$0xff]
        %v1968 = vld [vmem:[%s7 + $0x18] sm:$0xff]
        %v1969 = vld [vmem:[%s7 + $0x20] sm:$0xff]
        %vm1970 = vcmask 195584
        %v1972 = vsel %vm1970, %v1965, 0
        %v1975 = vsel %vm1970, %v1966, 0
        %v1978 = vsel %vm1970, %v1967, 0
        %v1981 = vsel %vm1970, %v1968, 0
        %v1984 = vsel %vm1970, %v1969, 0
        %1986 = vmatpush.msra.mxu0 0.0
        %1987 = vmatpush.msra.mxu0 0.0
        %1988 = vmatpush.msra.mxu0 0.0
        %1989 = vmatpush.msra.mxu0 0.0
        %1990 = vmatpush.msra.mxu0 0.0
        %1991 = vmatpush.msra.mxu0 0.0
        %1992 = vmatpush.msra.mxu0 0.0
        %1993 = vmatpush.msra.mxu0 0.0
        %1994 = vmatpush.msra.mxu0 0.0
        %1995 = vmatpush.msra.mxu0 0.0
        %1996 = vmatpush.msra.mxu0 0.0
        %1997 = vmatpush.msra.mxu0 0.0
        %1998 = vmatpush.msra.mxu0 0.0
        %1999 = vmatpush.msra.mxu0 %v1963
        %2000 = vmatpush.msra.mxu0 %v1961
        %2001 = vmatpush.msra.mxu0 %v1959
        %2002 = vmatmul.f32.gmra.mxu0 %v1972
        %v2003 = vpop.f32.mrf.mxu0
        %v2004 = vadd.f32 0.0, %v2003
        %2005 = vmatmul.f32.gmra.mxu0 %v1975
        %v2006 = vpop.f32.mrf.mxu0
        %v2007 = vadd.f32 0.0, %v2006
        %2008 = vmatmul.f32.gmra.mxu0 %v1978
        %v2009 = vpop.f32.mrf.mxu0
        %v2010 = vadd.f32 0.0, %v2009
        %2011 = vmatmul.f32.gmra.mxu0 %v1981
        %v2012 = vpop.f32.mrf.mxu0
        %v2013 = vadd.f32 0.0, %v2012
        %2014 = vmatmul.f32.gmra.mxu0 %v1984
        %v2015 = vpop.f32.mrf.mxu0
        %v2016 = vadd.f32 0.0, %v2015
        %2017 = vdwg.mxu0
        %2018 = vmatpush.msra.mxu0 0.0
        %2019 = vmatpush.msra.mxu0 0.0
        %2020 = vmatpush.msra.mxu0 0.0
        %2021 = vmatpush.msra.mxu0 0.0
        %2022 = vmatpush.msra.mxu0 0.0
        %2023 = vmatpush.msra.mxu0 0.0
        %2024 = vmatpush.msra.mxu0 0.0
        %2025 = vmatpush.msra.mxu0 0.0
        %2026 = vmatpush.msra.mxu0 0.0
        %2027 = vmatpush.msra.mxu0 0.0
        %2028 = vmatpush.msra.mxu0 0.0
        %2029 = vmatpush.msra.mxu0 0.0
        %2030 = vmatpush.msra.mxu0 0.0
        %2031 = vmatpush.msra.mxu0 %v1964
        %2032 = vmatpush.msra.mxu0 %v1962
        %2033 = vmatpush.msra.mxu0 %v1960
        %2034 = vmatmul.f32.gmra.mxu0 %v1972
        %v2035 = vpop.f32.mrf.mxu0
        %v2036 = vadd.f32 0.0, %v2035
        %2037 = vmatmul.f32.gmra.mxu0 %v1975
        %v2038 = vpop.f32.mrf.mxu0
        %v2039 = vadd.f32 0.0, %v2038
        %2040 = vmatmul.f32.gmra.mxu0 %v1978
        %v2041 = vpop.f32.mrf.mxu0
        %v2042 = vadd.f32 0.0, %v2041
        %2043 = vmatmul.f32.gmra.mxu0 %v1981
        %v2044 = vpop.f32.mrf.mxu0
        %v2045 = vadd.f32 0.0, %v2044
        %2046 = vmatmul.f32.gmra.mxu0 %v1984
        %v2047 = vpop.f32.mrf.mxu0
        %v2048 = vadd.f32 0.0, %v2047
        %2049 = vdwg.mxu0
        %v2050 = vmax.f32 %v2004, 0.0
        %v2051 = vmax.f32 %v2036, 0.0
        %v2052 = vmax.f32 %v2007, 0.0
        %v2053 = vmax.f32 %v2039, 0.0
        %v2054 = vmax.f32 %v2010, 0.0
        %v2055 = vmax.f32 %v2042, 0.0
        %v2056 = vmax.f32 %v2013, 0.0
        %v2057 = vmax.f32 %v2045, 0.0
        %v2058 = vmax.f32 %v2016, 0.0
        %v2059 = vmax.f32 %v2048, 0.0
        %2060 = vrot.lane.b32.xlu0 %v2050, 17
        %v2061 = vpop.permute.xlu0 %2060
        %2062 = vrot.lane.b32.xlu0 %v2051, 17
        %v2063 = vpop.permute.xlu0 %2062
        %v2064 = vsel %vm688, %v2061, %v2063
        %v2065 = vsel %vm688, %v2063, %v2061
        %v2066 = vld [vmem:[#allocation9] sm:$0xff]
        %v2067 = vld [vmem:[#allocation9 + $0x8] sm:$0xff]
        %v2068 = vmul.f32 %v2065, %v2066
        %v2069 = vmul.f32 %v2064, %v2067
        %2070 = vrot.lane.b32.xlu0 %v2050, 16
        %v2071 = vpop.permute.xlu0 %2070
        %2072 = vrot.lane.b32.xlu0 %v2051, 16
        %v2073 = vpop.permute.xlu0 %2072
        %v2074 = vsel %vm699, %v2071, %v2073
        %v2075 = vsel %vm699, %v2073, %v2071
        %s2076 = scalar_lea.vmem [#allocation9], 16
        %v2077 = vld [vmem:[%s2076] sm:$0xff]
        %v2078 = vld [vmem:[%s2076 + $0x8] sm:$0xff]
        %v2079 = vmul.f32 %v2075, %v2077
        %v2080 = vmul.f32 %v2074, %v2078
        %2081 = vrot.lane.b32.xlu0 %v2050, 15
        %v2082 = vpop.permute.xlu0 %2081
        %2083 = vrot.lane.b32.xlu0 %v2051, 15
        %v2084 = vpop.permute.xlu0 %2083
        %v2085 = vsel %vm711, %v2082, %v2084
        %v2086 = vsel %vm711, %v2084, %v2082
        %s2087 = scalar_lea.vmem [#allocation9], 32
        %v2088 = vld [vmem:[%s2087] sm:$0xff]
        %v2089 = vld [vmem:[%s2087 + $0x8] sm:$0xff]
        %v2090 = vmul.f32 %v2086, %v2088
        %v2091 = vmul.f32 %v2085, %v2089
        %2092 = vrot.lane.b32.xlu0 %v2050, 1
        %v2093 = vpop.permute.xlu0 %2092
        %2094 = vrot.lane.b32.xlu0 %v2051, 1
        %v2095 = vpop.permute.xlu0 %2094
        %v2096 = vsel %vm723, %v2093, %v2095
        %v2097 = vsel %vm723, %v2095, %v2093
        %s2098 = scalar_lea.vmem [#allocation9], 48
        %v2099 = vld [vmem:[%s2098] sm:$0xff]
        %v2100 = vld [vmem:[%s2098 + $0x8] sm:$0xff]
        %v2101 = vmul.f32 %v2097, %v2099
        %v2102 = vmul.f32 %v2096, %v2100
        %s2103 = scalar_lea.vmem [#allocation9], 64
        %v2104 = vld [vmem:[%s2103] sm:$0xff]
        %v2105 = vld [vmem:[%s2103 + $0x8] sm:$0xff]
        %v2106 = vmul.f32 %v2050, %v2104
        %v2107 = vmul.f32 %v2051, %v2105
        %2108 = vrot.lane.b32.xlu0 %v2050, 127
        %v2109 = vpop.permute.xlu0 %2108
        %2110 = vrot.lane.b32.xlu0 %v2051, 127
        %v2111 = vpop.permute.xlu0 %2110
        %v2112 = vsel %vm740, %v2109, %v2111
        %v2113 = vsel %vm740, %v2111, %v2109
        %s2114 = scalar_lea.vmem [#allocation9], 80
        %v2115 = vld [vmem:[%s2114] sm:$0xff]
        %v2116 = vld [vmem:[%s2114 + $0x8] sm:$0xff]
        %v2117 = vmul.f32 %v2112, %v2115
        %v2118 = vmul.f32 %v2113, %v2116
        %2119 = vrot.lane.b32.xlu0 %v2050, 113
        %v2120 = vpop.permute.xlu0 %2119
        %2121 = vrot.lane.b32.xlu0 %v2051, 113
        %v2122 = vpop.permute.xlu0 %2121
        %v2123 = vsel %vm752, %v2120, %v2122
        %v2124 = vsel %vm752, %v2122, %v2120
        %s2125 = scalar_lea.vmem [#allocation9], 96
        %v2126 = vld [vmem:[%s2125] sm:$0xff]
        %v2127 = vld [vmem:[%s2125 + $0x8] sm:$0xff]
        %v2128 = vmul.f32 %v2123, %v2126
        %v2129 = vmul.f32 %v2124, %v2127
        %2130 = vrot.lane.b32.xlu0 %v2050, 112
        %v2131 = vpop.permute.xlu0 %2130
        %2132 = vrot.lane.b32.xlu0 %v2051, 112
        %v2133 = vpop.permute.xlu0 %2132
        %v2134 = vsel %vm764, %v2131, %v2133
        %v2135 = vsel %vm764, %v2133, %v2131
        %s2136 = scalar_lea.vmem [#allocation9], 112
        %v2137 = vld [vmem:[%s2136] sm:$0xff]
        %v2138 = vld [vmem:[%s2136 + $0x8] sm:$0xff]
        %v2139 = vmul.f32 %v2134, %v2137
        %v2140 = vmul.f32 %v2135, %v2138
        %2141 = vrot.lane.b32.xlu0 %v2050, 111
        %v2142 = vpop.permute.xlu0 %2141
        %2143 = vrot.lane.b32.xlu0 %v2051, 111
        %v2144 = vpop.permute.xlu0 %2143
        %v2145 = vsel %vm776, %v2142, %v2144
        %v2146 = vsel %vm776, %v2144, %v2142
        %s2147 = scalar_lea.vmem [#allocation9], 128
        %v2148 = vld [vmem:[%s2147] sm:$0xff]
        %v2149 = vld [vmem:[%s2147 + $0x8] sm:$0xff]
        %v2150 = vmul.f32 %v2145, %v2148
        %v2151 = vmul.f32 %v2146, %v2149
        %v2152 = vadd.f32 %v2068, %v2079
        %v2153 = vadd.f32 %v2069, %v2080
        %v2154 = vadd.f32 %v2090, %v2101
        %v2155 = vadd.f32 %v2091, %v2102
        %v2156 = vadd.f32 %v2106, %v2117
        %v2157 = vadd.f32 %v2107, %v2118
        %v2158 = vadd.f32 %v2128, %v2139
        %v2159 = vadd.f32 %v2129, %v2140
        %v2160 = vadd.f32 %v2152, %v2154
        %v2161 = vadd.f32 %v2153, %v2155
        %v2162 = vadd.f32 %v2156, %v2158
        %v2163 = vadd.f32 %v2157, %v2159
        %v2164 = vadd.f32 %v2160, %v2162
        %v2165 = vadd.f32 %v2161, %v2163
        %v2166 = vadd.f32 %v2164, %v2150
        %v2167 = vadd.f32 %v2165, %v2151
        %2168 = vst [vmem:[#allocation2] sm:$0xff] %v2166
        %2169 = vst [vmem:[#allocation2 + $0x8] sm:$0xff] %v2167
        %v2170 = vadd.f32 %v2166, %v2052
        %v2171 = vadd.f32 %v2167, %v2053
        %2172 = vrot.lane.b32.xlu0 %v2170, 17
        %v2173 = vpop.permute.xlu0 %2172
        %2174 = vrot.lane.b32.xlu0 %v2171, 17
        %v2175 = vpop.permute.xlu0 %2174
        %v2176 = vsel %vm688, %v2173, %v2175
        %v2177 = vsel %vm688, %v2175, %v2173
        %s2178 = scalar_lea.vmem [#allocation9], 144
        %v2179 = vld [vmem:[%s2178] sm:$0xff]
        %v2180 = vld [vmem:[%s2178 + $0x8] sm:$0xff]
        %v2181 = vmul.f32 %v2177, %v2179
        %v2182 = vmul.f32 %v2176, %v2180
        %2183 = vrot.lane.b32.xlu0 %v2170, 16
        %v2184 = vpop.permute.xlu0 %2183
        %2185 = vrot.lane.b32.xlu0 %v2171, 16
        %v2186 = vpop.permute.xlu0 %2185
        %v2187 = vsel %vm699, %v2184, %v2186
        %v2188 = vsel %vm699, %v2186, %v2184
        %s2189 = scalar_lea.vmem [#allocation9], 160
        %v2190 = vld [vmem:[%s2189] sm:$0xff]
        %v2191 = vld [vmem:[%s2189 + $0x8] sm:$0xff]
        %v2192 = vmul.f32 %v2188, %v2190
        %v2193 = vmul.f32 %v2187, %v2191
        %2194 = vrot.lane.b32.xlu0 %v2170, 15
        %v2195 = vpop.permute.xlu0 %2194
        %2196 = vrot.lane.b32.xlu0 %v2171, 15
        %v2197 = vpop.permute.xlu0 %2196
        %v2198 = vsel %vm711, %v2195, %v2197
        %v2199 = vsel %vm711, %v2197, %v2195
        %s2200 = scalar_lea.vmem [#allocation9], 176
        %v2201 = vld [vmem:[%s2200] sm:$0xff]
        %v2202 = vld [vmem:[%s2200 + $0x8] sm:$0xff]
        %v2203 = vmul.f32 %v2199, %v2201
        %v2204 = vmul.f32 %v2198, %v2202
        %2205 = vrot.lane.b32.xlu0 %v2170, 1
        %v2206 = vpop.permute.xlu0 %2205
        %2207 = vrot.lane.b32.xlu0 %v2171, 1
        %v2208 = vpop.permute.xlu0 %2207
        %v2209 = vsel %vm723, %v2206, %v2208
        %v2210 = vsel %vm723, %v2208, %v2206
        %s2211 = scalar_lea.vmem [#allocation9], 192
        %v2212 = vld [vmem:[%s2211] sm:$0xff]
        %v2213 = vld [vmem:[%s2211 + $0x8] sm:$0xff]
        %v2214 = vmul.f32 %v2210, %v2212
        %v2215 = vmul.f32 %v2209, %v2213
        %s2216 = scalar_lea.vmem [#allocation9], 208
        %v2217 = vld [vmem:[%s2216] sm:$0xff]
        %v2218 = vld [vmem:[%s2216 + $0x8] sm:$0xff]
        %v2219 = vmul.f32 %v2170, %v2217
        %v2220 = vmul.f32 %v2171, %v2218
        %2221 = vrot.lane.b32.xlu0 %v2170, 127
        %v2222 = vpop.permute.xlu0 %2221
        %2223 = vrot.lane.b32.xlu0 %v2171, 127
        %v2224 = vpop.permute.xlu0 %2223
        %v2225 = vsel %vm740, %v2222, %v2224
        %v2226 = vsel %vm740, %v2224, %v2222
        %s2227 = scalar_lea.vmem [#allocation9], 224
        %v2228 = vld [vmem:[%s2227] sm:$0xff]
        %v2229 = vld [vmem:[%s2227 + $0x8] sm:$0xff]
        %v2230 = vmul.f32 %v2225, %v2228
        %v2231 = vmul.f32 %v2226, %v2229
        %2232 = vrot.lane.b32.xlu0 %v2170, 113
        %v2233 = vpop.permute.xlu0 %2232
        %2234 = vrot.lane.b32.xlu0 %v2171, 113
        %v2235 = vpop.permute.xlu0 %2234
        %v2236 = vsel %vm752, %v2233, %v2235
        %v2237 = vsel %vm752, %v2235, %v2233
        %s2238 = scalar_lea.vmem [#allocation9], 240
        %v2239 = vld [vmem:[%s2238] sm:$0xff]
        %v2240 = vld [vmem:[%s2238 + $0x8] sm:$0xff]
        %v2241 = vmul.f32 %v2236, %v2239
        %v2242 = vmul.f32 %v2237, %v2240
        %2243 = vrot.lane.b32.xlu0 %v2170, 112
        %v2244 = vpop.permute.xlu0 %2243
        %2245 = vrot.lane.b32.xlu0 %v2171, 112
        %v2246 = vpop.permute.xlu0 %2245
        %v2247 = vsel %vm764, %v2244, %v2246
        %v2248 = vsel %vm764, %v2246, %v2244
        %s2249 = scalar_lea.vmem [#allocation9], 256
        %v2250 = vld [vmem:[%s2249] sm:$0xff]
        %v2251 = vld [vmem:[%s2249 + $0x8] sm:$0xff]
        %v2252 = vmul.f32 %v2247, %v2250
        %v2253 = vmul.f32 %v2248, %v2251
        %2254 = vrot.lane.b32.xlu0 %v2170, 111
        %v2255 = vpop.permute.xlu0 %2254
        %2256 = vrot.lane.b32.xlu0 %v2171, 111
        %v2257 = vpop.permute.xlu0 %2256
        %v2258 = vsel %vm776, %v2255, %v2257
        %v2259 = vsel %vm776, %v2257, %v2255
        %s2260 = scalar_lea.vmem [#allocation9], 272
        %v2261 = vld [vmem:[%s2260] sm:$0xff]
        %v2262 = vld [vmem:[%s2260 + $0x8] sm:$0xff]
        %v2263 = vmul.f32 %v2258, %v2261
        %v2264 = vmul.f32 %v2259, %v2262
        %v2265 = vadd.f32 %v2181, %v2192
        %v2266 = vadd.f32 %v2182, %v2193
        %v2267 = vadd.f32 %v2203, %v2214
        %v2268 = vadd.f32 %v2204, %v2215
        %v2269 = vadd.f32 %v2219, %v2230
        %v2270 = vadd.f32 %v2220, %v2231
        %v2271 = vadd.f32 %v2241, %v2252
        %v2272 = vadd.f32 %v2242, %v2253
        %v2273 = vadd.f32 %v2265, %v2267
        %v2274 = vadd.f32 %v2266, %v2268
        %v2275 = vadd.f32 %v2269, %v2271
        %v2276 = vadd.f32 %v2270, %v2272
        %v2277 = vadd.f32 %v2273, %v2275
        %v2278 = vadd.f32 %v2274, %v2276
        %v2279 = vadd.f32 %v2277, %v2263
        %v2280 = vadd.f32 %v2278, %v2264
        %2281 = vst [vmem:[#allocation2 + $0x10] sm:$0xff] %v2279
        %2282 = vst [vmem:[#allocation2 + $0x18] sm:$0xff] %v2280
        %v2283 = vadd.f32 %v2279, %v2054
        %v2284 = vadd.f32 %v2280, %v2055
        %2285 = vrot.lane.b32.xlu0 %v2283, 17
        %v2286 = vpop.permute.xlu0 %2285
        %2287 = vrot.lane.b32.xlu0 %v2284, 17
        %v2288 = vpop.permute.xlu0 %2287
        %v2289 = vsel %vm688, %v2286, %v2288
        %v2290 = vsel %vm688, %v2288, %v2286
        %s2291 = scalar_lea.vmem [#allocation9], 288
        %v2292 = vld [vmem:[%s2291] sm:$0xff]
        %v2293 = vld [vmem:[%s2291 + $0x8] sm:$0xff]
        %v2294 = vmul.f32 %v2290, %v2292
        %v2295 = vmul.f32 %v2289, %v2293
        %2296 = vrot.lane.b32.xlu0 %v2283, 16
        %v2297 = vpop.permute.xlu0 %2296
        %2298 = vrot.lane.b32.xlu0 %v2284, 16
        %v2299 = vpop.permute.xlu0 %2298
        %v2300 = vsel %vm699, %v2297, %v2299
        %v2301 = vsel %vm699, %v2299, %v2297
        %s2302 = scalar_lea.vmem [#allocation9], 304
        %v2303 = vld [vmem:[%s2302] sm:$0xff]
        %v2304 = vld [vmem:[%s2302 + $0x8] sm:$0xff]
        %v2305 = vmul.f32 %v2301, %v2303
        %v2306 = vmul.f32 %v2300, %v2304
        %2307 = vrot.lane.b32.xlu0 %v2283, 15
        %v2308 = vpop.permute.xlu0 %2307
        %2309 = vrot.lane.b32.xlu0 %v2284, 15
        %v2310 = vpop.permute.xlu0 %2309
        %v2311 = vsel %vm711, %v2308, %v2310
        %v2312 = vsel %vm711, %v2310, %v2308
        %s2313 = scalar_lea.vmem [#allocation9], 320
        %v2314 = vld [vmem:[%s2313] sm:$0xff]
        %v2315 = vld [vmem:[%s2313 + $0x8] sm:$0xff]
        %v2316 = vmul.f32 %v2312, %v2314
        %v2317 = vmul.f32 %v2311, %v2315
        %2318 = vrot.lane.b32.xlu0 %v2283, 1
        %v2319 = vpop.permute.xlu0 %2318
        %2320 = vrot.lane.b32.xlu0 %v2284, 1
        %v2321 = vpop.permute.xlu0 %2320
        %v2322 = vsel %vm723, %v2319, %v2321
        %v2323 = vsel %vm723, %v2321, %v2319
        %s2324 = scalar_lea.vmem [#allocation9], 336
        %v2325 = vld [vmem:[%s2324] sm:$0xff]
        %v2326 = vld [vmem:[%s2324 + $0x8] sm:$0xff]
        %v2327 = vmul.f32 %v2323, %v2325
        %v2328 = vmul.f32 %v2322, %v2326
        %s2329 = scalar_lea.vmem [#allocation9], 352
        %v2330 = vld [vmem:[%s2329] sm:$0xff]
        %v2331 = vld [vmem:[%s2329 + $0x8] sm:$0xff]
        %v2332 = vmul.f32 %v2283, %v2330
        %v2333 = vmul.f32 %v2284, %v2331
        %2334 = vrot.lane.b32.xlu0 %v2283, 127
        %v2335 = vpop.permute.xlu0 %2334
        %2336 = vrot.lane.b32.xlu0 %v2284, 127
        %v2337 = vpop.permute.xlu0 %2336
        %v2338 = vsel %vm740, %v2335, %v2337
        %v2339 = vsel %vm740, %v2337, %v2335
        %s2340 = scalar_lea.vmem [#allocation9], 368
        %v2341 = vld [vmem:[%s2340] sm:$0xff]
        %v2342 = vld [vmem:[%s2340 + $0x8] sm:$0xff]
        %v2343 = vmul.f32 %v2338, %v2341
        %v2344 = vmul.f32 %v2339, %v2342
        %2345 = vrot.lane.b32.xlu0 %v2283, 113
        %v2346 = vpop.permute.xlu0 %2345
        %2347 = vrot.lane.b32.xlu0 %v2284, 113
        %v2348 = vpop.permute.xlu0 %2347
        %v2349 = vsel %vm752, %v2346, %v2348
        %v2350 = vsel %vm752, %v2348, %v2346
        %s2351 = scalar_lea.vmem [#allocation9], 384
        %v2352 = vld [vmem:[%s2351] sm:$0xff]
        %v2353 = vld [vmem:[%s2351 + $0x8] sm:$0xff]
        %v2354 = vmul.f32 %v2349, %v2352
        %v2355 = vmul.f32 %v2350, %v2353
        %2356 = vrot.lane.b32.xlu0 %v2283, 112
        %v2357 = vpop.permute.xlu0 %2356
        %2358 = vrot.lane.b32.xlu0 %v2284, 112
        %v2359 = vpop.permute.xlu0 %2358
        %v2360 = vsel %vm764, %v2357, %v2359
        %v2361 = vsel %vm764, %v2359, %v2357
        %s2362 = scalar_lea.vmem [#allocation9], 400
        %v2363 = vld [vmem:[%s2362] sm:$0xff]
        %v2364 = vld [vmem:[%s2362 + $0x8] sm:$0xff]
        %v2365 = vmul.f32 %v2360, %v2363
        %v2366 = vmul.f32 %v2361, %v2364
        %2367 = vrot.lane.b32.xlu0 %v2283, 111
        %v2368 = vpop.permute.xlu0 %2367
        %2369 = vrot.lane.b32.xlu0 %v2284, 111
        %v2370 = vpop.permute.xlu0 %2369
        %v2371 = vsel %vm776, %v2368, %v2370
        %v2372 = vsel %vm776, %v2370, %v2368
        %s2373 = scalar_lea.vmem [#allocation9], 416
        %v2374 = vld [vmem:[%s2373] sm:$0xff]
        %v2375 = vld [vmem:[%s2373 + $0x8] sm:$0xff]
        %v2376 = vmul.f32 %v2371, %v2374
        %v2377 = vmul.f32 %v2372, %v2375
        %v2378 = vadd.f32 %v2294, %v2305
        %v2379 = vadd.f32 %v2295, %v2306
        %v2380 = vadd.f32 %v2316, %v2327
        %v2381 = vadd.f32 %v2317, %v2328
        %v2382 = vadd.f32 %v2332, %v2343
        %v2383 = vadd.f32 %v2333, %v2344
        %v2384 = vadd.f32 %v2354, %v2365
        %v2385 = vadd.f32 %v2355, %v2366
        %v2386 = vadd.f32 %v2378, %v2380
        %v2387 = vadd.f32 %v2379, %v2381
        %v2388 = vadd.f32 %v2382, %v2384
        %v2389 = vadd.f32 %v2383, %v2385
        %v2390 = vadd.f32 %v2386, %v2388
        %v2391 = vadd.f32 %v2387, %v2389
        %v2392 = vadd.f32 %v2390, %v2376
        %v2393 = vadd.f32 %v2391, %v2377
        %2394 = vst [vmem:[#allocation2 + $0x20] sm:$0xff] %v2392
        %2395 = vst [vmem:[#allocation2 + $0x28] sm:$0xff] %v2393
        %v2396 = vadd.f32 %v2392, %v2056
        %v2397 = vadd.f32 %v2393, %v2057
        %2398 = vrot.lane.b32.xlu0 %v2396, 17
        %v2399 = vpop.permute.xlu0 %2398
        %2400 = vrot.lane.b32.xlu0 %v2397, 17
        %v2401 = vpop.permute.xlu0 %2400
        %v2402 = vsel %vm688, %v2399, %v2401
        %v2403 = vsel %vm688, %v2401, %v2399
        %s2404 = scalar_lea.vmem [#allocation9], 432
        %v2405 = vld [vmem:[%s2404] sm:$0xff]
        %v2406 = vld [vmem:[%s2404 + $0x8] sm:$0xff]
        %v2407 = vmul.f32 %v2403, %v2405
        %v2408 = vmul.f32 %v2402, %v2406
        %2409 = vrot.lane.b32.xlu0 %v2396, 16
        %v2410 = vpop.permute.xlu0 %2409
        %2411 = vrot.lane.b32.xlu0 %v2397, 16
        %v2412 = vpop.permute.xlu0 %2411
        %v2413 = vsel %vm699, %v2410, %v2412
        %v2414 = vsel %vm699, %v2412, %v2410
        %s2415 = scalar_lea.vmem [#allocation9], 448
        %v2416 = vld [vmem:[%s2415] sm:$0xff]
        %v2417 = vld [vmem:[%s2415 + $0x8] sm:$0xff]
        %v2418 = vmul.f32 %v2414, %v2416
        %v2419 = vmul.f32 %v2413, %v2417
        %2420 = vrot.lane.b32.xlu0 %v2396, 15
        %v2421 = vpop.permute.xlu0 %2420
        %2422 = vrot.lane.b32.xlu0 %v2397, 15
        %v2423 = vpop.permute.xlu0 %2422
        %v2424 = vsel %vm711, %v2421, %v2423
        %v2425 = vsel %vm711, %v2423, %v2421
        %s2426 = scalar_lea.vmem [#allocation9], 464
        %v2427 = vld [vmem:[%s2426] sm:$0xff]
        %v2428 = vld [vmem:[%s2426 + $0x8] sm:$0xff]
        %v2429 = vmul.f32 %v2425, %v2427
        %v2430 = vmul.f32 %v2424, %v2428
        %2431 = vrot.lane.b32.xlu0 %v2396, 1
        %v2432 = vpop.permute.xlu0 %2431
        %2433 = vrot.lane.b32.xlu0 %v2397, 1
        %v2434 = vpop.permute.xlu0 %2433
        %v2435 = vsel %vm723, %v2432, %v2434
        %v2436 = vsel %vm723, %v2434, %v2432
        %s2437 = scalar_lea.vmem [#allocation9], 480
        %v2438 = vld [vmem:[%s2437] sm:$0xff]
        %v2439 = vld [vmem:[%s2437 + $0x8] sm:$0xff]
        %v2440 = vmul.f32 %v2436, %v2438
        %v2441 = vmul.f32 %v2435, %v2439
        %s2442 = scalar_lea.vmem [#allocation9], 496
        %v2443 = vld [vmem:[%s2442] sm:$0xff]
        %v2444 = vld [vmem:[%s2442 + $0x8] sm:$0xff]
        %v2445 = vmul.f32 %v2396, %v2443
        %v2446 = vmul.f32 %v2397, %v2444
        %2447 = vrot.lane.b32.xlu0 %v2396, 127
        %v2448 = vpop.permute.xlu0 %2447
        %2449 = vrot.lane.b32.xlu0 %v2397, 127
        %v2450 = vpop.permute.xlu0 %2449
        %v2451 = vsel %vm740, %v2448, %v2450
        %v2452 = vsel %vm740, %v2450, %v2448
        %s2453 = scalar_lea.vmem [#allocation9], 512
        %v2454 = vld [vmem:[%s2453] sm:$0xff]
        %v2455 = vld [vmem:[%s2453 + $0x8] sm:$0xff]
        %v2456 = vmul.f32 %v2451, %v2454
        %v2457 = vmul.f32 %v2452, %v2455
        %2458 = vrot.lane.b32.xlu0 %v2396, 113
        %v2459 = vpop.permute.xlu0 %2458
        %2460 = vrot.lane.b32.xlu0 %v2397, 113
        %v2461 = vpop.permute.xlu0 %2460
        %v2462 = vsel %vm752, %v2459, %v2461
        %v2463 = vsel %vm752, %v2461, %v2459
        %s2464 = scalar_lea.vmem [#allocation9], 528
        %v2465 = vld [vmem:[%s2464] sm:$0xff]
        %v2466 = vld [vmem:[%s2464 + $0x8] sm:$0xff]
        %v2467 = vmul.f32 %v2462, %v2465
        %v2468 = vmul.f32 %v2463, %v2466
        %2469 = vrot.lane.b32.xlu0 %v2396, 112
        %v2470 = vpop.permute.xlu0 %2469
        %2471 = vrot.lane.b32.xlu0 %v2397, 112
        %v2472 = vpop.permute.xlu0 %2471
        %v2473 = vsel %vm764, %v2470, %v2472
        %v2474 = vsel %vm764, %v2472, %v2470
        %s2475 = scalar_lea.vmem [#allocation9], 544
        %v2476 = vld [vmem:[%s2475] sm:$0xff]
        %v2477 = vld [vmem:[%s2475 + $0x8] sm:$0xff]
        %v2478 = vmul.f32 %v2473, %v2476
        %v2479 = vmul.f32 %v2474, %v2477
        %2480 = vrot.lane.b32.xlu0 %v2396, 111
        %v2481 = vpop.permute.xlu0 %2480
        %2482 = vrot.lane.b32.xlu0 %v2397, 111
        %v2483 = vpop.permute.xlu0 %2482
        %v2484 = vsel %vm776, %v2481, %v2483
        %v2485 = vsel %vm776, %v2483, %v2481
        %s2486 = scalar_lea.vmem [#allocation9], 560
        %v2487 = vld [vmem:[%s2486] sm:$0xff]
        %v2488 = vld [vmem:[%s2486 + $0x8] sm:$0xff]
        %v2489 = vmul.f32 %v2484, %v2487
        %v2490 = vmul.f32 %v2485, %v2488
        %v2491 = vadd.f32 %v2407, %v2418
        %v2492 = vadd.f32 %v2408, %v2419
        %v2493 = vadd.f32 %v2429, %v2440
        %v2494 = vadd.f32 %v2430, %v2441
        %v2495 = vadd.f32 %v2445, %v2456
        %v2496 = vadd.f32 %v2446, %v2457
        %v2497 = vadd.f32 %v2467, %v2478
        %v2498 = vadd.f32 %v2468, %v2479
        %v2499 = vadd.f32 %v2491, %v2493
        %v2500 = vadd.f32 %v2492, %v2494
        %v2501 = vadd.f32 %v2495, %v2497
        %v2502 = vadd.f32 %v2496, %v2498
        %v2503 = vadd.f32 %v2499, %v2501
        %v2504 = vadd.f32 %v2500, %v2502
        %v2505 = vadd.f32 %v2503, %v2489
        %v2506 = vadd.f32 %v2504, %v2490
        %2507 = vst [vmem:[#allocation2 + $0x30] sm:$0xff] %v2505
        %2508 = vst [vmem:[#allocation2 + $0x38] sm:$0xff] %v2506
        %v2509 = vadd.f32 %v2505, %v2058
        %v2510 = vadd.f32 %v2506, %v2059
        %2511 = vrot.lane.b32.xlu0 %v2509, 17
        %v2512 = vpop.permute.xlu0 %2511
        %2513 = vrot.lane.b32.xlu0 %v2510, 17
        %v2514 = vpop.permute.xlu0 %2513
        %v2515 = vsel %vm688, %v2512, %v2514
        %v2516 = vsel %vm688, %v2514, %v2512
        %s2517 = scalar_lea.vmem [#allocation9], 576
        %v2518 = vld [vmem:[%s2517] sm:$0xff]
        %v2519 = vld [vmem:[%s2517 + $0x8] sm:$0xff]
        %v2520 = vmul.f32 %v2516, %v2518
        %v2521 = vmul.f32 %v2515, %v2519
        %2522 = vrot.lane.b32.xlu0 %v2509, 16
        %v2523 = vpop.permute.xlu0 %2522
        %2524 = vrot.lane.b32.xlu0 %v2510, 16
        %v2525 = vpop.permute.xlu0 %2524
        %v2526 = vsel %vm699, %v2523, %v2525
        %v2527 = vsel %vm699, %v2525, %v2523
        %s2528 = scalar_lea.vmem [#allocation9], 592
        %v2529 = vld [vmem:[%s2528] sm:$0xff]
        %v2530 = vld [vmem:[%s2528 + $0x8] sm:$0xff]
        %v2531 = vmul.f32 %v2527, %v2529
        %v2532 = vmul.f32 %v2526, %v2530
        %2533 = vrot.lane.b32.xlu0 %v2509, 15
        %v2534 = vpop.permute.xlu0 %2533
        %2535 = vrot.lane.b32.xlu0 %v2510, 15
        %v2536 = vpop.permute.xlu0 %2535
        %v2537 = vsel %vm711, %v2534, %v2536
        %v2538 = vsel %vm711, %v2536, %v2534
        %s2539 = scalar_lea.vmem [#allocation9], 608
        %v2540 = vld [vmem:[%s2539] sm:$0xff]
        %v2541 = vld [vmem:[%s2539 + $0x8] sm:$0xff]
        %v2542 = vmul.f32 %v2538, %v2540
        %v2543 = vmul.f32 %v2537, %v2541
        %2544 = vrot.lane.b32.xlu0 %v2509, 1
        %v2545 = vpop.permute.xlu0 %2544
        %2546 = vrot.lane.b32.xlu0 %v2510, 1
        %v2547 = vpop.permute.xlu0 %2546
        %v2548 = vsel %vm723, %v2545, %v2547
        %v2549 = vsel %vm723, %v2547, %v2545
        %s2550 = scalar_lea.vmem [#allocation9], 624
        %v2551 = vld [vmem:[%s2550] sm:$0xff]
        %v2552 = vld [vmem:[%s2550 + $0x8] sm:$0xff]
        %v2553 = vmul.f32 %v2549, %v2551
        %v2554 = vmul.f32 %v2548, %v2552
        %s2555 = scalar_lea.vmem [#allocation9], 640
        %v2556 = vld [vmem:[%s2555] sm:$0xff]
        %v2557 = vld [vmem:[%s2555 + $0x8] sm:$0xff]
        %v2558 = vmul.f32 %v2509, %v2556
        %v2559 = vmul.f32 %v2510, %v2557
        %2560 = vrot.lane.b32.xlu0 %v2509, 127
        %v2561 = vpop.permute.xlu0 %2560
        %2562 = vrot.lane.b32.xlu0 %v2510, 127
        %v2563 = vpop.permute.xlu0 %2562
        %v2564 = vsel %vm740, %v2561, %v2563
        %v2565 = vsel %vm740, %v2563, %v2561
        %s2566 = scalar_lea.vmem [#allocation9], 656
        %v2567 = vld [vmem:[%s2566] sm:$0xff]
        %v2568 = vld [vmem:[%s2566 + $0x8] sm:$0xff]
        %v2569 = vmul.f32 %v2564, %v2567
        %v2570 = vmul.f32 %v2565, %v2568
        %2571 = vrot.lane.b32.xlu0 %v2509, 113
        %v2572 = vpop.permute.xlu0 %2571
        %2573 = vrot.lane.b32.xlu0 %v2510, 113
        %v2574 = vpop.permute.xlu0 %2573
        %v2575 = vsel %vm752, %v2572, %v2574
        %v2576 = vsel %vm752, %v2574, %v2572
        %s2577 = scalar_lea.vmem [#allocation9], 672
        %v2578 = vld [vmem:[%s2577] sm:$0xff]
        %v2579 = vld [vmem:[%s2577 + $0x8] sm:$0xff]
        %v2580 = vmul.f32 %v2575, %v2578
        %v2581 = vmul.f32 %v2576, %v2579
        %2582 = vrot.lane.b32.xlu0 %v2509, 112
        %v2583 = vpop.permute.xlu0 %2582
        %2584 = vrot.lane.b32.xlu0 %v2510, 112
        %v2585 = vpop.permute.xlu0 %2584
        %v2586 = vsel %vm764, %v2583, %v2585
        %v2587 = vsel %vm764, %v2585, %v2583
        %s2588 = scalar_lea.vmem [#allocation9], 688
        %v2589 = vld [vmem:[%s2588] sm:$0xff]
        %v2590 = vld [vmem:[%s2588 + $0x8] sm:$0xff]
        %v2591 = vmul.f32 %v2586, %v2589
        %v2592 = vmul.f32 %v2587, %v2590
        %2593 = vrot.lane.b32.xlu0 %v2509, 111
        %v2594 = vpop.permute.xlu0 %2593
        %2595 = vrot.lane.b32.xlu0 %v2510, 111
        %v2596 = vpop.permute.xlu0 %2595
        %v2597 = vsel %vm776, %v2594, %v2596
        %v2598 = vsel %vm776, %v2596, %v2594
        %s2599 = scalar_lea.vmem [#allocation9], 704
        %v2600 = vld [vmem:[%s2599] sm:$0xff]
        %v2601 = vld [vmem:[%s2599 + $0x8] sm:$0xff]
        %v2602 = vmul.f32 %v2597, %v2600
        %v2603 = vmul.f32 %v2598, %v2601
        %v2604 = vadd.f32 %v2520, %v2531
        %v2605 = vadd.f32 %v2521, %v2532
        %v2606 = vadd.f32 %v2542, %v2553
        %v2607 = vadd.f32 %v2543, %v2554
        %v2608 = vadd.f32 %v2558, %v2569
        %v2609 = vadd.f32 %v2559, %v2570
        %v2610 = vadd.f32 %v2580, %v2591
        %v2611 = vadd.f32 %v2581, %v2592
        %v2612 = vadd.f32 %v2604, %v2606
        %v2613 = vadd.f32 %v2605, %v2607
        %v2614 = vadd.f32 %v2608, %v2610
        %v2615 = vadd.f32 %v2609, %v2611
        %v2616 = vadd.f32 %v2612, %v2614
        %v2617 = vadd.f32 %v2613, %v2615
        %v2618 = vadd.f32 %v2616, %v2602
        %v2619 = vadd.f32 %v2617, %v2603
        %2620 = vst [vmem:[#allocation2 + $0x40] sm:$0xff] %v2618
        %2621 = vst [vmem:[#allocation2 + $0x48] sm:$0xff] %v2619
        %v2622 = vld [vmem:[#allocation11] sm:$0xff]
        %v2623 = vld [vmem:[#allocation11 + $0x8] sm:$0xff]
        %v2624 = vld [vmem:[#allocation11 + $0x10] sm:$0xff]
        %v2625 = vld [vmem:[#allocation11 + $0x18] sm:$0x3f]
        %v2626 = vld [vmem:[#allocation2] sm:$0xff]
        %v2627 = vld [vmem:[#allocation2 + $0x8] sm:$0xff]
        %v2628 = vld [vmem:[#allocation2 + $0x10] sm:$0xff]
        %v2629 = vld [vmem:[#allocation2 + $0x18] sm:$0xff]
        %v2630 = vld [vmem:[#allocation2 + $0x20] sm:$0xff]
        %v2631 = vld [vmem:[#allocation2 + $0x28] sm:$0xff]
        %v2632 = vld [vmem:[#allocation2 + $0x30] sm:$0xff]
        %v2633 = vld [vmem:[#allocation2 + $0x38] sm:$0xff]
        %v2634 = vld [vmem:[#allocation2 + $0x40] sm:$0xff]
        %v2635 = vld [vmem:[#allocation2 + $0x48] sm:$0xff]
        %v2637 = vsel %vm1268, %v2622, 0
        %v2640 = vsel %vm1268, %v2623, 0
        %v2643 = vsel %vm1268, %v2624, 0
        %v2646 = vsel %vm1268, %v2625, 0
        %2648 = vmatpush.msra.mxu0 0.0
        %2649 = vmatpush.msra.mxu0 0.0
        %2650 = vmatpush.msra.mxu0 0.0
        %2651 = vmatpush.msra.mxu0 0.0
        %2652 = vmatpush.msra.mxu0 0.0
        %2653 = vmatpush.msra.mxu0 0.0
        %2654 = vmatpush.msra.mxu0 0.0
        %2655 = vmatpush.msra.mxu0 0.0
        %2656 = vmatpush.msra.mxu0 0.0
        %2657 = vmatpush.msra.mxu0 0.0
        %2658 = vmatpush.msra.mxu0 0.0
        %2659 = vmatpush.msra.mxu0 %v2634
        %2660 = vmatpush.msra.mxu0 %v2632
        %2661 = vmatpush.msra.mxu0 %v2630
        %2662 = vmatpush.msra.mxu0 %v2628
        %2663 = vmatpush.msra.mxu0 %v2626
        %2664 = vmatmul.f32.gmra.mxu0 %v2637
        %v2665 = vpop.f32.mrf.mxu0
        %v2666 = vadd.f32 0.0, %v2665
        %2667 = vmatmul.f32.gmra.mxu0 %v2640
        %v2668 = vpop.f32.mrf.mxu0
        %v2669 = vadd.f32 0.0, %v2668
        %2670 = vmatmul.f32.gmra.mxu0 %v2643
        %v2671 = vpop.f32.mrf.mxu0
        %v2672 = vadd.f32 0.0, %v2671
        %2673 = vmatmul.f32.gmra.mxu0 %v2646
        %v2674 = vpop.f32.mrf.mxu0
        %v2675 = vadd.f32 0.0, %v2674
        %2676 = vdwg.mxu0
        %2677 = vmatpush.msra.mxu0 0.0
        %2678 = vmatpush.msra.mxu0 0.0
        %2679 = vmatpush.msra.mxu0 0.0
        %2680 = vmatpush.msra.mxu0 0.0
        %2681 = vmatpush.msra.mxu0 0.0
        %2682 = vmatpush.msra.mxu0 0.0
        %2683 = vmatpush.msra.mxu0 0.0
        %2684 = vmatpush.msra.mxu0 0.0
        %2685 = vmatpush.msra.mxu0 0.0
        %2686 = vmatpush.msra.mxu0 0.0
        %2687 = vmatpush.msra.mxu0 0.0
        %2688 = vmatpush.msra.mxu0 %v2635
        %2689 = vmatpush.msra.mxu0 %v2633
        %2690 = vmatpush.msra.mxu0 %v2631
        %2691 = vmatpush.msra.mxu0 %v2629
        %2692 = vmatpush.msra.mxu0 %v2627
        %2693 = vmatmul.f32.gmra.mxu0 %v2637
        %v2694 = vpop.f32.mrf.mxu0
        %v2695 = vadd.f32 0.0, %v2694
        %2696 = vmatmul.f32.gmra.mxu0 %v2640
        %v2697 = vpop.f32.mrf.mxu0
        %v2698 = vadd.f32 0.0, %v2697
        %2699 = vmatmul.f32.gmra.mxu0 %v2643
        %v2700 = vpop.f32.mrf.mxu0
        %v2701 = vadd.f32 0.0, %v2700
        %2702 = vmatmul.f32.gmra.mxu0 %v2646
        %v2703 = vpop.f32.mrf.mxu0
        %v2704 = vadd.f32 0.0, %v2703
        %2705 = vdwg.mxu0
        %v2706 = vmax.f32 %v2666, 0.0
        %v2707 = vmax.f32 %v2695, 0.0
        %v2708 = vmax.f32 %v2669, 0.0
        %v2709 = vmax.f32 %v2698, 0.0
        %v2710 = vmax.f32 %v2672, 0.0
        %v2711 = vmax.f32 %v2701, 0.0
        %v2712 = vmax.f32 %v2675, 0.0
        %v2713 = vmax.f32 %v2704, 0.0
        %v2714 = vld [vmem:[#allocation12] sm:$0xff]
        %v2715 = vld [vmem:[#allocation12 + $0x8] sm:$0xff]
        %v2716 = vld [vmem:[#allocation12 + $0x10] sm:$0xff]
        %v2717 = vld [vmem:[#allocation12 + $0x18] sm:$0xff]
        %v2719 = vsel %vm1351, %v2714, 0
        %v2722 = vsel %vm1351, %v2715, 0
        %v2725 = vsel %vm1351, %v2716, 0
        %v2728 = vsel %vm1351, %v2717, 0
        %v2731 = vsel %vm1364, %v2712, 0
        %v2734 = vsel %vm1364, %v2713, 0
        %2736 = vmatpush.msra.mxu0 0.0
        %2737 = vmatpush.msra.mxu0 0.0
        %2738 = vmatpush.msra.mxu0 0.0
        %2739 = vmatpush.msra.mxu0 0.0
        %2740 = vmatpush.msra.mxu0 0.0
        %2741 = vmatpush.msra.mxu0 0.0
        %2742 = vmatpush.msra.mxu0 0.0
        %2743 = vmatpush.msra.mxu0 0.0
        %2744 = vmatpush.msra.mxu0 0.0
        %2745 = vmatpush.msra.mxu0 0.0
        %2746 = vmatpush.msra.mxu0 0.0
        %2747 = vmatpush.msra.mxu0 0.0
        %2748 = vmatpush.msra.mxu0 %v2731
        %2749 = vmatpush.msra.mxu0 %v2710
        %2750 = vmatpush.msra.mxu0 %v2708
        %2751 = vmatpush.msra.mxu0 %v2706
        %2752 = vmatmul.f32.gmra.mxu0 %v2719
        %v2753 = vpop.f32.mrf.mxu0
        %v2754 = vadd.f32 0.0, %v2753
        %2755 = vmatmul.f32.gmra.mxu0 %v2722
        %v2756 = vpop.f32.mrf.mxu0
        %v2757 = vadd.f32 0.0, %v2756
        %2758 = vmatmul.f32.gmra.mxu0 %v2725
        %v2759 = vpop.f32.mrf.mxu0
        %v2760 = vadd.f32 0.0, %v2759
        %2761 = vmatmul.f32.gmra.mxu0 %v2728
        %v2762 = vpop.f32.mrf.mxu0
        %v2763 = vadd.f32 0.0, %v2762
        %2764 = vdwg.mxu0
        %2765 = vmatpush.msra.mxu0 0.0
        %2766 = vmatpush.msra.mxu0 0.0
        %2767 = vmatpush.msra.mxu0 0.0
        %2768 = vmatpush.msra.mxu0 0.0
        %2769 = vmatpush.msra.mxu0 0.0
        %2770 = vmatpush.msra.mxu0 0.0
        %2771 = vmatpush.msra.mxu0 0.0
        %2772 = vmatpush.msra.mxu0 0.0
        %2773 = vmatpush.msra.mxu0 0.0
        %2774 = vmatpush.msra.mxu0 0.0
        %2775 = vmatpush.msra.mxu0 0.0
        %2776 = vmatpush.msra.mxu0 0.0
        %2777 = vmatpush.msra.mxu0 %v2734
        %2778 = vmatpush.msra.mxu0 %v2711
        %2779 = vmatpush.msra.mxu0 %v2709
        %2780 = vmatpush.msra.mxu0 %v2707
        %2781 = vmatmul.f32.gmra.mxu0 %v2719
        %v2782 = vpop.f32.mrf.mxu0
        %v2783 = vadd.f32 0.0, %v2782
        %2784 = vmatmul.f32.gmra.mxu0 %v2722
        %v2785 = vpop.f32.mrf.mxu0
        %v2786 = vadd.f32 0.0, %v2785
        %2787 = vmatmul.f32.gmra.mxu0 %v2725
        %v2788 = vpop.f32.mrf.mxu0
        %v2789 = vadd.f32 0.0, %v2788
        %2790 = vmatmul.f32.gmra.mxu0 %v2728
        %v2791 = vpop.f32.mrf.mxu0
        %v2792 = vadd.f32 0.0, %v2791
        %2793 = vdwg.mxu0
        %v2794 = vmax.f32 %v2754, 0.0
        %v2795 = vmax.f32 %v2783, 0.0
        %v2796 = vmax.f32 %v2757, 0.0
        %v2797 = vmax.f32 %v2786, 0.0
        %v2798 = vmax.f32 %v2760, 0.0
        %v2799 = vmax.f32 %v2789, 0.0
        %v2800 = vmax.f32 %v2763, 0.0
        %v2801 = vmax.f32 %v2792, 0.0
        %2802 = vrot.lane.b32.xlu0 %v2794, 17
        %v2803 = vpop.permute.xlu0 %2802
        %2804 = vrot.lane.b32.xlu0 %v2795, 17
        %v2805 = vpop.permute.xlu0 %2804
        %v2806 = vsel %vm688, %v2803, %v2805
        %v2807 = vsel %vm688, %v2805, %v2803
        %v2808 = vld [vmem:[#allocation14] sm:$0xff]
        %v2809 = vld [vmem:[#allocation14 + $0x8] sm:$0xff]
        %v2810 = vmul.f32 %v2807, %v2808
        %v2811 = vmul.f32 %v2806, %v2809
        %2812 = vrot.lane.b32.xlu0 %v2794, 16
        %v2813 = vpop.permute.xlu0 %2812
        %2814 = vrot.lane.b32.xlu0 %v2795, 16
        %v2815 = vpop.permute.xlu0 %2814
        %v2816 = vsel %vm699, %v2813, %v2815
        %v2817 = vsel %vm699, %v2815, %v2813
        %s2818 = scalar_lea.vmem [#allocation14], 16
        %v2819 = vld [vmem:[%s2818] sm:$0xff]
        %v2820 = vld [vmem:[%s2818 + $0x8] sm:$0xff]
        %v2821 = vmul.f32 %v2817, %v2819
        %v2822 = vmul.f32 %v2816, %v2820
        %2823 = vrot.lane.b32.xlu0 %v2794, 15
        %v2824 = vpop.permute.xlu0 %2823
        %2825 = vrot.lane.b32.xlu0 %v2795, 15
        %v2826 = vpop.permute.xlu0 %2825
        %v2827 = vsel %vm711, %v2824, %v2826
        %v2828 = vsel %vm711, %v2826, %v2824
        %s2829 = scalar_lea.vmem [#allocation14], 32
        %v2830 = vld [vmem:[%s2829] sm:$0xff]
        %v2831 = vld [vmem:[%s2829 + $0x8] sm:$0xff]
        %v2832 = vmul.f32 %v2828, %v2830
        %v2833 = vmul.f32 %v2827, %v2831
        %2834 = vrot.lane.b32.xlu0 %v2794, 1
        %v2835 = vpop.permute.xlu0 %2834
        %2836 = vrot.lane.b32.xlu0 %v2795, 1
        %v2837 = vpop.permute.xlu0 %2836
        %v2838 = vsel %vm723, %v2835, %v2837
        %v2839 = vsel %vm723, %v2837, %v2835
        %s2840 = scalar_lea.vmem [#allocation14], 48
        %v2841 = vld [vmem:[%s2840] sm:$0xff]
        %v2842 = vld [vmem:[%s2840 + $0x8] sm:$0xff]
        %v2843 = vmul.f32 %v2839, %v2841
        %v2844 = vmul.f32 %v2838, %v2842
        %s2845 = scalar_lea.vmem [#allocation14], 64
        %v2846 = vld [vmem:[%s2845] sm:$0xff]
        %v2847 = vld [vmem:[%s2845 + $0x8] sm:$0xff]
        %v2848 = vmul.f32 %v2794, %v2846
        %v2849 = vmul.f32 %v2795, %v2847
        %2850 = vrot.lane.b32.xlu0 %v2794, 127
        %v2851 = vpop.permute.xlu0 %2850
        %2852 = vrot.lane.b32.xlu0 %v2795, 127
        %v2853 = vpop.permute.xlu0 %2852
        %v2854 = vsel %vm740, %v2851, %v2853
        %v2855 = vsel %vm740, %v2853, %v2851
        %s2856 = scalar_lea.vmem [#allocation14], 80
        %v2857 = vld [vmem:[%s2856] sm:$0xff]
        %v2858 = vld [vmem:[%s2856 + $0x8] sm:$0xff]
        %v2859 = vmul.f32 %v2854, %v2857
        %v2860 = vmul.f32 %v2855, %v2858
        %2861 = vrot.lane.b32.xlu0 %v2794, 113
        %v2862 = vpop.permute.xlu0 %2861
        %2863 = vrot.lane.b32.xlu0 %v2795, 113
        %v2864 = vpop.permute.xlu0 %2863
        %v2865 = vsel %vm752, %v2862, %v2864
        %v2866 = vsel %vm752, %v2864, %v2862
        %s2867 = scalar_lea.vmem [#allocation14], 96
        %v2868 = vld [vmem:[%s2867] sm:$0xff]
        %v2869 = vld [vmem:[%s2867 + $0x8] sm:$0xff]
        %v2870 = vmul.f32 %v2865, %v2868
        %v2871 = vmul.f32 %v2866, %v2869
        %2872 = vrot.lane.b32.xlu0 %v2794, 112
        %v2873 = vpop.permute.xlu0 %2872
        %2874 = vrot.lane.b32.xlu0 %v2795, 112
        %v2875 = vpop.permute.xlu0 %2874
        %v2876 = vsel %vm764, %v2873, %v2875
        %v2877 = vsel %vm764, %v2875, %v2873
        %s2878 = scalar_lea.vmem [#allocation14], 112
        %v2879 = vld [vmem:[%s2878] sm:$0xff]
        %v2880 = vld [vmem:[%s2878 + $0x8] sm:$0xff]
        %v2881 = vmul.f32 %v2876, %v2879
        %v2882 = vmul.f32 %v2877, %v2880
        %2883 = vrot.lane.b32.xlu0 %v2794, 111
        %v2884 = vpop.permute.xlu0 %2883
        %2885 = vrot.lane.b32.xlu0 %v2795, 111
        %v2886 = vpop.permute.xlu0 %2885
        %v2887 = vsel %vm776, %v2884, %v2886
        %v2888 = vsel %vm776, %v2886, %v2884
        %s2889 = scalar_lea.vmem [#allocation14], 128
        %v2890 = vld [vmem:[%s2889] sm:$0xff]
        %v2891 = vld [vmem:[%s2889 + $0x8] sm:$0xff]
        %v2892 = vmul.f32 %v2887, %v2890
        %v2893 = vmul.f32 %v2888, %v2891
        %v2894 = vadd.f32 %v2810, %v2821
        %v2895 = vadd.f32 %v2811, %v2822
        %v2896 = vadd.f32 %v2832, %v2843
        %v2897 = vadd.f32 %v2833, %v2844
        %v2898 = vadd.f32 %v2848, %v2859
        %v2899 = vadd.f32 %v2849, %v2860
        %v2900 = vadd.f32 %v2870, %v2881
        %v2901 = vadd.f32 %v2871, %v2882
        %v2902 = vadd.f32 %v2894, %v2896
        %v2903 = vadd.f32 %v2895, %v2897
        %v2904 = vadd.f32 %v2898, %v2900
        %v2905 = vadd.f32 %v2899, %v2901
        %v2906 = vadd.f32 %v2902, %v2904
        %v2907 = vadd.f32 %v2903, %v2905
        %v2908 = vadd.f32 %v2906, %v2892
        %v2909 = vadd.f32 %v2907, %v2893
        %2910 = vst [vmem:[#allocation2] sm:$0xff] %v2908
        %2911 = vst [vmem:[#allocation2 + $0x8] sm:$0xff] %v2909
        %v2912 = vadd.f32 %v2908, %v2796
        %v2913 = vadd.f32 %v2909, %v2797
        %2914 = vrot.lane.b32.xlu0 %v2912, 17
        %v2915 = vpop.permute.xlu0 %2914
        %2916 = vrot.lane.b32.xlu0 %v2913, 17
        %v2917 = vpop.permute.xlu0 %2916
        %v2918 = vsel %vm688, %v2915, %v2917
        %v2919 = vsel %vm688, %v2917, %v2915
        %s2920 = scalar_lea.vmem [#allocation14], 144
        %v2921 = vld [vmem:[%s2920] sm:$0xff]
        %v2922 = vld [vmem:[%s2920 + $0x8] sm:$0xff]
        %v2923 = vmul.f32 %v2919, %v2921
        %v2924 = vmul.f32 %v2918, %v2922
        %2925 = vrot.lane.b32.xlu0 %v2912, 16
        %v2926 = vpop.permute.xlu0 %2925
        %2927 = vrot.lane.b32.xlu0 %v2913, 16
        %v2928 = vpop.permute.xlu0 %2927
        %v2929 = vsel %vm699, %v2926, %v2928
        %v2930 = vsel %vm699, %v2928, %v2926
        %s2931 = scalar_lea.vmem [#allocation14], 160
        %v2932 = vld [vmem:[%s2931] sm:$0xff]
        %v2933 = vld [vmem:[%s2931 + $0x8] sm:$0xff]
        %v2934 = vmul.f32 %v2930, %v2932
        %v2935 = vmul.f32 %v2929, %v2933
        %2936 = vrot.lane.b32.xlu0 %v2912, 15
        %v2937 = vpop.permute.xlu0 %2936
        %2938 = vrot.lane.b32.xlu0 %v2913, 15
        %v2939 = vpop.permute.xlu0 %2938
        %v2940 = vsel %vm711, %v2937, %v2939
        %v2941 = vsel %vm711, %v2939, %v2937
        %s2942 = scalar_lea.vmem [#allocation14], 176
        %v2943 = vld [vmem:[%s2942] sm:$0xff]
        %v2944 = vld [vmem:[%s2942 + $0x8] sm:$0xff]
        %v2945 = vmul.f32 %v2941, %v2943
        %v2946 = vmul.f32 %v2940, %v2944
        %2947 = vrot.lane.b32.xlu0 %v2912, 1
        %v2948 = vpop.permute.xlu0 %2947
        %2949 = vrot.lane.b32.xlu0 %v2913, 1
        %v2950 = vpop.permute.xlu0 %2949
        %v2951 = vsel %vm723, %v2948, %v2950
        %v2952 = vsel %vm723, %v2950, %v2948
        %s2953 = scalar_lea.vmem [#allocation14], 192
        %v2954 = vld [vmem:[%s2953] sm:$0xff]
        %v2955 = vld [vmem:[%s2953 + $0x8] sm:$0xff]
        %v2956 = vmul.f32 %v2952, %v2954
        %v2957 = vmul.f32 %v2951, %v2955
        %s2958 = scalar_lea.vmem [#allocation14], 208
        %v2959 = vld [vmem:[%s2958] sm:$0xff]
        %v2960 = vld [vmem:[%s2958 + $0x8] sm:$0xff]
        %v2961 = vmul.f32 %v2912, %v2959
        %v2962 = vmul.f32 %v2913, %v2960
        %2963 = vrot.lane.b32.xlu0 %v2912, 127
        %v2964 = vpop.permute.xlu0 %2963
        %2965 = vrot.lane.b32.xlu0 %v2913, 127
        %v2966 = vpop.permute.xlu0 %2965
        %v2967 = vsel %vm740, %v2964, %v2966
        %v2968 = vsel %vm740, %v2966, %v2964
        %s2969 = scalar_lea.vmem [#allocation14], 224
        %v2970 = vld [vmem:[%s2969] sm:$0xff]
        %v2971 = vld [vmem:[%s2969 + $0x8] sm:$0xff]
        %v2972 = vmul.f32 %v2967, %v2970
        %v2973 = vmul.f32 %v2968, %v2971
        %2974 = vrot.lane.b32.xlu0 %v2912, 113
        %v2975 = vpop.permute.xlu0 %2974
        %2976 = vrot.lane.b32.xlu0 %v2913, 113
        %v2977 = vpop.permute.xlu0 %2976
        %v2978 = vsel %vm752, %v2975, %v2977
        %v2979 = vsel %vm752, %v2977, %v2975
        %s2980 = scalar_lea.vmem [#allocation14], 240
        %v2981 = vld [vmem:[%s2980] sm:$0xff]
        %v2982 = vld [vmem:[%s2980 + $0x8] sm:$0xff]
        %v2983 = vmul.f32 %v2978, %v2981
        %v2984 = vmul.f32 %v2979, %v2982
        %2985 = vrot.lane.b32.xlu0 %v2912, 112
        %v2986 = vpop.permute.xlu0 %2985
        %2987 = vrot.lane.b32.xlu0 %v2913, 112
        %v2988 = vpop.permute.xlu0 %2987
        %v2989 = vsel %vm764, %v2986, %v2988
        %v2990 = vsel %vm764, %v2988, %v2986
        %s2991 = scalar_lea.vmem [#allocation14], 256
        %v2992 = vld [vmem:[%s2991] sm:$0xff]
        %v2993 = vld [vmem:[%s2991 + $0x8] sm:$0xff]
        %v2994 = vmul.f32 %v2989, %v2992
        %v2995 = vmul.f32 %v2990, %v2993
        %2996 = vrot.lane.b32.xlu0 %v2912, 111
        %v2997 = vpop.permute.xlu0 %2996
        %2998 = vrot.lane.b32.xlu0 %v2913, 111
        %v2999 = vpop.permute.xlu0 %2998
        %v3000 = vsel %vm776, %v2997, %v2999
        %v3001 = vsel %vm776, %v2999, %v2997
        %s3002 = scalar_lea.vmem [#allocation14], 272
        %v3003 = vld [vmem:[%s3002] sm:$0xff]
        %v3004 = vld [vmem:[%s3002 + $0x8] sm:$0xff]
        %v3005 = vmul.f32 %v3000, %v3003
        %v3006 = vmul.f32 %v3001, %v3004
        %v3007 = vadd.f32 %v2923, %v2934
        %v3008 = vadd.f32 %v2924, %v2935
        %v3009 = vadd.f32 %v2945, %v2956
        %v3010 = vadd.f32 %v2946, %v2957
        %v3011 = vadd.f32 %v2961, %v2972
        %v3012 = vadd.f32 %v2962, %v2973
        %v3013 = vadd.f32 %v2983, %v2994
        %v3014 = vadd.f32 %v2984, %v2995
        %v3015 = vadd.f32 %v3007, %v3009
        %v3016 = vadd.f32 %v3008, %v3010
        %v3017 = vadd.f32 %v3011, %v3013
        %v3018 = vadd.f32 %v3012, %v3014
        %v3019 = vadd.f32 %v3015, %v3017
        %v3020 = vadd.f32 %v3016, %v3018
        %v3021 = vadd.f32 %v3019, %v3005
        %v3022 = vadd.f32 %v3020, %v3006
        %3023 = vst [vmem:[#allocation2 + $0x10] sm:$0xff] %v3021
        %3024 = vst [vmem:[#allocation2 + $0x18] sm:$0xff] %v3022
        %v3025 = vadd.f32 %v3021, %v2798
        %v3026 = vadd.f32 %v3022, %v2799
        %3027 = vrot.lane.b32.xlu0 %v3025, 17
        %v3028 = vpop.permute.xlu0 %3027
        %3029 = vrot.lane.b32.xlu0 %v3026, 17
        %v3030 = vpop.permute.xlu0 %3029
        %v3031 = vsel %vm688, %v3028, %v3030
        %v3032 = vsel %vm688, %v3030, %v3028
        %s3033 = scalar_lea.vmem [#allocation14], 288
        %v3034 = vld [vmem:[%s3033] sm:$0xff]
        %v3035 = vld [vmem:[%s3033 + $0x8] sm:$0xff]
        %v3036 = vmul.f32 %v3032, %v3034
        %v3037 = vmul.f32 %v3031, %v3035
        %3038 = vrot.lane.b32.xlu0 %v3025, 16
        %v3039 = vpop.permute.xlu0 %3038
        %3040 = vrot.lane.b32.xlu0 %v3026, 16
        %v3041 = vpop.permute.xlu0 %3040
        %v3042 = vsel %vm699, %v3039, %v3041
        %v3043 = vsel %vm699, %v3041, %v3039
        %s3044 = scalar_lea.vmem [#allocation14], 304
        %v3045 = vld [vmem:[%s3044] sm:$0xff]
        %v3046 = vld [vmem:[%s3044 + $0x8] sm:$0xff]
        %v3047 = vmul.f32 %v3043, %v3045
        %v3048 = vmul.f32 %v3042, %v3046
        %3049 = vrot.lane.b32.xlu0 %v3025, 15
        %v3050 = vpop.permute.xlu0 %3049
        %3051 = vrot.lane.b32.xlu0 %v3026, 15
        %v3052 = vpop.permute.xlu0 %3051
        %v3053 = vsel %vm711, %v3050, %v3052
        %v3054 = vsel %vm711, %v3052, %v3050
        %s3055 = scalar_lea.vmem [#allocation14], 320
        %v3056 = vld [vmem:[%s3055] sm:$0xff]
        %v3057 = vld [vmem:[%s3055 + $0x8] sm:$0xff]
        %v3058 = vmul.f32 %v3054, %v3056
        %v3059 = vmul.f32 %v3053, %v3057
        %3060 = vrot.lane.b32.xlu0 %v3025, 1
        %v3061 = vpop.permute.xlu0 %3060
        %3062 = vrot.lane.b32.xlu0 %v3026, 1
        %v3063 = vpop.permute.xlu0 %3062
        %v3064 = vsel %vm723, %v3061, %v3063
        %v3065 = vsel %vm723, %v3063, %v3061
        %s3066 = scalar_lea.vmem [#allocation14], 336
        %v3067 = vld [vmem:[%s3066] sm:$0xff]
        %v3068 = vld [vmem:[%s3066 + $0x8] sm:$0xff]
        %v3069 = vmul.f32 %v3065, %v3067
        %v3070 = vmul.f32 %v3064, %v3068
        %s3071 = scalar_lea.vmem [#allocation14], 352
        %v3072 = vld [vmem:[%s3071] sm:$0xff]
        %v3073 = vld [vmem:[%s3071 + $0x8] sm:$0xff]
        %v3074 = vmul.f32 %v3025, %v3072
        %v3075 = vmul.f32 %v3026, %v3073
        %3076 = vrot.lane.b32.xlu0 %v3025, 127
        %v3077 = vpop.permute.xlu0 %3076
        %3078 = vrot.lane.b32.xlu0 %v3026, 127
        %v3079 = vpop.permute.xlu0 %3078
        %v3080 = vsel %vm740, %v3077, %v3079
        %v3081 = vsel %vm740, %v3079, %v3077
        %s3082 = scalar_lea.vmem [#allocation14], 368
        %v3083 = vld [vmem:[%s3082] sm:$0xff]
        %v3084 = vld [vmem:[%s3082 + $0x8] sm:$0xff]
        %v3085 = vmul.f32 %v3080, %v3083
        %v3086 = vmul.f32 %v3081, %v3084
        %3087 = vrot.lane.b32.xlu0 %v3025, 113
        %v3088 = vpop.permute.xlu0 %3087
        %3089 = vrot.lane.b32.xlu0 %v3026, 113
        %v3090 = vpop.permute.xlu0 %3089
        %v3091 = vsel %vm752, %v3088, %v3090
        %v3092 = vsel %vm752, %v3090, %v3088
        %s3093 = scalar_lea.vmem [#allocation14], 384
        %v3094 = vld [vmem:[%s3093] sm:$0xff]
        %v3095 = vld [vmem:[%s3093 + $0x8] sm:$0xff]
        %v3096 = vmul.f32 %v3091, %v3094
        %v3097 = vmul.f32 %v3092, %v3095
        %3098 = vrot.lane.b32.xlu0 %v3025, 112
        %v3099 = vpop.permute.xlu0 %3098
        %3100 = vrot.lane.b32.xlu0 %v3026, 112
        %v3101 = vpop.permute.xlu0 %3100
        %v3102 = vsel %vm764, %v3099, %v3101
        %v3103 = vsel %vm764, %v3101, %v3099
        %s3104 = scalar_lea.vmem [#allocation14], 400
        %v3105 = vld [vmem:[%s3104] sm:$0xff]
        %v3106 = vld [vmem:[%s3104 + $0x8] sm:$0xff]
        %v3107 = vmul.f32 %v3102, %v3105
        %v3108 = vmul.f32 %v3103, %v3106
        %3109 = vrot.lane.b32.xlu0 %v3025, 111
        %v3110 = vpop.permute.xlu0 %3109
        %3111 = vrot.lane.b32.xlu0 %v3026, 111
        %v3112 = vpop.permute.xlu0 %3111
        %v3113 = vsel %vm776, %v3110, %v3112
        %v3114 = vsel %vm776, %v3112, %v3110
        %s3115 = scalar_lea.vmem [#allocation14], 416
        %v3116 = vld [vmem:[%s3115] sm:$0xff]
        %v3117 = vld [vmem:[%s3115 + $0x8] sm:$0xff]
        %v3118 = vmul.f32 %v3113, %v3116
        %v3119 = vmul.f32 %v3114, %v3117
        %v3120 = vadd.f32 %v3036, %v3047
        %v3121 = vadd.f32 %v3037, %v3048
        %v3122 = vadd.f32 %v3058, %v3069
        %v3123 = vadd.f32 %v3059, %v3070
        %v3124 = vadd.f32 %v3074, %v3085
        %v3125 = vadd.f32 %v3075, %v3086
        %v3126 = vadd.f32 %v3096, %v3107
        %v3127 = vadd.f32 %v3097, %v3108
        %v3128 = vadd.f32 %v3120, %v3122
        %v3129 = vadd.f32 %v3121, %v3123
        %v3130 = vadd.f32 %v3124, %v3126
        %v3131 = vadd.f32 %v3125, %v3127
        %v3132 = vadd.f32 %v3128, %v3130
        %v3133 = vadd.f32 %v3129, %v3131
        %v3134 = vadd.f32 %v3132, %v3118
        %v3135 = vadd.f32 %v3133, %v3119
        %3136 = vst [vmem:[#allocation2 + $0x20] sm:$0xff] %v3134
        %3137 = vst [vmem:[#allocation2 + $0x28] sm:$0xff] %v3135
        %v3138 = vadd.f32 %v3134, %v2800
        %v3139 = vadd.f32 %v3135, %v2801
        %3140 = vrot.lane.b32.xlu0 %v3138, 17
        %v3141 = vpop.permute.xlu0 %3140
        %3142 = vrot.lane.b32.xlu0 %v3139, 17
        %v3143 = vpop.permute.xlu0 %3142
        %v3144 = vsel %vm688, %v3141, %v3143
        %v3145 = vsel %vm688, %v3143, %v3141
        %s3146 = scalar_lea.vmem [#allocation14], 432
        %v3147 = vld [vmem:[%s3146] sm:$0xff]
        %v3148 = vld [vmem:[%s3146 + $0x8] sm:$0xff]
        %v3149 = vmul.f32 %v3145, %v3147
        %v3150 = vmul.f32 %v3144, %v3148
        %3151 = vrot.lane.b32.xlu0 %v3138, 16
        %v3152 = vpop.permute.xlu0 %3151
        %3153 = vrot.lane.b32.xlu0 %v3139, 16
        %v3154 = vpop.permute.xlu0 %3153
        %v3155 = vsel %vm699, %v3152, %v3154
        %v3156 = vsel %vm699, %v3154, %v3152
        %s3157 = scalar_lea.vmem [#allocation14], 448
        %v3158 = vld [vmem:[%s3157] sm:$0xff]
        %v3159 = vld [vmem:[%s3157 + $0x8] sm:$0xff]
        %v3160 = vmul.f32 %v3156, %v3158
        %v3161 = vmul.f32 %v3155, %v3159
        %3162 = vrot.lane.b32.xlu0 %v3138, 15
        %v3163 = vpop.permute.xlu0 %3162
        %3164 = vrot.lane.b32.xlu0 %v3139, 15
        %v3165 = vpop.permute.xlu0 %3164
        %v3166 = vsel %vm711, %v3163, %v3165
        %v3167 = vsel %vm711, %v3165, %v3163
        %s3168 = scalar_lea.vmem [#allocation14], 464
        %v3169 = vld [vmem:[%s3168] sm:$0xff]
        %v3170 = vld [vmem:[%s3168 + $0x8] sm:$0xff]
        %v3171 = vmul.f32 %v3167, %v3169
        %v3172 = vmul.f32 %v3166, %v3170
        %3173 = vrot.lane.b32.xlu0 %v3138, 1
        %v3174 = vpop.permute.xlu0 %3173
        %3175 = vrot.lane.b32.xlu0 %v3139, 1
        %v3176 = vpop.permute.xlu0 %3175
        %v3177 = vsel %vm723, %v3174, %v3176
        %v3178 = vsel %vm723, %v3176, %v3174
        %s3179 = scalar_lea.vmem [#allocation14], 480
        %v3180 = vld [vmem:[%s3179] sm:$0xff]
        %v3181 = vld [vmem:[%s3179 + $0x8] sm:$0xff]
        %v3182 = vmul.f32 %v3178, %v3180
        %v3183 = vmul.f32 %v3177, %v3181
        %s3184 = scalar_lea.vmem [#allocation14], 496
        %v3185 = vld [vmem:[%s3184] sm:$0xff]
        %v3186 = vld [vmem:[%s3184 + $0x8] sm:$0xff]
        %v3187 = vmul.f32 %v3138, %v3185
        %v3188 = vmul.f32 %v3139, %v3186
        %3189 = vrot.lane.b32.xlu0 %v3138, 127
        %v3190 = vpop.permute.xlu0 %3189
        %3191 = vrot.lane.b32.xlu0 %v3139, 127
        %v3192 = vpop.permute.xlu0 %3191
        %v3193 = vsel %vm740, %v3190, %v3192
        %v3194 = vsel %vm740, %v3192, %v3190
        %s3195 = scalar_lea.vmem [#allocation14], 512
        %v3196 = vld [vmem:[%s3195] sm:$0xff]
        %v3197 = vld [vmem:[%s3195 + $0x8] sm:$0xff]
        %v3198 = vmul.f32 %v3193, %v3196
        %v3199 = vmul.f32 %v3194, %v3197
        %3200 = vrot.lane.b32.xlu0 %v3138, 113
        %v3201 = vpop.permute.xlu0 %3200
        %3202 = vrot.lane.b32.xlu0 %v3139, 113
        %v3203 = vpop.permute.xlu0 %3202
        %v3204 = vsel %vm752, %v3201, %v3203
        %v3205 = vsel %vm752, %v3203, %v3201
        %s3206 = scalar_lea.vmem [#allocation14], 528
        %v3207 = vld [vmem:[%s3206] sm:$0xff]
        %v3208 = vld [vmem:[%s3206 + $0x8] sm:$0xff]
        %v3209 = vmul.f32 %v3204, %v3207
        %v3210 = vmul.f32 %v3205, %v3208
        %3211 = vrot.lane.b32.xlu0 %v3138, 112
        %v3212 = vpop.permute.xlu0 %3211
        %3213 = vrot.lane.b32.xlu0 %v3139, 112
        %v3214 = vpop.permute.xlu0 %3213
        %v3215 = vsel %vm764, %v3212, %v3214
        %v3216 = vsel %vm764, %v3214, %v3212
        %s3217 = scalar_lea.vmem [#allocation14], 544
        %v3218 = vld [vmem:[%s3217] sm:$0xff]
        %v3219 = vld [vmem:[%s3217 + $0x8] sm:$0xff]
        %v3220 = vmul.f32 %v3215, %v3218
        %v3221 = vmul.f32 %v3216, %v3219
        %3222 = vrot.lane.b32.xlu0 %v3138, 111
        %v3223 = vpop.permute.xlu0 %3222
        %3224 = vrot.lane.b32.xlu0 %v3139, 111
        %v3225 = vpop.permute.xlu0 %3224
        %v3226 = vsel %vm776, %v3223, %v3225
        %v3227 = vsel %vm776, %v3225, %v3223
        %s3228 = scalar_lea.vmem [#allocation14], 560
        %v3229 = vld [vmem:[%s3228] sm:$0xff]
        %v3230 = vld [vmem:[%s3228 + $0x8] sm:$0xff]
        %v3231 = vmul.f32 %v3226, %v3229
        %v3232 = vmul.f32 %v3227, %v3230
        %v3233 = vadd.f32 %v3149, %v3160
        %v3234 = vadd.f32 %v3150, %v3161
        %v3235 = vadd.f32 %v3171, %v3182
        %v3236 = vadd.f32 %v3172, %v3183
        %v3237 = vadd.f32 %v3187, %v3198
        %v3238 = vadd.f32 %v3188, %v3199
        %v3239 = vadd.f32 %v3209, %v3220
        %v3240 = vadd.f32 %v3210, %v3221
        %v3241 = vadd.f32 %v3233, %v3235
        %v3242 = vadd.f32 %v3234, %v3236
        %v3243 = vadd.f32 %v3237, %v3239
        %v3244 = vadd.f32 %v3238, %v3240
        %v3245 = vadd.f32 %v3241, %v3243
        %v3246 = vadd.f32 %v3242, %v3244
        %v3247 = vadd.f32 %v3245, %v3231
        %v3248 = vadd.f32 %v3246, %v3232
        %3249 = vst [vmem:[#allocation2 + $0x30] sm:$0xff] %v3247
        %3250 = vst [vmem:[#allocation2 + $0x38] sm:$0xff] %v3248
        %v3251 = vld [vmem:[#allocation15] sm:$0xff]
        %v3252 = vld [vmem:[#allocation15 + $0x8] sm:$0xff]
        %v3253 = vld [vmem:[#allocation15 + $0x10] sm:$0xff]
        %v3254 = vld [vmem:[#allocation2] sm:$0xff]
        %v3255 = vld [vmem:[#allocation2 + $0x8] sm:$0xff]
        %v3256 = vld [vmem:[#allocation2 + $0x10] sm:$0xff]
        %v3257 = vld [vmem:[#allocation2 + $0x18] sm:$0xff]
        %v3258 = vld [vmem:[#allocation2 + $0x20] sm:$0xff]
        %v3259 = vld [vmem:[#allocation2 + $0x28] sm:$0xff]
        %v3260 = vld [vmem:[#allocation2 + $0x30] sm:$0xff]
        %v3261 = vld [vmem:[#allocation2 + $0x38] sm:$0xff]
        %v3263 = vsel %vm1897, %v3251, 0
        %v3266 = vsel %vm1897, %v3252, 0
        %v3269 = vsel %vm1897, %v3253, 0
        %3271 = vmatpush.msra.mxu0 0.0
        %3272 = vmatpush.msra.mxu0 0.0
        %3273 = vmatpush.msra.mxu0 0.0
        %3274 = vmatpush.msra.mxu0 0.0
        %3275 = vmatpush.msra.mxu0 0.0
        %3276 = vmatpush.msra.mxu0 0.0
        %3277 = vmatpush.msra.mxu0 0.0
        %3278 = vmatpush.msra.mxu0 0.0
        %3279 = vmatpush.msra.mxu0 0.0
        %3280 = vmatpush.msra.mxu0 0.0
        %3281 = vmatpush.msra.mxu0 0.0
        %3282 = vmatpush.msra.mxu0 0.0
        %3283 = vmatpush.msra.mxu0 %v3260
        %3284 = vmatpush.msra.mxu0 %v3258
        %3285 = vmatpush.msra.mxu0 %v3256
        %3286 = vmatpush.msra.mxu0 %v3254
        %3287 = vmatmul.f32.gmra.mxu0 %v3263
        %v3288 = vpop.f32.mrf.mxu0
        %v3289 = vadd.f32 0.0, %v3288
        %3290 = vmatmul.f32.gmra.mxu0 %v3266
        %v3291 = vpop.f32.mrf.mxu0
        %v3292 = vadd.f32 0.0, %v3291
        %3293 = vmatmul.f32.gmra.mxu0 %v3269
        %v3294 = vpop.f32.mrf.mxu0
        %v3295 = vadd.f32 0.0, %v3294
        %3296 = vdwg.mxu0
        %3297 = vmatpush.msra.mxu0 0.0
        %3298 = vmatpush.msra.mxu0 0.0
        %3299 = vmatpush.msra.mxu0 0.0
        %3300 = vmatpush.msra.mxu0 0.0
        %3301 = vmatpush.msra.mxu0 0.0
        %3302 = vmatpush.msra.mxu0 0.0
        %3303 = vmatpush.msra.mxu0 0.0
        %3304 = vmatpush.msra.mxu0 0.0
        %3305 = vmatpush.msra.mxu0 0.0
        %3306 = vmatpush.msra.mxu0 0.0
        %3307 = vmatpush.msra.mxu0 0.0
        %3308 = vmatpush.msra.mxu0 0.0
        %3309 = vmatpush.msra.mxu0 %v3261
        %3310 = vmatpush.msra.mxu0 %v3259
        %3311 = vmatpush.msra.mxu0 %v3257
        %3312 = vmatpush.msra.mxu0 %v3255
        %3313 = vmatmul.f32.gmra.mxu0 %v3263
        %v3314 = vpop.f32.mrf.mxu0
        %v3315 = vadd.f32 0.0, %v3314
        %3316 = vmatmul.f32.gmra.mxu0 %v3266
        %v3317 = vpop.f32.mrf.mxu0
        %v3318 = vadd.f32 0.0, %v3317
        %3319 = vmatmul.f32.gmra.mxu0 %v3269
        %v3320 = vpop.f32.mrf.mxu0
        %v3321 = vadd.f32 0.0, %v3320
        %3322 = vdwg.mxu0
        %v3323 = vmax.f32 %v3289, 0.0
        %v3324 = vmax.f32 %v3315, 0.0
        %v3325 = vmax.f32 %v3292, 0.0
        %v3326 = vmax.f32 %v3318, 0.0
        %v3327 = vmax.f32 %v3295, 0.0
        %v3328 = vmax.f32 %v3321, 0.0
        %3329 = vst [vmem:[%s574] sm:$0xff] %v3323
        %3330 = vst [vmem:[%s574 + $0x8] sm:$0xff] %v3324
        %3331 = vst [vmem:[%s574 + $0x10] sm:$0xff] %v3325
        %3332 = vst [vmem:[%s574 + $0x18] sm:$0xff] %v3326
        %3333 = vst [vmem:[%s574 + $0x20] sm:$0xff] %v3327
        %3334 = vst [vmem:[%s574 + $0x28] sm:$0xff] %v3328
        %s3335 = sand.u32 %s320, 1
        %s3336 = scalar_lea.sflag [#allocation5], %s3335
        %s3337 = sand.u32 %s320, 1
        %s3338 = smul.addr %s3337, 48
        %s3339 = scalar_lea.vmem [#allocation17], %s3338
        // Predicated region
        $region105: #{tpu_custom_call.1} parent=71 // pred_check
          %p3340 = pneg %p330
        $region106: #{tpu_custom_call.1} parent=71 // pred_check_branch
          %3342 = sbr.rel (%p3340) target = $region108
        $region107: #{tpu_custom_call.1} parent=71 // pred_region
          %s3343 = smul.u32 2, %s34
          %3345 = vsyncadd %s3336, 0
          %s3346 = smul.addr %s3343, 8
          %s3347 = scalar_lea.hbm %s13, %s3346
          %s3348 = sshll.u32 %s3339, 4
          %s3349 = int_to_ptr.vmem [resolvable:$true] %s3348
          %s3350 = sshll.u32 %s3347, 4
          %s3351 = int_to_ptr.hbm [resolvable:$true] %s3350
          %3356 = dma.vmem_to_hbm [thread:$0]  %s3349, 768, %s3351, %s3336, 256, 512, 16
        $region108: #{tpu_custom_call.1} parent=71 // pred_fallthru
          _
      $region72: #{tpu_custom_call.1} parent=5 // pred_fallthru
        _
      %p3357 = scmp.le.s32.totalorder 2, %s29
      // Predicated region
      $region109: #{tpu_custom_call.1} parent=5 // pred_check
        %p3358 = pneg %p3357
      $region110: #{tpu_custom_call.1} parent=5 // pred_check_branch
        %3360 = sbr.rel (%p3358) target = $region112
      $region111: #{tpu_custom_call.1} parent=5 // pred_region
        %s3361 = ssub.s32 %s29, 2
        // Predicated region
        $region113: #{tpu_custom_call.1} parent=111 // pred_check
          %p3362 = pneg %p336
        $region114: #{tpu_custom_call.1} parent=111 // pred_check_branch
          %3364 = sbr.rel (%p3362) target = $region116
        $region115: #{tpu_custom_call.1} parent=111 // pred_region
          %s3365 = sand.u32 %s321, 1
          %s3366 = scalar_lea.sflag [#allocation5], %s3365
          %s3367 = sand.u32 %s321, 1
          %s3368 = smul.addr %s3367, 48
          %s3369 = scalar_lea.vmem [#allocation17], %s3368
          %3371 = dma.done %s3366, 768
        $region116: #{tpu_custom_call.1} parent=111 // pred_fallthru
          _
      $region112: #{tpu_custom_call.1} parent=5 // pred_fallthru
        _
    $region6: #{tpu_custom_call.1} parent=1 // loop_footer
      %s33 = sadd.s32 1, %s29
    $region7: #{tpu_custom_call.1} parent=1 // loop_footer_branch
      %28 = sbr.rel target = $region3
    $region8: #{tpu_custom_call.1} parent=1 // loop_exit
      _
    %3372 = vsyncpa [#allocation4], 1
    %s3373 = scalar_lea.sflag [#allocation4], 1
    %3374 = vsyncpa %s3373, 1
    %3375 = vsyncpa [#allocation7], 1
    %3376 = vsyncpa [#allocation10], 1
    %3377 = vsyncpa [#allocation13], 1
    %3378 = vsyncpa [#allocation16], 1
    %3379 = vsyncpa [#allocation5], 1
    %s3380 = scalar_lea.sflag [#allocation5], 1
    %3381 = vsyncpa %s3380, 1

</llo_original>
